<compile_context>
chip_gen: v7x
topology: tpu7x:2x2x1
jax: 0.10.0
libtpu: 0.0.40
codegen_flags: <defaults>
</compile_context>

<pallas_src>
import functools

import jax
import jax.numpy as jnp
from jax import lax
from jax import image as jax_image
from jax.experimental import pallas as pl
from jax.experimental.pallas import tpu as pltpu


# ---------------------------------------------------------------------------
# Generation-aware budgets
# ---------------------------------------------------------------------------

def _vmem_capacity_bytes():
    try:
        return int(pltpu.get_tpu_info().vmem_capacity_bytes)
    except Exception:
        return 64 * 1024 * 1024            # conservative: v7x-sized per-core VMEM


_VMEM_CAP = _vmem_capacity_bytes()
# leave headroom: ~3/4 of physical, capped at 96 MiB (v5e/v6e) / 48 MiB (v7x)
_VMEM_LIMIT = min((_VMEM_CAP * 3) // 4, 96 * 1024 * 1024)
_TM_TARGET = 512 if _VMEM_CAP >= 100 * 1024 * 1024 else 256


def _row_tile(m, target=_TM_TARGET):
    """Largest divisor of m that is a multiple of 8 and <= min(target, m//2),
    giving >= 2 grid steps (both v7x TCs busy) with NO jnp.pad copy.  Falls
    back to a single full-extent block when no such divisor exists."""
    best = None
    for t in range(8, min(target, m // 2) + 1, 8):
        if m % t == 0:
            best = t
    return best if best is not None else m


# ---------------------------------------------------------------------------
# Capability probes (run eagerly, once, outside the jit trace)
# ---------------------------------------------------------------------------

_ERF_OK = None


def _gelu_probe_kernel(x_ref, o_ref):
    o_ref[...] = jax.nn.gelu(x_ref[...], approximate=False)


def _erf_in_kernel_supported():
    """Does exact (erf) GELU lower in this Mosaic build?"""
    global _ERF_OK
    if _ERF_OK is None:
        try:
            y = pl.pallas_call(
                _gelu_probe_kernel,
                out_shape=jax.ShapeDtypeStruct((8, 128), jnp.float32),
            )(jnp.ones((8, 128), jnp.float32))
            jax.block_until_ready(y)
            _ERF_OK = True
        except Exception:
            _ERF_OK = False
    return _ERF_OK


_BUF1_OK = None


def _buf1_probe_kernel(x_ref, o_ref):
    o_ref[...] = x_ref[...] * 2.0


def _single_buffer_supported():
    """Does this runtime accept pipeline_mode=pl.Buffered(1) on a
    constant-index input BlockSpec (single-buffered resident weight)?"""
    global _BUF1_OK
    if _BUF1_OK is None:
        try:
            y = pl.pallas_call(
                _buf1_probe_kernel,
                out_shape=jax.ShapeDtypeStruct((8, 128), jnp.float32),
                grid=(2,),
                in_specs=[pl.BlockSpec((8, 128), lambda i: (0, 0),
                                       pipeline_mode=pl.Buffered(1))],
                out_specs=pl.BlockSpec((8, 128), lambda i: (0, 0)),
            )(jnp.ones((8, 128), jnp.float32))
            jax.block_until_ready(y)
            _BUF1_OK = True
        except Exception:
            _BUF1_OK = False
    return _BUF1_OK


def _const_spec(shape):
    """BlockSpec for a grid-invariant (weight / bias / LN affine) block:
    single-buffered when supported so the resident weight isn't duplicated."""
    index_map = lambda i: (0,) * len(shape)
    if _single_buffer_supported():
        return pl.BlockSpec(shape, index_map, pipeline_mode=pl.Buffered(1))
    return pl.BlockSpec(shape, index_map)


# ---------------------------------------------------------------------------
# Fused (LayerNorm ->) matmul + bias (+ GELU) (+ residual) kernel
# ---------------------------------------------------------------------------

def _mm_kernel(a_ref, w_ref, b_ref, *rest, act, ln_eps, has_res):
    o_ref = rest[-1]
    k = 0
    if ln_eps is not None:
        g_ref, beta_ref = rest[0], rest[1]
        k = 2
    a = a_ref[...]
    if ln_eps is not None:                       # fused LayerNorm prologue (fp32)
        a = a.astype(jnp.float32)
        mu = jnp.mean(a, axis=-1, keepdims=True)
        var = jnp.mean((a - mu) ** 2, axis=-1, keepdims=True)
        a = (a - mu) * lax.rsqrt(var + ln_eps) * g_ref[...] + beta_ref[...]
    acc = jnp.dot(a.astype(jnp.bfloat16), w_ref[...].astype(jnp.bfloat16),
                  preferred_element_type=jnp.float32)
    acc = acc + b_ref[...]
    if act == "gelu_erf":
        acc = jax.nn.gelu(acc, approximate=False)    # exact (erf) GELU, fp32
    elif act == "gelu_tanh":
        # TODO(synk): tanh GELU fallback (erf not lowerable in this Mosaic
        # build) deviates slightly from the exact-erf GELU of the reference.
        acc = jax.nn.gelu(acc, approximate=True)
    if has_res:
        acc = acc + rest[k][...].astype(jnp.float32)
    o_ref[...] = acc.astype(o_ref.dtype)


def matmul_fused(a, w, bias=None, *, act=None, residual=None, ln=None,
                 ln_eps=1e-6, out_dtype=jnp.float32):
    """[LayerNorm(a)] @ w + bias [-> GELU] [+ residual] on the MXU.

    Weights are expected pre-cast to bf16 (cast happens in-kernel otherwise);
    the full (K, N) weight block stays resident in VMEM across the M sweep.
    The row tile divides M exactly (no host-side padding copies)."""
    M, K = a.shape
    K2, N = w.shape
    assert K == K2
    if bias is None:
        bias = jnp.zeros((1, N), jnp.float32)
    elif bias.ndim == 1:
        bias = bias.reshape(1, N)
    bias = bias.astype(jnp.float32)

    TM = _row_tile(M)
    in_specs = [pl.BlockSpec((TM, K), lambda i: (i, 0)),
                _const_spec((K, N)),
                _const_spec((1, N))]
    args = [a, w, bias]
    if ln is not None:
        g, b = ln
        in_specs += [_const_spec((1, K)), _const_spec((1, K))]
        args += [g.reshape(1, K).astype(jnp.float32),
                 b.reshape(1, K).astype(jnp.float32)]
    if residual is not None:
        in_specs.append(pl.BlockSpec((TM, N), lambda i: (i, 0)))
        args.append(residual)

    if act == "gelu":
        act = "gelu_erf" if _erf_in_kernel_supported() else "gelu_tanh"

    kernel = functools.partial(
        _mm_kernel, act=act,
        ln_eps=(ln_eps if ln is not None else None),
        has_res=residual is not None)

    return pl.pallas_call(
        kernel,
        out_shape=jax.ShapeDtypeStruct((M, N), out_dtype),
        grid=(M // TM,),
        in_specs=in_specs,
        out_specs=pl.BlockSpec((TM, N), lambda i: (i, 0)),
        compiler_params=pltpu.CompilerParams(
            dimension_semantics=("parallel",),
            vmem_limit_bytes=_VMEM_LIMIT),
    )(*args)


# ---------------------------------------------------------------------------
# Standalone LayerNorm (only the encoder's final norm uses it)
# ---------------------------------------------------------------------------

def _ln_kernel(x_ref, g_ref, b_ref, o_ref, *, eps):
    x = x_ref[...].astype(jnp.float32)
    mu = jnp.mean(x, axis=-1, keepdims=True)
    var = jnp.mean((x - mu) ** 2, axis=-1, keepdims=True)
    o_ref[...] = ((x - mu) * lax.rsqrt(var + eps) * g_ref[...]
                  + b_ref[...]).astype(o_ref.dtype)


def layernorm(x, gamma, beta, eps=1e-6, out_dtype=jnp.float32):
    shape = x.shape
    D = shape[-1]
    x2 = x.reshape(-1, D)
    M = x2.shape[0]
    TM = _row_tile(M)
    out = pl.pallas_call(
        functools.partial(_ln_kernel, eps=eps),
        out_shape=jax.ShapeDtypeStruct((M, D), out_dtype),
        grid=(M // TM,),
        in_specs=[pl.BlockSpec((TM, D), lambda i: (i, 0)),
                  _const_spec((1, D)), _const_spec((1, D))],
        out_specs=pl.BlockSpec((TM, D), lambda i: (i, 0)),
        compiler_params=pltpu.CompilerParams(
            dimension_semantics=("parallel",),
            vmem_limit_bytes=_VMEM_LIMIT),
    )(x2, gamma.reshape(1, D).astype(jnp.float32),
      beta.reshape(1, D).astype(jnp.float32))
    return out.reshape(shape)


# ---------------------------------------------------------------------------
# Multi-head attention straight off the qkv matmul output
# ---------------------------------------------------------------------------

def _attn_kernel(qkv_ref, o_ref, *, num_heads, head_dim, scale):
    qkv = qkv_ref[...][0]                          # (S, 3E) bf16, timm layout
    E = num_heads * head_dim
    outs = []
    for h in range(num_heads):                     # all heads batched per step
        q = qkv[:, h * head_dim:(h + 1) * head_dim]
        k = qkv[:, E + h * head_dim:E + (h + 1) * head_dim]
        v = qkv[:, 2 * E + h * head_dim:2 * E + (h + 1) * head_dim]
        s = jnp.einsum('qd,kd->qk', q, k,
                       preferred_element_type=jnp.float32) * scale
        m = jnp.max(s, axis=-1, keepdims=True)
        e = jnp.exp(s - m)                         # fp32 softmax statistics
        p = e / jnp.sum(e, axis=-1, keepdims=True)
        outs.append(jnp.dot(p.astype(jnp.bfloat16), v,
                            preferred_element_type=jnp.float32))
    # single head-merged (S, E) store; directly feeds the proj matmul
    out = jnp.concatenate(outs, axis=-1).astype(o_ref.dtype)
    o_ref[...] = out[None]


def attention_core(qkv, num_heads):
    """qkv: (B, S, 3E) bf16 (qkv Linear output).  Returns (B, S, E) bf16."""
    B, S, threeE = qkv.shape
    E = threeE // 3
    Dh = E // num_heads
    return pl.pallas_call(
        functools.partial(_attn_kernel, num_heads=num_heads, head_dim=Dh,
                          scale=Dh ** -0.5),
        out_shape=jax.ShapeDtypeStruct((B, S, E), jnp.bfloat16),
        grid=(B,),
        in_specs=[pl.BlockSpec((1, S, threeE), lambda b: (b, 0, 0))],
        out_specs=pl.BlockSpec((1, S, E), lambda b: (b, 0, 0)),
        compiler_params=pltpu.CompilerParams(
            dimension_semantics=("parallel",),
            vmem_limit_bytes=_VMEM_LIMIT),
    )(qkv)


# ---------------------------------------------------------------------------
# timm-style ViT Block (as used by MaskedAutoencoderViT)
# ---------------------------------------------------------------------------

def vit_block(x, p, num_heads):
    B, N, E = x.shape
    x2d = x.reshape(B * N, E)                                   # fp32 residual stream
    # attention branch: LN1 fused into the qkv matmul prologue
    qkv = matmul_fused(x2d, p["qkv_w"], p["qkv_b"],
                       ln=(p["ln1_g"], p["ln1_b"]), out_dtype=jnp.bfloat16)
    attn = attention_core(qkv.reshape(B, N, 3 * E), num_heads)  # (B, N, E) bf16
    x2d = matmul_fused(attn.reshape(B * N, E), p["proj_w"], p["proj_b"],
                       residual=x2d, out_dtype=jnp.float32)     # x + attn(ln1(x))
    # MLP branch: LN2 + GELU fused
    h = matmul_fused(x2d, p["fc1_w"], p["fc1_b"], act="gelu",
                     ln=(p["ln2_g"], p["ln2_b"]), out_dtype=jnp.bfloat16)
    x2d = matmul_fused(h, p["fc2_w"], p["fc2_b"],
                       residual=x2d, out_dtype=jnp.float32)     # x + mlp(ln2(x))
    return x2d.reshape(B, N, E)


# ---------------------------------------------------------------------------
# ChannelGroupingLayer / SemanticMaskingLayer
# ---------------------------------------------------------------------------

def channel_grouping(feat, p, n_groups, denom=512.0):
    # feat: (B, Cin, W, H) NCHW
    B, Cin, W, H = feat.shape
    Cout = p["conv_w"].shape[1]
    x2 = feat.transpose(0, 2, 3, 1).reshape(B * W * H, Cin)      # rows (b, w, h)
    conv = matmul_fused(x2, p["conv_w"], p["conv_b"],
                        out_dtype=jnp.float32)                   # 1x1 conv == matmul
    # TODO(synk): BatchNorm2d batch statistics (training mode) + ReLU stay in
    # XLA; the mean/var reduce over every row, which doesn't fit the row-tiled
    # kernel and is tiny at these shapes.
    mean = jnp.mean(conv, axis=0, keepdims=True)
    var = jnp.mean((conv - mean) ** 2, axis=0, keepdims=True)
    bn = (conv - mean) * lax.rsqrt(var + 1e-5) * p["bn_g"] + p["bn_b"]
    act = jnp.maximum(bn, 0.0)                                   # ReLU
    matrix_act = act.reshape(B, W, H, Cout).transpose(0, 3, 1, 2)  # (B, Cout, W, H)

    tmp = (matrix_act + 0.001).reshape(B * Cout, W * H)
    nrm = jnp.sqrt(jnp.sum(tmp * tmp, axis=1, keepdims=True))
    tmp = tmp / jnp.maximum(nrm, 1e-12)                          # F.normalize(p=2)
    tmp = tmp.reshape(B, Cout, W * H).transpose(1, 0, 2).reshape(Cout, B * W * H)
    co = matmul_fused(tmp, tmp.T)                                # (Cout, Cout) Gram on MXU
    co = co.reshape(1, Cout * Cout) / B
    r = Cout // n_groups
    # gt = pixel_shuffle(repeated eye) == block-diagonal of r x r ones blocks
    gt = jnp.kron(jnp.eye(n_groups, dtype=jnp.float32),
                  jnp.ones((r, r), jnp.float32)).reshape(1, Cout * Cout)
    loss_single = jnp.sum((co - gt) * (co - gt) * 0.001, axis=1)
    loss = jnp.tile(loss_single, B)                              # same scalar per sample
    loss = loss / ((Cout / denom) * (Cout / denom))
    return matrix_act, loss


def semantic_masking(x, feat, params, cfg, key):
    matrix_act, g_loss = channel_grouping(feat, params["cg"], cfg["n_groups"])
    B, C, W, H = matrix_act.shape
    r = C // cfg["n_groups"]
    bias = jnp.arange(r, dtype=jnp.int32).reshape(-1, 1)
    # torch.randint(0, n_groups, (b,)) -> deterministic jax.random equivalent
    ind = jax.random.randint(key, (B,), 0, cfg["n_groups"], dtype=jnp.int32)
    ind = ind.reshape(1, -1) * r
    row_indices = ind + bias                                     # (r, B)
    sel = matrix_act[jnp.arange(B)[:, None], row_indices.T]      # (B, r, W, H)
    m_out = jnp.sum(sel, axis=1, keepdims=True)                  # (B, 1, W, H)

    N, L, D = x.shape
    S = cfg["img_size"]
    ps = cfg["patch_size"]
    # TODO(synk): bilinear resize + argsort/gather masking stay in XLA
    # (data-dependent sort/gather has no clean Pallas tiling at these sizes).
    m_out = jax_image.resize(m_out, (B, 1, S, S), method="bilinear")
    hg = S // ps
    patches_att = m_out.reshape(B, 1, hg, ps, hg, ps).transpose(0, 2, 4, 3, 5, 1)
    patches_att = patches_att.reshape(B, hg * hg, ps * ps)       # '... (s1 s2 c)'

    len_keep = int(L * (1 - cfg["mask_ratio"]))
    noise = jnp.mean(patches_att, axis=-1)
    ids_shuffle = jnp.argsort(-noise, axis=1)                    # descending
    ids_restore = jnp.argsort(ids_shuffle, axis=1)
    ids_keep = ids_shuffle[:, :len_keep]
    x_masked = jnp.take_along_axis(
        x, jnp.broadcast_to(ids_keep[:, :, None], (N, len_keep, D)), axis=1)
    mask = jnp.ones((N, L), jnp.float32).at[:, :len_keep].set(0.0)
    mask = jnp.take_along_axis(mask, ids_restore, axis=1)
    return x_masked, mask, ids_restore, g_loss


# ---------------------------------------------------------------------------
# MAE encoder / decoder / loss (FaceMAE forward)
# ---------------------------------------------------------------------------

def patch_embed(imgs, w, b, ps):
    # Conv2d(kernel=stride=ps) == per-patch linear projection; w is (C*ps*ps, E)
    B, C, Hh, Ww = imgs.shape
    hg, wg = Hh // ps, Ww // ps
    E = w.shape[1]
    patches = imgs.reshape(B, C, hg, ps, wg, ps).transpose(0, 2, 4, 1, 3, 5)
    patches = patches.reshape(B * hg * wg, C * ps * ps)
    out = matmul_fused(patches, w, b, out_dtype=jnp.float32)
    return out.reshape(B, hg * wg, E)


def patchify(imgs, ps):
    # matches MAE.patchify ordering: 'nchpwq -> nhwpqc'
    B, C, Hh, Ww = imgs.shape
    hg = Hh // ps
    x = imgs.reshape(B, C, hg, ps, hg, ps)
    x = x.transpose(0, 2, 4, 3, 5, 1)
    return x.reshape(B, hg * hg, ps * ps * C)


def forward_encoder(params, cfg, imgs, feat, key):
    E = cfg["embed_dim"]
    x = patch_embed(imgs, params["patch_w"], params["patch_b"], cfg["patch_size"])
    x = x + params["pos_embed"][:, 1:, :]
    x, mask, ids_restore, g_loss = semantic_masking(x, feat, params, cfg, key)
    cls_tok = params["cls_token"] + params["pos_embed"][:, :1, :]
    cls_toks = jnp.broadcast_to(cls_tok, (x.shape[0], 1, E))
    x = jnp.concatenate([cls_toks, x], axis=1)
    for blk in params["blocks"]:
        x = vit_block(x, blk, cfg["num_heads"])
    x = layernorm(x, params["norm_g"], params["norm_b"])   # fp32: returned latent
    return x, mask, ids_restore, g_loss


def forward_decoder(params, cfg, x, ids_restore):
    B, n, E = x.shape
    dE = cfg["decoder_embed_dim"]
    L = ids_restore.shape[1]
    x = matmul_fused(x.reshape(B * n, E), params["dec_embed_w"],
                     params["dec_embed_b"], out_dtype=jnp.float32).reshape(B, n, dE)
    n_mask = L + 1 - n
    mask_tokens = jnp.broadcast_to(params["mask_token"], (B, n_mask, dE))
    x_ = jnp.concatenate([x[:, 1:, :], mask_tokens], axis=1)
    x_ = jnp.take_along_axis(
        x_, jnp.broadcast_to(ids_restore[:, :, None], (B, L, dE)), axis=1)
    x = jnp.concatenate([x[:, :1, :], x_], axis=1)
    x = x + params["dec_pos_embed"]
    for blk in params["dec_blocks"]:
        x = vit_block(x, blk, cfg["decoder_num_heads"])
    # decoder final LayerNorm fused into the prediction head's prologue
    pd = matmul_fused(x.reshape(B * (L + 1), dE), params["dec_pred_w"],
                      params["dec_pred_b"],
                      ln=(params["dec_norm_g"], params["dec_norm_b"]),
                      out_dtype=jnp.float32)
    return pd.reshape(B, L + 1, -1)[:, 1:, :]


def forward_loss(cfg, imgs, pred, mask):
    target = patchify(imgs, cfg["patch_size"])
    mean = jnp.mean(target, axis=-1, keepdims=True)
    var = jnp.var(target, axis=-1, keepdims=True, ddof=1)   # torch.var (unbiased)
    target = (target - mean) / (var + 1e-6) ** 0.5          # norm_pix_loss=True
    loss = jnp.mean((pred - target) ** 2, axis=-1)
    return jnp.sum(loss * mask) / jnp.sum(mask)


def facemae_forward(params, cfg, imgs, feat, key):
    latent, mask, ids_restore, g_loss = forward_encoder(params, cfg, imgs, feat, key)
    pred = forward_decoder(params, cfg, latent, ids_restore)
    gen_loss = forward_loss(cfg, imgs, pred, mask)
    return gen_loss, g_loss, pred, mask, latent


# ---------------------------------------------------------------------------
# Deterministic parameter init: linear weights stored pre-transposed (in, out)
# AND pre-cast to bf16; biases / LN affine params stored pre-reshaped (1, N).
# ---------------------------------------------------------------------------

def _dense(key, in_f, out_f):
    w = (jax.random.normal(key, (in_f, out_f), jnp.float32) * 0.02
         ).astype(jnp.bfloat16)
    return w, jnp.zeros((1, out_f), jnp.float32)


def _block_params(key, dim, mlp_ratio):
    ks = jax.random.split(key, 4)
    hidden = dim * mlp_ratio
    qkv_w, qkv_b = _dense(ks[0], dim, 3 * dim)
    proj_w, proj_b = _dense(ks[1], dim, dim)
    fc1_w, fc1_b = _dense(ks[2], dim, hidden)
    fc2_w, fc2_b = _dense(ks[3], hidden, dim)
    ones = jnp.ones((1, dim), jnp.float32)
    zeros = jnp.zeros((1, dim), jnp.float32)
    return dict(ln1_g=ones, ln1_b=zeros, qkv_w=qkv_w, qkv_b=qkv_b,
                proj_w=proj_w, proj_b=proj_b, ln2_g=ones, ln2_b=zeros,
                fc1_w=fc1_w, fc1_b=fc1_b, fc2_w=fc2_w, fc2_b=fc2_b)


def init_params(key, cfg):
    E, dE = cfg["embed_dim"], cfg["decoder_embed_dim"]
    ps = cfg["patch_size"]
    L = (cfg["img_size"] // ps) ** 2
    ks = jax.random.split(key, 9)
    blocks = [_block_params(k, E, cfg["mlp_ratio"])
              for k in jax.random.split(ks[3], cfg["depth"])]
    dec_blocks = [_block_params(k, dE, cfg["mlp_ratio"])
                  for k in jax.random.split(ks[7], cfg["decoder_depth"])]
    dec_embed_w, dec_embed_b = _dense(ks[4], E, dE)
    dec_pred_w, dec_pred_b = _dense(ks[8], dE, ps * ps * 3)
    cg = dict(
        conv_w=jnp.ones((cfg["in_channels"], cfg["out_channels"]), jnp.bfloat16),
        conv_b=jnp.full((1, cfg["out_channels"]), 0.1, jnp.float32),
        bn_g=jnp.ones((1, cfg["out_channels"]), jnp.float32),
        bn_b=jnp.zeros((1, cfg["out_channels"]), jnp.float32),
    )
    patch_w = (jax.random.normal(ks[0], (3 * ps * ps, E), jnp.float32) * 0.02
               ).astype(jnp.bfloat16)
    return dict(
        patch_w=patch_w, patch_b=jnp.zeros((1, E), jnp.float32),
        pos_embed=jax.random.normal(ks[1], (1, L + 1, E), jnp.float32) * 0.02,
        cls_token=jax.random.normal(ks[2], (1, 1, E), jnp.float32) * 0.02,
        blocks=blocks,
        norm_g=jnp.ones((1, E), jnp.float32), norm_b=jnp.zeros((1, E), jnp.float32),
        dec_embed_w=dec_embed_w, dec_embed_b=dec_embed_b,
        mask_token=jax.random.normal(ks[5], (1, 1, dE), jnp.float32) * 0.02,
        dec_pos_embed=jax.random.normal(ks[6], (1, L + 1, dE), jnp.float32) * 0.02,
        dec_blocks=dec_blocks,
        dec_norm_g=jnp.ones((1, dE), jnp.float32),
        dec_norm_b=jnp.zeros((1, dE), jnp.float32),
        dec_pred_w=dec_pred_w, dec_pred_b=dec_pred_b,
        cg=cg,
    )


if __name__ == "__main__":
    cfg = dict(
        img_size=16, patch_size=4,                 # L = 16 patches
        in_channels=4, out_channels=8, n_groups=4, mask_ratio=0.5,
        embed_dim=32, depth=2, num_heads=4, mlp_ratio=4,
        decoder_embed_dim=32, decoder_depth=2, decoder_num_heads=4,
    )
    root = jax.random.PRNGKey(0)
    k_param, k_img, k_feat, k_mask = jax.random.split(root, 4)
    params = init_params(k_param, cfg)
    imgs = jax.random.normal(k_img, (2, 3, cfg["img_size"], cfg["img_size"]),
                             jnp.float32)
    feat = jax.random.normal(k_feat, (2, cfg["in_channels"], 8, 8), jnp.float32)

    # run capability probes once, eagerly, outside the jit trace
    _erf_in_kernel_supported()
    _single_buffer_supported()

    fwd = jax.jit(lambda p, im, ft, k: facemae_forward(p, cfg, im, ft, k))
    out = fwd(params, imgs, feat, k_mask)
    gen_loss, g_loss, pred, mask, latent = jax.block_until_ready(out)

    L = (cfg["img_size"] // cfg["patch_size"]) ** 2
    len_keep = int(L * (1 - cfg["mask_ratio"]))
    assert pred.shape == (2, L, cfg["patch_size"] ** 2 * 3)
    assert mask.shape == (2, L)
    assert latent.shape == (2, 1 + len_keep, cfg["embed_dim"])
    assert g_loss.shape == (2,)
    assert gen_loss.shape == ()
    print("KERNEL_OK")
</pallas_src>

<mosaic_0001>
module attributes {stable_mosaic.version = 11 : i64} {
  func.func @_buf1_probe_kernel(%arg0: i32, %arg1: memref<8x128xf32, #tpu.memory_space<vmem>>, %arg2: memref<8x128xf32, #tpu.memory_space<vmem>>) attributes {dimension_semantics = [#tpu.dimension_semantics<arbitrary>], iteration_bounds = array<i64: 2>, scalar_prefetch = 0 : i64, scratch_operands = 0 : i64, tpu.core_type = #tpu.core_type<tc>, window_params = [{pipeline_mode = #tpu.pipeline_mode<synchronous>, transform_indices = @transform_0, window_bounds = array<i64: 8, 128>}, {pipeline_mode = #tpu.pipeline_mode<synchronous>, transform_indices = @transform_1, window_bounds = array<i64: 8, 128>}]} {
    %c0 = arith.constant 0 : index
    %c0_0 = arith.constant 0 : index
    %0 = vector.load %arg1[%c0, %c0_0] : memref<8x128xf32, #tpu.memory_space<vmem>>, vector<8x128xf32>
    %cst = arith.constant 2.000000e+00 : f32
    %1 = vector.broadcast %cst : f32 to vector<8x128xf32>
    %2 = arith.mulf %0, %1 : vector<8x128xf32>
    %c0_1 = arith.constant 0 : index
    %c0_2 = arith.constant 0 : index
    %3 = vector.load %arg2[%c0_1, %c0_2] : memref<8x128xf32, #tpu.memory_space<vmem>>, vector<8x128xf32>
    tpu.vector_store %arg2[%c0_1, %c0_2], %2 {strides = array<i32>} : memref<8x128xf32, #tpu.memory_space<vmem>>, vector<8x128xf32>,
    return
  }
  func.func @transform_0(%arg0: i32) -> (i32, i32) {
    %c0_i32 = arith.constant 0 : i32
    %c0_i32_0 = arith.constant 0 : i32
    %c0_i32_1 = arith.constant 0 : i32
    return %c0_i32, %c0_i32_0 : i32, i32
  }
  func.func @transform_1(%arg0: i32) -> (i32, i32) {
    %c0_i32 = arith.constant 0 : i32
    %c0_i32_0 = arith.constant 0 : i32
    %c0_i32_1 = arith.constant 0 : i32
    return %c0_i32, %c0_i32_0 : i32, i32
  }
}

module attributes {stable_mosaic.version = 11 : i64} {
  func.func @_mm_kernel(%arg0: i32, %arg1: memref<16x48xf32, #tpu.memory_space<vmem>>, %arg2: memref<48x32xbf16, #tpu.memory_space<vmem>>, %arg3: memref<1x32xf32, #tpu.memory_space<vmem>>, %arg4: memref<16x32xf32, #tpu.memory_space<vmem>>) attributes {dimension_semantics = [#tpu.dimension_semantics<parallel>], iteration_bounds = array<i64: 2>, scalar_prefetch = 0 : i64, scratch_operands = 0 : i64, tpu.core_type = #tpu.core_type<tc>, window_params = [{transform_indices = @transform_0, window_bounds = array<i64: 16, 48>}, {pipeline_mode = #tpu.pipeline_mode<synchronous>, transform_indices = @transform_1, window_bounds = array<i64: 48, 32>}, {pipeline_mode = #tpu.pipeline_mode<synchronous>, transform_indices = @transform_2, window_bounds = array<i64: 1, 32>}, {transform_indices = @transform_3, window_bounds = array<i64: 16, 32>}]} {
    %c0 = arith.constant 0 : index
    %c0_0 = arith.constant 0 : index
    %0 = vector.load %arg1[%c0, %c0_0] : memref<16x48xf32, #tpu.memory_space<vmem>>, vector<16x48xf32>
    %1 = arith.truncf %0 : vector<16x48xf32> to vector<16x48xbf16>
    %c0_1 = arith.constant 0 : index
    %c0_2 = arith.constant 0 : index
    %2 = vector.load %arg2[%c0_1, %c0_2] : memref<48x32xbf16, #tpu.memory_space<vmem>>, vector<48x32xbf16>
    %cst = arith.constant dense<0.000000e+00> : vector<16x32xf32>
    %3 = tpu.matmul %1, %2, %cst {dimension_numbers = #tpu.dot_dimension_numbers<[1], [0], [0], [1], [0, 0, 1, 1], [], []>} : vector<16x48xbf16>, vector<48x32xbf16>, vector<16x32xf32> -> vector<16x32xf32>
    %c0_3 = arith.constant 0 : index
    %c0_4 = arith.constant 0 : index
    %4 = vector.load %arg3[%c0_3, %c0_4] : memref<1x32xf32, #tpu.memory_space<vmem>>, vector<1x32xf32>
    %5 = vector.broadcast %4 : vector<1x32xf32> to vector<16x32xf32>
    %6 = arith.addf %3, %5 : vector<16x32xf32>
    %c0_5 = arith.constant 0 : index
    %c0_6 = arith.constant 0 : index
    %7 = vector.load %arg4[%c0_5, %c0_6] : memref<16x32xf32, #tpu.memory_space<vmem>>, vector<16x32xf32>
    tpu.vector_store %arg4[%c0_5, %c0_6], %6 {strides = array<i32>} : memref<16x32xf32, #tpu.memory_space<vmem>>, vector<16x32xf32>,
    return
  }
  func.func @transform_0(%arg0: i32) -> (i32, i32) {
    %c0_i32 = arith.constant 0 : i32
    %c0_i32_0 = arith.constant 0 : i32
    return %arg0, %c0_i32 : i32, i32
  }
  func.func @transform_1(%arg0: i32) -> (i32, i32) {
    %c0_i32 = arith.constant 0 : i32
    %c0_i32_0 = arith.constant 0 : i32
    %c0_i32_1 = arith.constant 0 : i32
    return %c0_i32, %c0_i32_0 : i32, i32
  }
  func.func @transform_2(%arg0: i32) -> (i32, i32) {
    %c0_i32 = arith.constant 0 : i32
    %c0_i32_0 = arith.constant 0 : i32
    %c0_i32_1 = arith.constant 0 : i32
    return %c0_i32, %c0_i32_0 : i32, i32
  }
  func.func @transform_3(%arg0: i32) -> (i32, i32) {
    %c0_i32 = arith.constant 0 : i32
    %c0_i32_0 = arith.constant 0 : i32
    return %arg0, %c0_i32 : i32, i32
  }
}

module attributes {stable_mosaic.version = 11 : i64} {
  func.func @_mm_kernel(%arg0: i32, %arg1: memref<64x4xf32, #tpu.memory_space<vmem>>, %arg2: memref<4x8xbf16, #tpu.memory_space<vmem>>, %arg3: memref<1x8xf32, #tpu.memory_space<vmem>>, %arg4: memref<64x8xf32, #tpu.memory_space<vmem>>) attributes {dimension_semantics = [#tpu.dimension_semantics<parallel>], iteration_bounds = array<i64: 2>, scalar_prefetch = 0 : i64, scratch_operands = 0 : i64, tpu.core_type = #tpu.core_type<tc>, window_params = [{transform_indices = @transform_0, window_bounds = array<i64: 64, 4>}, {pipeline_mode = #tpu.pipeline_mode<synchronous>, transform_indices = @transform_1, window_bounds = array<i64: 4, 8>}, {pipeline_mode = #tpu.pipeline_mode<synchronous>, transform_indices = @transform_2, window_bounds = array<i64: 1, 8>}, {transform_indices = @transform_3, window_bounds = array<i64: 64, 8>}]} {
    %c0 = arith.constant 0 : index
    %c0_0 = arith.constant 0 : index
    %0 = vector.load %arg1[%c0, %c0_0] : memref<64x4xf32, #tpu.memory_space<vmem>>, vector<64x4xf32>
    %1 = arith.truncf %0 : vector<64x4xf32> to vector<64x4xbf16>
    %c0_1 = arith.constant 0 : index
    %c0_2 = arith.constant 0 : index
    %2 = vector.load %arg2[%c0_1, %c0_2] : memref<4x8xbf16, #tpu.memory_space<vmem>>, vector<4x8xbf16>
    %cst = arith.constant dense<0.000000e+00> : vector<64x8xf32>
    %3 = tpu.matmul %1, %2, %cst {dimension_numbers = #tpu.dot_dimension_numbers<[1], [0], [0], [1], [0, 0, 1, 1], [], []>} : vector<64x4xbf16>, vector<4x8xbf16>, vector<64x8xf32> -> vector<64x8xf32>
    %c0_3 = arith.constant 0 : index
    %c0_4 = arith.constant 0 : index
    %4 = vector.load %arg3[%c0_3, %c0_4] : memref<1x8xf32, #tpu.memory_space<vmem>>, vector<1x8xf32>
    %5 = vector.broadcast %4 : vector<1x8xf32> to vector<64x8xf32>
    %6 = arith.addf %3, %5 : vector<64x8xf32>
    %c0_5 = arith.constant 0 : index
    %c0_6 = arith.constant 0 : index
    %7 = vector.load %arg4[%c0_5, %c0_6] : memref<64x8xf32, #tpu.memory_space<vmem>>, vector<64x8xf32>
    tpu.vector_store %arg4[%c0_5, %c0_6], %6 {strides = array<i32>} : memref<64x8xf32, #tpu.memory_space<vmem>>, vector<64x8xf32>,
    return
  }
  func.func @transform_0(%arg0: i32) -> (i32, i32) {
    %c0_i32 = arith.constant 0 : i32
    %c0_i32_0 = arith.constant 0 : i32
    return %arg0, %c0_i32 : i32, i32
  }
  func.func @transform_1(%arg0: i32) -> (i32, i32) {
    %c0_i32 = arith.constant 0 : i32
    %c0_i32_0 = arith.constant 0 : i32
    %c0_i32_1 = arith.constant 0 : i32
    return %c0_i32, %c0_i32_0 : i32, i32
  }
  func.func @transform_2(%arg0: i32) -> (i32, i32) {
    %c0_i32 = arith.constant 0 : i32
    %c0_i32_0 = arith.constant 0 : i32
    %c0_i32_1 = arith.constant 0 : i32
    return %c0_i32, %c0_i32_0 : i32, i32
  }
  func.func @transform_3(%arg0: i32) -> (i32, i32) {
    %c0_i32 = arith.constant 0 : i32
    %c0_i32_0 = arith.constant 0 : i32
    return %arg0, %c0_i32 : i32, i32
  }
}

module attributes {stable_mosaic.version = 11 : i64} {
  func.func @_mm_kernel(%arg0: i32, %arg1: memref<18x32xf32, #tpu.memory_space<vmem>>, %arg2: memref<32x96xbf16, #tpu.memory_space<vmem>>, %arg3: memref<1x96xf32, #tpu.memory_space<vmem>>, %arg4: memref<1x32xf32, #tpu.memory_space<vmem>>, %arg5: memref<1x32xf32, #tpu.memory_space<vmem>>, %arg6: memref<18x96xbf16, #tpu.memory_space<vmem>>) attributes {dimension_semantics = [#tpu.dimension_semantics<parallel>], iteration_bounds = array<i64: 1>, scalar_prefetch = 0 : i64, scratch_operands = 0 : i64, tpu.core_type = #tpu.core_type<tc>, window_params = [{transform_indices = @transform_0, window_bounds = array<i64: 18, 32>}, {pipeline_mode = #tpu.pipeline_mode<synchronous>, transform_indices = @transform_1, window_bounds = array<i64: 32, 96>}, {pipeline_mode = #tpu.pipeline_mode<synchronous>, transform_indices = @transform_2, window_bounds = array<i64: 1, 96>}, {pipeline_mode = #tpu.pipeline_mode<synchronous>, transform_indices = @transform_3, window_bounds = array<i64: 1, 32>}, {pipeline_mode = #tpu.pipeline_mode<synchronous>, transform_indices = @transform_4, window_bounds = array<i64: 1, 32>}, {transform_indices = @transform_5, window_bounds = array<i64: 18, 96>}]} {
    %c0 = arith.constant 0 : index
    %c0_0 = arith.constant 0 : index
    %0 = vector.load %arg1[%c0, %c0_0] : memref<18x32xf32, #tpu.memory_space<vmem>>, vector<18x32xf32>
    %cst = arith.constant dense<0.000000e+00> : vector<18xf32>
    %1 = vector.multi_reduction <add>, %0, %cst [1] : vector<18x32xf32> to vector<18xf32>
    %2 = vector.shape_cast %1 : vector<18xf32> to vector<18x1xf32>
    %cst_1 = arith.constant 3.200000e+01 : f32
    %3 = vector.broadcast %cst_1 : f32 to vector<18x1xf32>
    %4 = arith.divf %2, %3 : vector<18x1xf32>
    %5 = vector.broadcast %4 : vector<18x1xf32> to vector<18x32xf32>
    %6 = arith.subf %0, %5 : vector<18x32xf32>
    %7 = arith.mulf %6, %6 : vector<18x32xf32>
    %cst_2 = arith.constant dense<0.000000e+00> : vector<18xf32>
    %8 = vector.multi_reduction <add>, %7, %cst_2 [1] : vector<18x32xf32> to vector<18xf32>
    %9 = vector.shape_cast %8 : vector<18xf32> to vector<18x1xf32>
    %cst_3 = arith.constant 3.200000e+01 : f32
    %10 = vector.broadcast %cst_3 : f32 to vector<18x1xf32>
    %11 = arith.divf %9, %10 : vector<18x1xf32>
    %12 = vector.broadcast %4 : vector<18x1xf32> to vector<18x32xf32>
    %13 = arith.subf %0, %12 : vector<18x32xf32>
    %cst_4 = arith.constant 9.99999997E-7 : f32
    %14 = vector.broadcast %cst_4 : f32 to vector<18x1xf32>
    %15 = arith.addf %11, %14 : vector<18x1xf32>
    %16 = math.rsqrt %15 : vector<18x1xf32>
    %17 = vector.broadcast %16 : vector<18x1xf32> to vector<18x32xf32>
    %18 = arith.mulf %13, %17 : vector<18x32xf32>
    %c0_5 = arith.constant 0 : index
    %c0_6 = arith.constant 0 : index
    %19 = vector.load %arg4[%c0_5, %c0_6] : memref<1x32xf32, #tpu.memory_space<vmem>>, vector<1x32xf32>
    %20 = vector.broadcast %19 : vector<1x32xf32> to vector<18x32xf32>
    %21 = arith.mulf %18, %20 : vector<18x32xf32>
    %c0_7 = arith.constant 0 : index
    %c0_8 = arith.constant 0 : index
    %22 = vector.load %arg5[%c0_7, %c0_8] : memref<1x32xf32, #tpu.memory_space<vmem>>, vector<1x32xf32>
    %23 = vector.broadcast %22 : vector<1x32xf32> to vector<18x32xf32>
    %24 = arith.addf %21, %23 : vector<18x32xf32>
    %25 = arith.truncf %24 : vector<18x32xf32> to vector<18x32xbf16>
    %c0_9 = arith.constant 0 : index
    %c0_10 = arith.constant 0 : index
    %26 = vector.load %arg2[%c0_9, %c0_10] : memref<32x96xbf16, #tpu.memory_space<vmem>>, vector<32x96xbf16>
    %cst_11 = arith.constant dense<0.000000e+00> : vector<18x96xf32>
    %27 = tpu.matmul %25, %26, %cst_11 {dimension_numbers = #tpu.dot_dimension_numbers<[1], [0], [0], [1], [0, 0, 1, 1], [], []>} : vector<18x32xbf16>, vector<32x96xbf16>, vector<18x96xf32> -> vector<18x96xf32>
    %c0_12 = arith.constant 0 : index
    %c0_13 = arith.constant 0 : index
    %28 = vector.load %arg3[%c0_12, %c0_13] : memref<1x96xf32, #tpu.memory_space<vmem>>, vector<1x96xf32>
    %29 = vector.broadcast %28 : vector<1x96xf32> to vector<18x96xf32>
    %30 = arith.addf %27, %29 : vector<18x96xf32>
    %31 = arith.truncf %30 : vector<18x96xf32> to vector<18x96xbf16>
    %c0_14 = arith.constant 0 : index
    %c0_15 = arith.constant 0 : index
    %32 = vector.load %arg6[%c0_14, %c0_15] : memref<18x96xbf16, #tpu.memory_space<vmem>>, vector<18x96xbf16>
    tpu.vector_store %arg6[%c0_14, %c0_15], %31 {strides = array<i32>} : memref<18x96xbf16, #tpu.memory_space<vmem>>, vector<18x96xbf16>,
    return
  }
  func.func @transform_0(%arg0: i32) -> (i32, i32) {
    %c0_i32 = arith.constant 0 : i32
    %c0_i32_0 = arith.constant 0 : i32
    return %arg0, %c0_i32 : i32, i32
  }
  func.func @transform_1(%arg0: i32) -> (i32, i32) {
    %c0_i32 = arith.constant 0 : i32
    %c0_i32_0 = arith.constant 0 : i32
    %c0_i32_1 = arith.constant 0 : i32
    return %c0_i32, %c0_i32_0 : i32, i32
  }
  func.func @transform_2(%arg0: i32) -> (i32, i32) {
    %c0_i32 = arith.constant 0 : i32
    %c0_i32_0 = arith.constant 0 : i32
    %c0_i32_1 = arith.constant 0 : i32
    return %c0_i32, %c0_i32_0 : i32, i32
  }
  func.func @transform_3(%arg0: i32) -> (i32, i32) {
    %c0_i32 = arith.constant 0 : i32
    %c0_i32_0 = arith.constant 0 : i32
    %c0_i32_1 = arith.constant 0 : i32
    return %c0_i32, %c0_i32_0 : i32, i32
  }
  func.func @transform_4(%arg0: i32) -> (i32, i32) {
    %c0_i32 = arith.constant 0 : i32
    %c0_i32_0 = arith.constant 0 : i32
    %c0_i32_1 = arith.constant 0 : i32
    return %c0_i32, %c0_i32_0 : i32, i32
  }
  func.func @transform_5(%arg0: i32) -> (i32, i32) {
    %c0_i32 = arith.constant 0 : i32
    %c0_i32_0 = arith.constant 0 : i32
    return %arg0, %c0_i32 : i32, i32
  }
}

module attributes {stable_mosaic.version = 11 : i64} {
  func.func @_attn_kernel(%arg0: i32, %arg1: memref<1x9x96xbf16, #tpu.memory_space<vmem>>, %arg2: memref<1x9x32xbf16, #tpu.memory_space<vmem>>) attributes {dimension_semantics = [#tpu.dimension_semantics<parallel>], iteration_bounds = array<i64: 2>, scalar_prefetch = 0 : i64, scratch_operands = 0 : i64, tpu.core_type = #tpu.core_type<tc>, window_params = [{transform_indices = @transform_0, window_bounds = array<i64: 1, 9, 96>}, {transform_indices = @transform_1, window_bounds = array<i64: 1, 9, 32>}]} {
    %c0 = arith.constant 0 : index
    %c0_0 = arith.constant 0 : index
    %c0_1 = arith.constant 0 : index
    %0 = vector.load %arg1[%c0, %c0_0, %c0_1] : memref<1x9x96xbf16, #tpu.memory_space<vmem>>, vector<1x9x96xbf16>
    %1 = vector.shape_cast %0 : vector<1x9x96xbf16> to vector<9x96xbf16>
    %2 = vector.extract_strided_slice %1 {offsets = [0, 0], sizes = [9, 8], strides = [1, 1]} : vector<9x96xbf16> to vector<9x8xbf16>
    %3 = vector.extract_strided_slice %1 {offsets = [0, 32], sizes = [9, 8], strides = [1, 1]} : vector<9x96xbf16> to vector<9x8xbf16>
    %4 = vector.extract_strided_slice %1 {offsets = [0, 64], sizes = [9, 8], strides = [1, 1]} : vector<9x96xbf16> to vector<9x8xbf16>
    "tpu.trace_start"() <{level = 10 : i32, message = "qd,kd->qk"}> : () -> ()
    %cst = arith.constant dense<0.000000e+00> : vector<9x9xf32>
    %5 = tpu.matmul %2, %3, %cst {dimension_numbers = #tpu.dot_dimension_numbers<[1], [1], [0], [0], [0, 0, 1, 0], [], []>} : vector<9x8xbf16>, vector<9x8xbf16>, vector<9x9xf32> -> vector<9x9xf32>
    "tpu.trace_stop"() : () -> ()
    %cst_2 = arith.constant 0.353553385 : f32
    %6 = vector.broadcast %cst_2 : f32 to vector<9x9xf32>
    %7 = arith.mulf %5, %6 : vector<9x9xf32>
    %cst_3 = arith.constant dense<0xFF800000> : vector<9xf32>
    %8 = vector.multi_reduction <maximumf>, %7, %cst_3 [1] : vector<9x9xf32> to vector<9xf32>
    %9 = vector.shape_cast %8 : vector<9xf32> to vector<9x1xf32>
    %10 = vector.broadcast %9 : vector<9x1xf32> to vector<9x9xf32>
    %11 = arith.subf %7, %10 : vector<9x9xf32>
    %12 = math.exp %11 : vector<9x9xf32>
    %cst_4 = arith.constant dense<0.000000e+00> : vector<9xf32>
    %13 = vector.multi_reduction <add>, %12, %cst_4 [1] : vector<9x9xf32> to vector<9xf32>
    %14 = vector.shape_cast %13 : vector<9xf32> to vector<9x1xf32>
    %15 = vector.broadcast %14 : vector<9x1xf32> to vector<9x9xf32>
    %16 = arith.divf %12, %15 : vector<9x9xf32>
    %17 = arith.truncf %16 : vector<9x9xf32> to vector<9x9xbf16>
    %cst_5 = arith.constant dense<0.000000e+00> : vector<9x8xf32>
    %18 = tpu.matmul %17, %4, %cst_5 {dimension_numbers = #tpu.dot_dimension_numbers<[1], [0], [0], [1], [0, 0, 1, 1], [], []>} : vector<9x9xbf16>, vector<9x8xbf16>, vector<9x8xf32> -> vector<9x8xf32>
    %19 = vector.extract_strided_slice %1 {offsets = [0, 8], sizes = [9, 8], strides = [1, 1]} : vector<9x96xbf16> to vector<9x8xbf16>
    %20 = vector.extract_strided_slice %1 {offsets = [0, 40], sizes = [9, 8], strides = [1, 1]} : vector<9x96xbf16> to vector<9x8xbf16>
    %21 = vector.extract_strided_slice %1 {offsets = [0, 72], sizes = [9, 8], strides = [1, 1]} : vector<9x96xbf16> to vector<9x8xbf16>
    "tpu.trace_start"() <{level = 10 : i32, message = "qd,kd->qk"}> : () -> ()
    %cst_6 = arith.constant dense<0.000000e+00> : vector<9x9xf32>
    %22 = tpu.matmul %19, %20, %cst_6 {dimension_numbers = #tpu.dot_dimension_numbers<[1], [1], [0], [0], [0, 0, 1, 0], [], []>} : vector<9x8xbf16>, vector<9x8xbf16>, vector<9x9xf32> -> vector<9x9xf32>
    "tpu.trace_stop"() : () -> ()
    %cst_7 = arith.constant 0.353553385 : f32
    %23 = vector.broadcast %cst_7 : f32 to vector<9x9xf32>
    %24 = arith.mulf %22, %23 : vector<9x9xf32>
    %cst_8 = arith.constant dense<0xFF800000> : vector<9xf32>
    %25 = vector.multi_reduction <maximumf>, %24, %cst_8 [1] : vector<9x9xf32> to vector<9xf32>
    %26 = vector.shape_cast %25 : vector<9xf32> to vector<9x1xf32>
    %27 = vector.broadcast %26 : vector<9x1xf32> to vector<9x9xf32>
    %28 = arith.subf %24, %27 : vector<9x9xf32>
    %29 = math.exp %28 : vector<9x9xf32>
    %cst_9 = arith.constant dense<0.000000e+00> : vector<9xf32>
    %30 = vector.multi_reduction <add>, %29, %cst_9 [1] : vector<9x9xf32> to vector<9xf32>
    %31 = vector.shape_cast %30 : vector<9xf32> to vector<9x1xf32>
    %32 = vector.broadcast %31 : vector<9x1xf32> to vector<9x9xf32>
    %33 = arith.divf %29, %32 : vector<9x9xf32>
    %34 = arith.truncf %33 : vector<9x9xf32> to vector<9x9xbf16>
    %cst_10 = arith.constant dense<0.000000e+00> : vector<9x8xf32>
    %35 = tpu.matmul %34, %21, %cst_10 {dimension_numbers = #tpu.dot_dimension_numbers<[1], [0], [0], [1], [0, 0, 1, 1], [], []>} : vector<9x9xbf16>, vector<9x8xbf16>, vector<9x8xf32> -> vector<9x8xf32>
    %36 = vector.extract_strided_slice %1 {offsets = [0, 16], sizes = [9, 8], strides = [1, 1]} : vector<9x96xbf16> to vector<9x8xbf16>
    %37 = vector.extract_strided_slice %1 {offsets = [0, 48], sizes = [9, 8], strides = [1, 1]} : vector<9x96xbf16> to vector<9x8xbf16>
    %38 = vector.extract_strided_slice %1 {offsets = [0, 80], sizes = [9, 8], strides = [1, 1]} : vector<9x96xbf16> to vector<9x8xbf16>
    "tpu.trace_start"() <{level = 10 : i32, message = "qd,kd->qk"}> : () -> ()
    %cst_11 = arith.constant dense<0.000000e+00> : vector<9x9xf32>
    %39 = tpu.matmul %36, %37, %cst_11 {dimension_numbers = #tpu.dot_dimension_numbers<[1], [1], [0], [0], [0, 0, 1, 0], [], []>} : vector<9x8xbf16>, vector<9x8xbf16>, vector<9x9xf32> -> vector<9x9xf32>
    "tpu.trace_stop"() : () -> ()
    %cst_12 = arith.constant 0.353553385 : f32
    %40 = vector.broadcast %cst_12 : f32 to vector<9x9xf32>
    %41 = arith.mulf %39, %40 : vector<9x9xf32>
    %cst_13 = arith.constant dense<0xFF800000> : vector<9xf32>
    %42 = vector.multi_reduction <maximumf>, %41, %cst_13 [1] : vector<9x9xf32> to vector<9xf32>
    %43 = vector.shape_cast %42 : vector<9xf32> to vector<9x1xf32>
    %44 = vector.broadcast %43 : vector<9x1xf32> to vector<9x9xf32>
    %45 = arith.subf %41, %44 : vector<9x9xf32>
    %46 = math.exp %45 : vector<9x9xf32>
    %cst_14 = arith.constant dense<0.000000e+00> : vector<9xf32>
    %47 = vector.multi_reduction <add>, %46, %cst_14 [1] : vector<9x9xf32> to vector<9xf32>
    %48 = vector.shape_cast %47 : vector<9xf32> to vector<9x1xf32>
    %49 = vector.broadcast %48 : vector<9x1xf32> to vector<9x9xf32>
    %50 = arith.divf %46, %49 : vector<9x9xf32>
    %51 = arith.truncf %50 : vector<9x9xf32> to vector<9x9xbf16>
    %cst_15 = arith.constant dense<0.000000e+00> : vector<9x8xf32>
    %52 = tpu.matmul %51, %38, %cst_15 {dimension_numbers = #tpu.dot_dimension_numbers<[1], [0], [0], [1], [0, 0, 1, 1], [], []>} : vector<9x9xbf16>, vector<9x8xbf16>, vector<9x8xf32> -> vector<9x8xf32>
    %53 = vector.extract_strided_slice %1 {offsets = [0, 24], sizes = [9, 8], strides = [1, 1]} : vector<9x96xbf16> to vector<9x8xbf16>
    %54 = vector.extract_strided_slice %1 {offsets = [0, 56], sizes = [9, 8], strides = [1, 1]} : vector<9x96xbf16> to vector<9x8xbf16>
    %55 = vector.extract_strided_slice %1 {offsets = [0, 88], sizes = [9, 8], strides = [1, 1]} : vector<9x96xbf16> to vector<9x8xbf16>
    "tpu.trace_start"() <{level = 10 : i32, message = "qd,kd->qk"}> : () -> ()
    %cst_16 = arith.constant dense<0.000000e+00> : vector<9x9xf32>
    %56 = tpu.matmul %53, %54, %cst_16 {dimension_numbers = #tpu.dot_dimension_numbers<[1], [1], [0], [0], [0, 0, 1, 0], [], []>} : vector<9x8xbf16>, vector<9x8xbf16>, vector<9x9xf32> -> vector<9x9xf32>
    "tpu.trace_stop"() : () -> ()
    %cst_17 = arith.constant 0.353553385 : f32
    %57 = vector.broadcast %cst_17 : f32 to vector<9x9xf32>
    %58 = arith.mulf %56, %57 : vector<9x9xf32>
    %cst_18 = arith.constant dense<0xFF800000> : vector<9xf32>
    %59 = vector.multi_reduction <maximumf>, %58, %cst_18 [1] : vector<9x9xf32> to vector<9xf32>
    %60 = vector.shape_cast %59 : vector<9xf32> to vector<9x1xf32>
    %61 = vector.broadcast %60 : vector<9x1xf32> to vector<9x9xf32>
    %62 = arith.subf %58, %61 : vector<9x9xf32>
    %63 = math.exp %62 : vector<9x9xf32>
    %cst_19 = arith.constant dense<0.000000e+00> : vector<9xf32>
    %64 = vector.multi_reduction <add>, %63, %cst_19 [1] : vector<9x9xf32> to vector<9xf32>
    %65 = vector.shape_cast %64 : vector<9xf32> to vector<9x1xf32>
    %66 = vector.broadcast %65 : vector<9x1xf32> to vector<9x9xf32>
    %67 = arith.divf %63, %66 : vector<9x9xf32>
    %68 = arith.truncf %67 : vector<9x9xf32> to vector<9x9xbf16>
    %cst_20 = arith.constant dense<0.000000e+00> : vector<9x8xf32>
    %69 = tpu.matmul %68, %55, %cst_20 {dimension_numbers = #tpu.dot_dimension_numbers<[1], [0], [0], [1], [0, 0, 1, 1], [], []>} : vector<9x9xbf16>, vector<9x8xbf16>, vector<9x8xf32> -> vector<9x8xf32>
    %70 = tpu.concatenate %18, %35, %52, %69 in 1 : vector<9x8xf32>, vector<9x8xf32>, vector<9x8xf32>, vector<9x8xf32> -> vector<9x32xf32>
    %71 = arith.truncf %70 : vector<9x32xf32> to vector<9x32xbf16>
    %72 = vector.shape_cast %71 : vector<9x32xbf16> to vector<1x9x32xbf16>
    %c0_21 = arith.constant 0 : index
    %c0_22 = arith.constant 0 : index
    %c0_23 = arith.constant 0 : index
    %73 = vector.load %arg2[%c0_21, %c0_22, %c0_23] : memref<1x9x32xbf16, #tpu.memory_space<vmem>>, vector<1x9x32xbf16>
    tpu.vector_store %arg2[%c0_21, %c0_22, %c0_23], %72 {strides = array<i32>} : memref<1x9x32xbf16, #tpu.memory_space<vmem>>, vector<1x9x32xbf16>,
    return
  }
  func.func @transform_0(%arg0: i32) -> (i32, i32, i32) {
    %c0_i32 = arith.constant 0 : i32
    %c0_i32_0 = arith.constant 0 : i32
    %c0_i32_1 = arith.constant 0 : i32
    return %arg0, %c0_i32, %c0_i32_0 : i32, i32, i32
  }
  func.func @transform_1(%arg0: i32) -> (i32, i32, i32) {
    %c0_i32 = arith.constant 0 : i32
    %c0_i32_0 = arith.constant 0 : i32
    %c0_i32_1 = arith.constant 0 : i32
    return %arg0, %c0_i32, %c0_i32_0 : i32, i32, i32
  }
}

module attributes {stable_mosaic.version = 11 : i64} {
  func.func @_mm_kernel(%arg0: i32, %arg1: memref<18x32xbf16, #tpu.memory_space<vmem>>, %arg2: memref<32x32xbf16, #tpu.memory_space<vmem>>, %arg3: memref<1x32xf32, #tpu.memory_space<vmem>>, %arg4: memref<18x32xf32, #tpu.memory_space<vmem>>, %arg5: memref<18x32xf32, #tpu.memory_space<vmem>>) attributes {dimension_semantics = [#tpu.dimension_semantics<parallel>], iteration_bounds = array<i64: 1>, scalar_prefetch = 0 : i64, scratch_operands = 0 : i64, tpu.core_type = #tpu.core_type<tc>, window_params = [{transform_indices = @transform_0, window_bounds = array<i64: 18, 32>}, {pipeline_mode = #tpu.pipeline_mode<synchronous>, transform_indices = @transform_1, window_bounds = array<i64: 32, 32>}, {pipeline_mode = #tpu.pipeline_mode<synchronous>, transform_indices = @transform_2, window_bounds = array<i64: 1, 32>}, {transform_indices = @transform_3, window_bounds = array<i64: 18, 32>}, {transform_indices = @transform_4, window_bounds = array<i64: 18, 32>}]} {
    %c0 = arith.constant 0 : index
    %c0_0 = arith.constant 0 : index
    %0 = vector.load %arg1[%c0, %c0_0] : memref<18x32xbf16, #tpu.memory_space<vmem>>, vector<18x32xbf16>
    %c0_1 = arith.constant 0 : index
    %c0_2 = arith.constant 0 : index
    %1 = vector.load %arg2[%c0_1, %c0_2] : memref<32x32xbf16, #tpu.memory_space<vmem>>, vector<32x32xbf16>
    %cst = arith.constant dense<0.000000e+00> : vector<18x32xf32>
    %2 = tpu.matmul %0, %1, %cst {dimension_numbers = #tpu.dot_dimension_numbers<[1], [0], [0], [1], [0, 0, 1, 1], [], []>} : vector<18x32xbf16>, vector<32x32xbf16>, vector<18x32xf32> -> vector<18x32xf32>
    %c0_3 = arith.constant 0 : index
    %c0_4 = arith.constant 0 : index
    %3 = vector.load %arg3[%c0_3, %c0_4] : memref<1x32xf32, #tpu.memory_space<vmem>>, vector<1x32xf32>
    %4 = vector.broadcast %3 : vector<1x32xf32> to vector<18x32xf32>
    %5 = arith.addf %2, %4 : vector<18x32xf32>
    %c0_5 = arith.constant 0 : index
    %c0_6 = arith.constant 0 : index
    %6 = vector.load %arg4[%c0_5, %c0_6] : memref<18x32xf32, #tpu.memory_space<vmem>>, vector<18x32xf32>
    %7 = arith.addf %5, %6 : vector<18x32xf32>
    %c0_7 = arith.constant 0 : index
    %c0_8 = arith.constant 0 : index
    %8 = vector.load %arg5[%c0_7, %c0_8] : memref<18x32xf32, #tpu.memory_space<vmem>>, vector<18x32xf32>
    tpu.vector_store %arg5[%c0_7, %c0_8], %7 {strides = array<i32>} : memref<18x32xf32, #tpu.memory_space<vmem>>, vector<18x32xf32>,
    return
  }
  func.func @transform_0(%arg0: i32) -> (i32, i32) {
    %c0_i32 = arith.constant 0 : i32
    %c0_i32_0 = arith.constant 0 : i32
    return %arg0, %c0_i32 : i32, i32
  }
  func.func @transform_1(%arg0: i32) -> (i32, i32) {
    %c0_i32 = arith.constant 0 : i32
    %c0_i32_0 = arith.constant 0 : i32
    %c0_i32_1 = arith.constant 0 : i32
    return %c0_i32, %c0_i32_0 : i32, i32
  }
  func.func @transform_2(%arg0: i32) -> (i32, i32) {
    %c0_i32 = arith.constant 0 : i32
    %c0_i32_0 = arith.constant 0 : i32
    %c0_i32_1 = arith.constant 0 : i32
    return %c0_i32, %c0_i32_0 : i32, i32
  }
  func.func @transform_3(%arg0: i32) -> (i32, i32) {
    %c0_i32 = arith.constant 0 : i32
    %c0_i32_0 = arith.constant 0 : i32
    return %arg0, %c0_i32 : i32, i32
  }
  func.func @transform_4(%arg0: i32) -> (i32, i32) {
    %c0_i32 = arith.constant 0 : i32
    %c0_i32_0 = arith.constant 0 : i32
    return %arg0, %c0_i32 : i32, i32
  }
}

module attributes {stable_mosaic.version = 11 : i64} {
  func.func @_mm_kernel(%arg0: i32, %arg1: memref<18x32xf32, #tpu.memory_space<vmem>>, %arg2: memref<32x128xbf16, #tpu.memory_space<vmem>>, %arg3: memref<1x128xf32, #tpu.memory_space<vmem>>, %arg4: memref<1x32xf32, #tpu.memory_space<vmem>>, %arg5: memref<1x32xf32, #tpu.memory_space<vmem>>, %arg6: memref<18x128xbf16, #tpu.memory_space<vmem>>) attributes {dimension_semantics = [#tpu.dimension_semantics<parallel>], iteration_bounds = array<i64: 1>, scalar_prefetch = 0 : i64, scratch_operands = 0 : i64, tpu.core_type = #tpu.core_type<tc>, window_params = [{transform_indices = @transform_0, window_bounds = array<i64: 18, 32>}, {pipeline_mode = #tpu.pipeline_mode<synchronous>, transform_indices = @transform_1, window_bounds = array<i64: 32, 128>}, {pipeline_mode = #tpu.pipeline_mode<synchronous>, transform_indices = @transform_2, window_bounds = array<i64: 1, 128>}, {pipeline_mode = #tpu.pipeline_mode<synchronous>, transform_indices = @transform_3, window_bounds = array<i64: 1, 32>}, {pipeline_mode = #tpu.pipeline_mode<synchronous>, transform_indices = @transform_4, window_bounds = array<i64: 1, 32>}, {transform_indices = @transform_5, window_bounds = array<i64: 18, 128>}]} {
    %c0 = arith.constant 0 : index
    %c0_0 = arith.constant 0 : index
    %0 = vector.load %arg1[%c0, %c0_0] : memref<18x32xf32, #tpu.memory_space<vmem>>, vector<18x32xf32>
    %cst = arith.constant dense<0.000000e+00> : vector<18xf32>
    %1 = vector.multi_reduction <add>, %0, %cst [1] : vector<18x32xf32> to vector<18xf32>
    %2 = vector.shape_cast %1 : vector<18xf32> to vector<18x1xf32>
    %cst_1 = arith.constant 3.200000e+01 : f32
    %3 = vector.broadcast %cst_1 : f32 to vector<18x1xf32>
    %4 = arith.divf %2, %3 : vector<18x1xf32>
    %5 = vector.broadcast %4 : vector<18x1xf32> to vector<18x32xf32>
    %6 = arith.subf %0, %5 : vector<18x32xf32>
    %7 = arith.mulf %6, %6 : vector<18x32xf32>
    %cst_2 = arith.constant dense<0.000000e+00> : vector<18xf32>
    %8 = vector.multi_reduction <add>, %7, %cst_2 [1] : vector<18x32xf32> to vector<18xf32>
    %9 = vector.shape_cast %8 : vector<18xf32> to vector<18x1xf32>
    %cst_3 = arith.constant 3.200000e+01 : f32
    %10 = vector.broadcast %cst_3 : f32 to vector<18x1xf32>
    %11 = arith.divf %9, %10 : vector<18x1xf32>
    %12 = vector.broadcast %4 : vector<18x1xf32> to vector<18x32xf32>
    %13 = arith.subf %0, %12 : vector<18x32xf32>
    %cst_4 = arith.constant 9.99999997E-7 : f32
    %14 = vector.broadcast %cst_4 : f32 to vector<18x1xf32>
    %15 = arith.addf %11, %14 : vector<18x1xf32>
    %16 = math.rsqrt %15 : vector<18x1xf32>
    %17 = vector.broadcast %16 : vector<18x1xf32> to vector<18x32xf32>
    %18 = arith.mulf %13, %17 : vector<18x32xf32>
    %c0_5 = arith.constant 0 : index
    %c0_6 = arith.constant 0 : index
    %19 = vector.load %arg4[%c0_5, %c0_6] : memref<1x32xf32, #tpu.memory_space<vmem>>, vector<1x32xf32>
    %20 = vector.broadcast %19 : vector<1x32xf32> to vector<18x32xf32>
    %21 = arith.mulf %18, %20 : vector<18x32xf32>
    %c0_7 = arith.constant 0 : index
    %c0_8 = arith.constant 0 : index
    %22 = vector.load %arg5[%c0_7, %c0_8] : memref<1x32xf32, #tpu.memory_space<vmem>>, vector<1x32xf32>
    %23 = vector.broadcast %22 : vector<1x32xf32> to vector<18x32xf32>
    %24 = arith.addf %21, %23 : vector<18x32xf32>
    %25 = arith.truncf %24 : vector<18x32xf32> to vector<18x32xbf16>
    %c0_9 = arith.constant 0 : index
    %c0_10 = arith.constant 0 : index
    %26 = vector.load %arg2[%c0_9, %c0_10] : memref<32x128xbf16, #tpu.memory_space<vmem>>, vector<32x128xbf16>
    %cst_11 = arith.constant dense<0.000000e+00> : vector<18x128xf32>
    %27 = tpu.matmul %25, %26, %cst_11 {dimension_numbers = #tpu.dot_dimension_numbers<[1], [0], [0], [1], [0, 0, 1, 1], [], []>} : vector<18x32xbf16>, vector<32x128xbf16>, vector<18x128xf32> -> vector<18x128xf32>
    %c0_12 = arith.constant 0 : index
    %c0_13 = arith.constant 0 : index
    %28 = vector.load %arg3[%c0_12, %c0_13] : memref<1x128xf32, #tpu.memory_space<vmem>>, vector<1x128xf32>
    %29 = vector.broadcast %28 : vector<1x128xf32> to vector<18x128xf32>
    %30 = arith.addf %27, %29 : vector<18x128xf32>
    %31 = arith.mulf %30, %30 : vector<18x128xf32>
    %32 = arith.mulf %30, %31 : vector<18x128xf32>
    %cst_14 = arith.constant 4.471500e-02 : f32
    %33 = vector.broadcast %cst_14 : f32 to vector<18x128xf32>
    %34 = arith.mulf %33, %32 : vector<18x128xf32>
    %35 = arith.addf %30, %34 : vector<18x128xf32>
    %cst_15 = arith.constant 0.797884583 : f32
    %36 = vector.broadcast %cst_15 : f32 to vector<18x128xf32>
    %37 = arith.mulf %36, %35 : vector<18x128xf32>
    %38 = math.tanh %37 : vector<18x128xf32>
    %cst_16 = arith.constant 1.000000e+00 : f32
    %39 = vector.broadcast %cst_16 : f32 to vector<18x128xf32>
    %40 = arith.addf %39, %38 : vector<18x128xf32>
    %cst_17 = arith.constant 5.000000e-01 : f32
    %41 = vector.broadcast %cst_17 : f32 to vector<18x128xf32>
    %42 = arith.mulf %41, %40 : vector<18x128xf32>
    %43 = arith.mulf %30, %42 : vector<18x128xf32>
    %44 = arith.truncf %43 : vector<18x128xf32> to vector<18x128xbf16>
    %c0_18 = arith.constant 0 : index
    %c0_19 = arith.constant 0 : index
    %45 = vector.load %arg6[%c0_18, %c0_19] : memref<18x128xbf16, #tpu.memory_space<vmem>>, vector<18x128xbf16>
    tpu.vector_store %arg6[%c0_18, %c0_19], %44 {strides = array<i32>} : memref<18x128xbf16, #tpu.memory_space<vmem>>, vector<18x128xbf16>,
    return
  }
  func.func @transform_0(%arg0: i32) -> (i32, i32) {
    %c0_i32 = arith.constant 0 : i32
    %c0_i32_0 = arith.constant 0 : i32
    return %arg0, %c0_i32 : i32, i32
  }
  func.func @transform_1(%arg0: i32) -> (i32, i32) {
    %c0_i32 = arith.constant 0 : i32
    %c0_i32_0 = arith.constant 0 : i32
    %c0_i32_1 = arith.constant 0 : i32
    return %c0_i32, %c0_i32_0 : i32, i32
  }
  func.func @transform_2(%arg0: i32) -> (i32, i32) {
    %c0_i32 = arith.constant 0 : i32
    %c0_i32_0 = arith.constant 0 : i32
    %c0_i32_1 = arith.constant 0 : i32
    return %c0_i32, %c0_i32_0 : i32, i32
  }
  func.func @transform_3(%arg0: i32) -> (i32, i32) {
    %c0_i32 = arith.constant 0 : i32
    %c0_i32_0 = arith.constant 0 : i32
    %c0_i32_1 = arith.constant 0 : i32
    return %c0_i32, %c0_i32_0 : i32, i32
  }
  func.func @transform_4(%arg0: i32) -> (i32, i32) {
    %c0_i32 = arith.constant 0 : i32
    %c0_i32_0 = arith.constant 0 : i32
    %c0_i32_1 = arith.constant 0 : i32
    return %c0_i32, %c0_i32_0 : i32, i32
  }
  func.func @transform_5(%arg0: i32) -> (i32, i32) {
    %c0_i32 = arith.constant 0 : i32
    %c0_i32_0 = arith.constant 0 : i32
    return %arg0, %c0_i32 : i32, i32
  }
}

module attributes {stable_mosaic.version = 11 : i64} {
  func.func @_mm_kernel(%arg0: i32, %arg1: memref<18x128xbf16, #tpu.memory_space<vmem>>, %arg2: memref<128x32xbf16, #tpu.memory_space<vmem>>, %arg3: memref<1x32xf32, #tpu.memory_space<vmem>>, %arg4: memref<18x32xf32, #tpu.memory_space<vmem>>, %arg5: memref<18x32xf32, #tpu.memory_space<vmem>>) attributes {dimension_semantics = [#tpu.dimension_semantics<parallel>], iteration_bounds = array<i64: 1>, scalar_prefetch = 0 : i64, scratch_operands = 0 : i64, tpu.core_type = #tpu.core_type<tc>, window_params = [{transform_indices = @transform_0, window_bounds = array<i64: 18, 128>}, {pipeline_mode = #tpu.pipeline_mode<synchronous>, transform_indices = @transform_1, window_bounds = array<i64: 128, 32>}, {pipeline_mode = #tpu.pipeline_mode<synchronous>, transform_indices = @transform_2, window_bounds = array<i64: 1, 32>}, {transform_indices = @transform_3, window_bounds = array<i64: 18, 32>}, {transform_indices = @transform_4, window_bounds = array<i64: 18, 32>}]} {
    %c0 = arith.constant 0 : index
    %c0_0 = arith.constant 0 : index
    %0 = vector.load %arg1[%c0, %c0_0] : memref<18x128xbf16, #tpu.memory_space<vmem>>, vector<18x128xbf16>
    %c0_1 = arith.constant 0 : index
    %c0_2 = arith.constant 0 : index
    %1 = vector.load %arg2[%c0_1, %c0_2] : memref<128x32xbf16, #tpu.memory_space<vmem>>, vector<128x32xbf16>
    %cst = arith.constant dense<0.000000e+00> : vector<18x32xf32>
    %2 = tpu.matmul %0, %1, %cst {dimension_numbers = #tpu.dot_dimension_numbers<[1], [0], [0], [1], [0, 0, 1, 1], [], []>} : vector<18x128xbf16>, vector<128x32xbf16>, vector<18x32xf32> -> vector<18x32xf32>
    %c0_3 = arith.constant 0 : index
    %c0_4 = arith.constant 0 : index
    %3 = vector.load %arg3[%c0_3, %c0_4] : memref<1x32xf32, #tpu.memory_space<vmem>>, vector<1x32xf32>
    %4 = vector.broadcast %3 : vector<1x32xf32> to vector<18x32xf32>
    %5 = arith.addf %2, %4 : vector<18x32xf32>
    %c0_5 = arith.constant 0 : index
    %c0_6 = arith.constant 0 : index
    %6 = vector.load %arg4[%c0_5, %c0_6] : memref<18x32xf32, #tpu.memory_space<vmem>>, vector<18x32xf32>
    %7 = arith.addf %5, %6 : vector<18x32xf32>
    %c0_7 = arith.constant 0 : index
    %c0_8 = arith.constant 0 : index
    %8 = vector.load %arg5[%c0_7, %c0_8] : memref<18x32xf32, #tpu.memory_space<vmem>>, vector<18x32xf32>
    tpu.vector_store %arg5[%c0_7, %c0_8], %7 {strides = array<i32>} : memref<18x32xf32, #tpu.memory_space<vmem>>, vector<18x32xf32>,
    return
  }
  func.func @transform_0(%arg0: i32) -> (i32, i32) {
    %c0_i32 = arith.constant 0 : i32
    %c0_i32_0 = arith.constant 0 : i32
    return %arg0, %c0_i32 : i32, i32
  }
  func.func @transform_1(%arg0: i32) -> (i32, i32) {
    %c0_i32 = arith.constant 0 : i32
    %c0_i32_0 = arith.constant 0 : i32
    %c0_i32_1 = arith.constant 0 : i32
    return %c0_i32, %c0_i32_0 : i32, i32
  }
  func.func @transform_2(%arg0: i32) -> (i32, i32) {
    %c0_i32 = arith.constant 0 : i32
    %c0_i32_0 = arith.constant 0 : i32
    %c0_i32_1 = arith.constant 0 : i32
    return %c0_i32, %c0_i32_0 : i32, i32
  }
  func.func @transform_3(%arg0: i32) -> (i32, i32) {
    %c0_i32 = arith.constant 0 : i32
    %c0_i32_0 = arith.constant 0 : i32
    return %arg0, %c0_i32 : i32, i32
  }
  func.func @transform_4(%arg0: i32) -> (i32, i32) {
    %c0_i32 = arith.constant 0 : i32
    %c0_i32_0 = arith.constant 0 : i32
    return %arg0, %c0_i32 : i32, i32
  }
}

module attributes {stable_mosaic.version = 11 : i64} {
  func.func @_ln_kernel(%arg0: i32, %arg1: memref<18x32xf32, #tpu.memory_space<vmem>>, %arg2: memref<1x32xf32, #tpu.memory_space<vmem>>, %arg3: memref<1x32xf32, #tpu.memory_space<vmem>>, %arg4: memref<18x32xf32, #tpu.memory_space<vmem>>) attributes {dimension_semantics = [#tpu.dimension_semantics<parallel>], iteration_bounds = array<i64: 1>, scalar_prefetch = 0 : i64, scratch_operands = 0 : i64, tpu.core_type = #tpu.core_type<tc>, window_params = [{transform_indices = @transform_0, window_bounds = array<i64: 18, 32>}, {pipeline_mode = #tpu.pipeline_mode<synchronous>, transform_indices = @transform_1, window_bounds = array<i64: 1, 32>}, {pipeline_mode = #tpu.pipeline_mode<synchronous>, transform_indices = @transform_2, window_bounds = array<i64: 1, 32>}, {transform_indices = @transform_3, window_bounds = array<i64: 18, 32>}]} {
    %c0 = arith.constant 0 : index
    %c0_0 = arith.constant 0 : index
    %0 = vector.load %arg1[%c0, %c0_0] : memref<18x32xf32, #tpu.memory_space<vmem>>, vector<18x32xf32>
    %cst = arith.constant dense<0.000000e+00> : vector<18xf32>
    %1 = vector.multi_reduction <add>, %0, %cst [1] : vector<18x32xf32> to vector<18xf32>
    %2 = vector.shape_cast %1 : vector<18xf32> to vector<18x1xf32>
    %cst_1 = arith.constant 3.200000e+01 : f32
    %3 = vector.broadcast %cst_1 : f32 to vector<18x1xf32>
    %4 = arith.divf %2, %3 : vector<18x1xf32>
    %5 = vector.broadcast %4 : vector<18x1xf32> to vector<18x32xf32>
    %6 = arith.subf %0, %5 : vector<18x32xf32>
    %7 = arith.mulf %6, %6 : vector<18x32xf32>
    %cst_2 = arith.constant dense<0.000000e+00> : vector<18xf32>
    %8 = vector.multi_reduction <add>, %7, %cst_2 [1] : vector<18x32xf32> to vector<18xf32>
    %9 = vector.shape_cast %8 : vector<18xf32> to vector<18x1xf32>
    %cst_3 = arith.constant 3.200000e+01 : f32
    %10 = vector.broadcast %cst_3 : f32 to vector<18x1xf32>
    %11 = arith.divf %9, %10 : vector<18x1xf32>
    %12 = vector.broadcast %4 : vector<18x1xf32> to vector<18x32xf32>
    %13 = arith.subf %0, %12 : vector<18x32xf32>
    %cst_4 = arith.constant 9.99999997E-7 : f32
    %14 = vector.broadcast %cst_4 : f32 to vector<18x1xf32>
    %15 = arith.addf %11, %14 : vector<18x1xf32>
    %16 = math.rsqrt %15 : vector<18x1xf32>
    %17 = vector.broadcast %16 : vector<18x1xf32> to vector<18x32xf32>
    %18 = arith.mulf %13, %17 : vector<18x32xf32>
    %c0_5 = arith.constant 0 : index
    %c0_6 = arith.constant 0 : index
    %19 = vector.load %arg2[%c0_5, %c0_6] : memref<1x32xf32, #tpu.memory_space<vmem>>, vector<1x32xf32>
    %20 = vector.broadcast %19 : vector<1x32xf32> to vector<18x32xf32>
    %21 = arith.mulf %18, %20 : vector<18x32xf32>
    %c0_7 = arith.constant 0 : index
    %c0_8 = arith.constant 0 : index
    %22 = vector.load %arg3[%c0_7, %c0_8] : memref<1x32xf32, #tpu.memory_space<vmem>>, vector<1x32xf32>
    %23 = vector.broadcast %22 : vector<1x32xf32> to vector<18x32xf32>
    %24 = arith.addf %21, %23 : vector<18x32xf32>
    %c0_9 = arith.constant 0 : index
    %c0_10 = arith.constant 0 : index
    %25 = vector.load %arg4[%c0_9, %c0_10] : memref<18x32xf32, #tpu.memory_space<vmem>>, vector<18x32xf32>
    tpu.vector_store %arg4[%c0_9, %c0_10], %24 {strides = array<i32>} : memref<18x32xf32, #tpu.memory_space<vmem>>, vector<18x32xf32>,
    return
  }
  func.func @transform_0(%arg0: i32) -> (i32, i32) {
    %c0_i32 = arith.constant 0 : i32
    %c0_i32_0 = arith.constant 0 : i32
    return %arg0, %c0_i32 : i32, i32
  }
  func.func @transform_1(%arg0: i32) -> (i32, i32) {
    %c0_i32 = arith.constant 0 : i32
    %c0_i32_0 = arith.constant 0 : i32
    %c0_i32_1 = arith.constant 0 : i32
    return %c0_i32, %c0_i32_0 : i32, i32
  }
  func.func @transform_2(%arg0: i32) -> (i32, i32) {
    %c0_i32 = arith.constant 0 : i32
    %c0_i32_0 = arith.constant 0 : i32
    %c0_i32_1 = arith.constant 0 : i32
    return %c0_i32, %c0_i32_0 : i32, i32
  }
  func.func @transform_3(%arg0: i32) -> (i32, i32) {
    %c0_i32 = arith.constant 0 : i32
    %c0_i32_0 = arith.constant 0 : i32
    return %arg0, %c0_i32 : i32, i32
  }
}

module attributes {stable_mosaic.version = 11 : i64} {
  func.func @_mm_kernel(%arg0: i32, %arg1: memref<18x32xf32, #tpu.memory_space<vmem>>, %arg2: memref<32x32xbf16, #tpu.memory_space<vmem>>, %arg3: memref<1x32xf32, #tpu.memory_space<vmem>>, %arg4: memref<18x32xf32, #tpu.memory_space<vmem>>) attributes {dimension_semantics = [#tpu.dimension_semantics<parallel>], iteration_bounds = array<i64: 1>, scalar_prefetch = 0 : i64, scratch_operands = 0 : i64, tpu.core_type = #tpu.core_type<tc>, window_params = [{transform_indices = @transform_0, window_bounds = array<i64: 18, 32>}, {pipeline_mode = #tpu.pipeline_mode<synchronous>, transform_indices = @transform_1, window_bounds = array<i64: 32, 32>}, {pipeline_mode = #tpu.pipeline_mode<synchronous>, transform_indices = @transform_2, window_bounds = array<i64: 1, 32>}, {transform_indices = @transform_3, window_bounds = array<i64: 18, 32>}]} {
    %c0 = arith.constant 0 : index
    %c0_0 = arith.constant 0 : index
    %0 = vector.load %arg1[%c0, %c0_0] : memref<18x32xf32, #tpu.memory_space<vmem>>, vector<18x32xf32>
    %1 = arith.truncf %0 : vector<18x32xf32> to vector<18x32xbf16>
    %c0_1 = arith.constant 0 : index
    %c0_2 = arith.constant 0 : index
    %2 = vector.load %arg2[%c0_1, %c0_2] : memref<32x32xbf16, #tpu.memory_space<vmem>>, vector<32x32xbf16>
    %cst = arith.constant dense<0.000000e+00> : vector<18x32xf32>
    %3 = tpu.matmul %1, %2, %cst {dimension_numbers = #tpu.dot_dimension_numbers<[1], [0], [0], [1], [0, 0, 1, 1], [], []>} : vector<18x32xbf16>, vector<32x32xbf16>, vector<18x32xf32> -> vector<18x32xf32>
    %c0_3 = arith.constant 0 : index
    %c0_4 = arith.constant 0 : index
    %4 = vector.load %arg3[%c0_3, %c0_4] : memref<1x32xf32, #tpu.memory_space<vmem>>, vector<1x32xf32>
    %5 = vector.broadcast %4 : vector<1x32xf32> to vector<18x32xf32>
    %6 = arith.addf %3, %5 : vector<18x32xf32>
    %c0_5 = arith.constant 0 : index
    %c0_6 = arith.constant 0 : index
    %7 = vector.load %arg4[%c0_5, %c0_6] : memref<18x32xf32, #tpu.memory_space<vmem>>, vector<18x32xf32>
    tpu.vector_store %arg4[%c0_5, %c0_6], %6 {strides = array<i32>} : memref<18x32xf32, #tpu.memory_space<vmem>>, vector<18x32xf32>,
    return
  }
  func.func @transform_0(%arg0: i32) -> (i32, i32) {
    %c0_i32 = arith.constant 0 : i32
    %c0_i32_0 = arith.constant 0 : i32
    return %arg0, %c0_i32 : i32, i32
  }
  func.func @transform_1(%arg0: i32) -> (i32, i32) {
    %c0_i32 = arith.constant 0 : i32
    %c0_i32_0 = arith.constant 0 : i32
    %c0_i32_1 = arith.constant 0 : i32
    return %c0_i32, %c0_i32_0 : i32, i32
  }
  func.func @transform_2(%arg0: i32) -> (i32, i32) {
    %c0_i32 = arith.constant 0 : i32
    %c0_i32_0 = arith.constant 0 : i32
    %c0_i32_1 = arith.constant 0 : i32
    return %c0_i32, %c0_i32_0 : i32, i32
  }
  func.func @transform_3(%arg0: i32) -> (i32, i32) {
    %c0_i32 = arith.constant 0 : i32
    %c0_i32_0 = arith.constant 0 : i32
    return %arg0, %c0_i32 : i32, i32
  }
}

module attributes {stable_mosaic.version = 11 : i64} {
  func.func @_attn_kernel(%arg0: i32, %arg1: memref<1x17x96xbf16, #tpu.memory_space<vmem>>, %arg2: memref<1x17x32xbf16, #tpu.memory_space<vmem>>) attributes {dimension_semantics = [#tpu.dimension_semantics<parallel>], iteration_bounds = array<i64: 2>, scalar_prefetch = 0 : i64, scratch_operands = 0 : i64, tpu.core_type = #tpu.core_type<tc>, window_params = [{transform_indices = @transform_0, window_bounds = array<i64: 1, 17, 96>}, {transform_indices = @transform_1, window_bounds = array<i64: 1, 17, 32>}]} {
    %c0 = arith.constant 0 : index
    %c0_0 = arith.constant 0 : index
    %c0_1 = arith.constant 0 : index
    %0 = vector.load %arg1[%c0, %c0_0, %c0_1] : memref<1x17x96xbf16, #tpu.memory_space<vmem>>, vector<1x17x96xbf16>
    %1 = vector.shape_cast %0 : vector<1x17x96xbf16> to vector<17x96xbf16>
    %2 = vector.extract_strided_slice %1 {offsets = [0, 0], sizes = [17, 8], strides = [1, 1]} : vector<17x96xbf16> to vector<17x8xbf16>
    %3 = vector.extract_strided_slice %1 {offsets = [0, 32], sizes = [17, 8], strides = [1, 1]} : vector<17x96xbf16> to vector<17x8xbf16>
    %4 = vector.extract_strided_slice %1 {offsets = [0, 64], sizes = [17, 8], strides = [1, 1]} : vector<17x96xbf16> to vector<17x8xbf16>
    "tpu.trace_start"() <{level = 10 : i32, message = "qd,kd->qk"}> : () -> ()
    %cst = arith.constant dense<0.000000e+00> : vector<17x17xf32>
    %5 = tpu.matmul %2, %3, %cst {dimension_numbers = #tpu.dot_dimension_numbers<[1], [1], [0], [0], [0, 0, 1, 0], [], []>} : vector<17x8xbf16>, vector<17x8xbf16>, vector<17x17xf32> -> vector<17x17xf32>
    "tpu.trace_stop"() : () -> ()
    %cst_2 = arith.constant 0.353553385 : f32
    %6 = vector.broadcast %cst_2 : f32 to vector<17x17xf32>
    %7 = arith.mulf %5, %6 : vector<17x17xf32>
    %cst_3 = arith.constant dense<0xFF800000> : vector<17xf32>
    %8 = vector.multi_reduction <maximumf>, %7, %cst_3 [1] : vector<17x17xf32> to vector<17xf32>
    %9 = vector.shape_cast %8 : vector<17xf32> to vector<17x1xf32>
    %10 = vector.broadcast %9 : vector<17x1xf32> to vector<17x17xf32>
    %11 = arith.subf %7, %10 : vector<17x17xf32>
    %12 = math.exp %11 : vector<17x17xf32>
    %cst_4 = arith.constant dense<0.000000e+00> : vector<17xf32>
    %13 = vector.multi_reduction <add>, %12, %cst_4 [1] : vector<17x17xf32> to vector<17xf32>
    %14 = vector.shape_cast %13 : vector<17xf32> to vector<17x1xf32>
    %15 = vector.broadcast %14 : vector<17x1xf32> to vector<17x17xf32>
    %16 = arith.divf %12, %15 : vector<17x17xf32>
    %17 = arith.truncf %16 : vector<17x17xf32> to vector<17x17xbf16>
    %cst_5 = arith.constant dense<0.000000e+00> : vector<17x8xf32>
    %18 = tpu.matmul %17, %4, %cst_5 {dimension_numbers = #tpu.dot_dimension_numbers<[1], [0], [0], [1], [0, 0, 1, 1], [], []>} : vector<17x17xbf16>, vector<17x8xbf16>, vector<17x8xf32> -> vector<17x8xf32>
    %19 = vector.extract_strided_slice %1 {offsets = [0, 8], sizes = [17, 8], strides = [1, 1]} : vector<17x96xbf16> to vector<17x8xbf16>
    %20 = vector.extract_strided_slice %1 {offsets = [0, 40], sizes = [17, 8], strides = [1, 1]} : vector<17x96xbf16> to vector<17x8xbf16>
    %21 = vector.extract_strided_slice %1 {offsets = [0, 72], sizes = [17, 8], strides = [1, 1]} : vector<17x96xbf16> to vector<17x8xbf16>
    "tpu.trace_start"() <{level = 10 : i32, message = "qd,kd->qk"}> : () -> ()
    %cst_6 = arith.constant dense<0.000000e+00> : vector<17x17xf32>
    %22 = tpu.matmul %19, %20, %cst_6 {dimension_numbers = #tpu.dot_dimension_numbers<[1], [1], [0], [0], [0, 0, 1, 0], [], []>} : vector<17x8xbf16>, vector<17x8xbf16>, vector<17x17xf32> -> vector<17x17xf32>
    "tpu.trace_stop"() : () -> ()
    %cst_7 = arith.constant 0.353553385 : f32
    %23 = vector.broadcast %cst_7 : f32 to vector<17x17xf32>
    %24 = arith.mulf %22, %23 : vector<17x17xf32>
    %cst_8 = arith.constant dense<0xFF800000> : vector<17xf32>
    %25 = vector.multi_reduction <maximumf>, %24, %cst_8 [1] : vector<17x17xf32> to vector<17xf32>
    %26 = vector.shape_cast %25 : vector<17xf32> to vector<17x1xf32>
    %27 = vector.broadcast %26 : vector<17x1xf32> to vector<17x17xf32>
    %28 = arith.subf %24, %27 : vector<17x17xf32>
    %29 = math.exp %28 : vector<17x17xf32>
    %cst_9 = arith.constant dense<0.000000e+00> : vector<17xf32>
    %30 = vector.multi_reduction <add>, %29, %cst_9 [1] : vector<17x17xf32> to vector<17xf32>
    %31 = vector.shape_cast %30 : vector<17xf32> to vector<17x1xf32>
    %32 = vector.broadcast %31 : vector<17x1xf32> to vector<17x17xf32>
    %33 = arith.divf %29, %32 : vector<17x17xf32>
    %34 = arith.truncf %33 : vector<17x17xf32> to vector<17x17xbf16>
    %cst_10 = arith.constant dense<0.000000e+00> : vector<17x8xf32>
    %35 = tpu.matmul %34, %21, %cst_10 {dimension_numbers = #tpu.dot_dimension_numbers<[1], [0], [0], [1], [0, 0, 1, 1], [], []>} : vector<17x17xbf16>, vector<17x8xbf16>, vector<17x8xf32> -> vector<17x8xf32>
    %36 = vector.extract_strided_slice %1 {offsets = [0, 16], sizes = [17, 8], strides = [1, 1]} : vector<17x96xbf16> to vector<17x8xbf16>
    %37 = vector.extract_strided_slice %1 {offsets = [0, 48], sizes = [17, 8], strides = [1, 1]} : vector<17x96xbf16> to vector<17x8xbf16>
    %38 = vector.extract_strided_slice %1 {offsets = [0, 80], sizes = [17, 8], strides = [1, 1]} : vector<17x96xbf16> to vector<17x8xbf16>
    "tpu.trace_start"() <{level = 10 : i32, message = "qd,kd->qk"}> : () -> ()
    %cst_11 = arith.constant dense<0.000000e+00> : vector<17x17xf32>
    %39 = tpu.matmul %36, %37, %cst_11 {dimension_numbers = #tpu.dot_dimension_numbers<[1], [1], [0], [0], [0, 0, 1, 0], [], []>} : vector<17x8xbf16>, vector<17x8xbf16>, vector<17x17xf32> -> vector<17x17xf32>
    "tpu.trace_stop"() : () -> ()
    %cst_12 = arith.constant 0.353553385 : f32
    %40 = vector.broadcast %cst_12 : f32 to vector<17x17xf32>
    %41 = arith.mulf %39, %40 : vector<17x17xf32>
    %cst_13 = arith.constant dense<0xFF800000> : vector<17xf32>
    %42 = vector.multi_reduction <maximumf>, %41, %cst_13 [1] : vector<17x17xf32> to vector<17xf32>
    %43 = vector.shape_cast %42 : vector<17xf32> to vector<17x1xf32>
    %44 = vector.broadcast %43 : vector<17x1xf32> to vector<17x17xf32>
    %45 = arith.subf %41, %44 : vector<17x17xf32>
    %46 = math.exp %45 : vector<17x17xf32>
    %cst_14 = arith.constant dense<0.000000e+00> : vector<17xf32>
    %47 = vector.multi_reduction <add>, %46, %cst_14 [1] : vector<17x17xf32> to vector<17xf32>
    %48 = vector.shape_cast %47 : vector<17xf32> to vector<17x1xf32>
    %49 = vector.broadcast %48 : vector<17x1xf32> to vector<17x17xf32>
    %50 = arith.divf %46, %49 : vector<17x17xf32>
    %51 = arith.truncf %50 : vector<17x17xf32> to vector<17x17xbf16>
    %cst_15 = arith.constant dense<0.000000e+00> : vector<17x8xf32>
    %52 = tpu.matmul %51, %38, %cst_15 {dimension_numbers = #tpu.dot_dimension_numbers<[1], [0], [0], [1], [0, 0, 1, 1], [], []>} : vector<17x17xbf16>, vector<17x8xbf16>, vector<17x8xf32> -> vector<17x8xf32>
    %53 = vector.extract_strided_slice %1 {offsets = [0, 24], sizes = [17, 8], strides = [1, 1]} : vector<17x96xbf16> to vector<17x8xbf16>
    %54 = vector.extract_strided_slice %1 {offsets = [0, 56], sizes = [17, 8], strides = [1, 1]} : vector<17x96xbf16> to vector<17x8xbf16>
    %55 = vector.extract_strided_slice %1 {offsets = [0, 88], sizes = [17, 8], strides = [1, 1]} : vector<17x96xbf16> to vector<17x8xbf16>
    "tpu.trace_start"() <{level = 10 : i32, message = "qd,kd->qk"}> : () -> ()
    %cst_16 = arith.constant dense<0.000000e+00> : vector<17x17xf32>
    %56 = tpu.matmul %53, %54, %cst_16 {dimension_numbers = #tpu.dot_dimension_numbers<[1], [1], [0], [0], [0, 0, 1, 0], [], []>} : vector<17x8xbf16>, vector<17x8xbf16>, vector<17x17xf32> -> vector<17x17xf32>
    "tpu.trace_stop"() : () -> ()
    %cst_17 = arith.constant 0.353553385 : f32
    %57 = vector.broadcast %cst_17 : f32 to vector<17x17xf32>
    %58 = arith.mulf %56, %57 : vector<17x17xf32>
    %cst_18 = arith.constant dense<0xFF800000> : vector<17xf32>
    %59 = vector.multi_reduction <maximumf>, %58, %cst_18 [1] : vector<17x17xf32> to vector<17xf32>
    %60 = vector.shape_cast %59 : vector<17xf32> to vector<17x1xf32>
    %61 = vector.broadcast %60 : vector<17x1xf32> to vector<17x17xf32>
    %62 = arith.subf %58, %61 : vector<17x17xf32>
    %63 = math.exp %62 : vector<17x17xf32>
    %cst_19 = arith.constant dense<0.000000e+00> : vector<17xf32>
    %64 = vector.multi_reduction <add>, %63, %cst_19 [1] : vector<17x17xf32> to vector<17xf32>
    %65 = vector.shape_cast %64 : vector<17xf32> to vector<17x1xf32>
    %66 = vector.broadcast %65 : vector<17x1xf32> to vector<17x17xf32>
    %67 = arith.divf %63, %66 : vector<17x17xf32>
    %68 = arith.truncf %67 : vector<17x17xf32> to vector<17x17xbf16>
    %cst_20 = arith.constant dense<0.000000e+00> : vector<17x8xf32>
    %69 = tpu.matmul %68, %55, %cst_20 {dimension_numbers = #tpu.dot_dimension_numbers<[1], [0], [0], [1], [0, 0, 1, 1], [], []>} : vector<17x17xbf16>, vector<17x8xbf16>, vector<17x8xf32> -> vector<17x8xf32>
    %70 = tpu.concatenate %18, %35, %52, %69 in 1 : vector<17x8xf32>, vector<17x8xf32>, vector<17x8xf32>, vector<17x8xf32> -> vector<17x32xf32>
    %71 = arith.truncf %70 : vector<17x32xf32> to vector<17x32xbf16>
    %72 = vector.shape_cast %71 : vector<17x32xbf16> to vector<1x17x32xbf16>
    %c0_21 = arith.constant 0 : index
    %c0_22 = arith.constant 0 : index
    %c0_23 = arith.constant 0 : index
    %73 = vector.load %arg2[%c0_21, %c0_22, %c0_23] : memref<1x17x32xbf16, #tpu.memory_space<vmem>>, vector<1x17x32xbf16>
    tpu.vector_store %arg2[%c0_21, %c0_22, %c0_23], %72 {strides = array<i32>} : memref<1x17x32xbf16, #tpu.memory_space<vmem>>, vector<1x17x32xbf16>,
    return
  }
  func.func @transform_0(%arg0: i32) -> (i32, i32, i32) {
    %c0_i32 = arith.constant 0 : i32
    %c0_i32_0 = arith.constant 0 : i32
    %c0_i32_1 = arith.constant 0 : i32
    return %arg0, %c0_i32, %c0_i32_0 : i32, i32, i32
  }
  func.func @transform_1(%arg0: i32) -> (i32, i32, i32) {
    %c0_i32 = arith.constant 0 : i32
    %c0_i32_0 = arith.constant 0 : i32
    %c0_i32_1 = arith.constant 0 : i32
    return %arg0, %c0_i32, %c0_i32_0 : i32, i32, i32
  }
}

module attributes {stable_mosaic.version = 11 : i64} {
  func.func @_mm_kernel(%arg0: i32, %arg1: memref<34x32xf32, #tpu.memory_space<vmem>>, %arg2: memref<32x96xbf16, #tpu.memory_space<vmem>>, %arg3: memref<1x96xf32, #tpu.memory_space<vmem>>, %arg4: memref<1x32xf32, #tpu.memory_space<vmem>>, %arg5: memref<1x32xf32, #tpu.memory_space<vmem>>, %arg6: memref<34x96xbf16, #tpu.memory_space<vmem>>) attributes {dimension_semantics = [#tpu.dimension_semantics<parallel>], iteration_bounds = array<i64: 1>, scalar_prefetch = 0 : i64, scratch_operands = 0 : i64, tpu.core_type = #tpu.core_type<tc>, window_params = [{transform_indices = @transform_0, window_bounds = array<i64: 34, 32>}, {pipeline_mode = #tpu.pipeline_mode<synchronous>, transform_indices = @transform_1, window_bounds = array<i64: 32, 96>}, {pipeline_mode = #tpu.pipeline_mode<synchronous>, transform_indices = @transform_2, window_bounds = array<i64: 1, 96>}, {pipeline_mode = #tpu.pipeline_mode<synchronous>, transform_indices = @transform_3, window_bounds = array<i64: 1, 32>}, {pipeline_mode = #tpu.pipeline_mode<synchronous>, transform_indices = @transform_4, window_bounds = array<i64: 1, 32>}, {transform_indices = @transform_5, window_bounds = array<i64: 34, 96>}]} {
    %c0 = arith.constant 0 : index
    %c0_0 = arith.constant 0 : index
    %0 = vector.load %arg1[%c0, %c0_0] : memref<34x32xf32, #tpu.memory_space<vmem>>, vector<34x32xf32>
    %cst = arith.constant dense<0.000000e+00> : vector<34xf32>
    %1 = vector.multi_reduction <add>, %0, %cst [1] : vector<34x32xf32> to vector<34xf32>
    %2 = vector.shape_cast %1 : vector<34xf32> to vector<34x1xf32>
    %cst_1 = arith.constant 3.200000e+01 : f32
    %3 = vector.broadcast %cst_1 : f32 to vector<34x1xf32>
    %4 = arith.divf %2, %3 : vector<34x1xf32>
    %5 = vector.broadcast %4 : vector<34x1xf32> to vector<34x32xf32>
    %6 = arith.subf %0, %5 : vector<34x32xf32>
    %7 = arith.mulf %6, %6 : vector<34x32xf32>
    %cst_2 = arith.constant dense<0.000000e+00> : vector<34xf32>
    %8 = vector.multi_reduction <add>, %7, %cst_2 [1] : vector<34x32xf32> to vector<34xf32>
    %9 = vector.shape_cast %8 : vector<34xf32> to vector<34x1xf32>
    %cst_3 = arith.constant 3.200000e+01 : f32
    %10 = vector.broadcast %cst_3 : f32 to vector<34x1xf32>
    %11 = arith.divf %9, %10 : vector<34x1xf32>
    %12 = vector.broadcast %4 : vector<34x1xf32> to vector<34x32xf32>
    %13 = arith.subf %0, %12 : vector<34x32xf32>
    %cst_4 = arith.constant 9.99999997E-7 : f32
    %14 = vector.broadcast %cst_4 : f32 to vector<34x1xf32>
    %15 = arith.addf %11, %14 : vector<34x1xf32>
    %16 = math.rsqrt %15 : vector<34x1xf32>
    %17 = vector.broadcast %16 : vector<34x1xf32> to vector<34x32xf32>
    %18 = arith.mulf %13, %17 : vector<34x32xf32>
    %c0_5 = arith.constant 0 : index
    %c0_6 = arith.constant 0 : index
    %19 = vector.load %arg4[%c0_5, %c0_6] : memref<1x32xf32, #tpu.memory_space<vmem>>, vector<1x32xf32>
    %20 = vector.broadcast %19 : vector<1x32xf32> to vector<34x32xf32>
    %21 = arith.mulf %18, %20 : vector<34x32xf32>
    %c0_7 = arith.constant 0 : index
    %c0_8 = arith.constant 0 : index
    %22 = vector.load %arg5[%c0_7, %c0_8] : memref<1x32xf32, #tpu.memory_space<vmem>>, vector<1x32xf32>
    %23 = vector.broadcast %22 : vector<1x32xf32> to vector<34x32xf32>
    %24 = arith.addf %21, %23 : vector<34x32xf32>
    %25 = arith.truncf %24 : vector<34x32xf32> to vector<34x32xbf16>
    %c0_9 = arith.constant 0 : index
    %c0_10 = arith.constant 0 : index
    %26 = vector.load %arg2[%c0_9, %c0_10] : memref<32x96xbf16, #tpu.memory_space<vmem>>, vector<32x96xbf16>
    %cst_11 = arith.constant dense<0.000000e+00> : vector<34x96xf32>
    %27 = tpu.matmul %25, %26, %cst_11 {dimension_numbers = #tpu.dot_dimension_numbers<[1], [0], [0], [1], [0, 0, 1, 1], [], []>} : vector<34x32xbf16>, vector<32x96xbf16>, vector<34x96xf32> -> vector<34x96xf32>
    %c0_12 = arith.constant 0 : index
    %c0_13 = arith.constant 0 : index
    %28 = vector.load %arg3[%c0_12, %c0_13] : memref<1x96xf32, #tpu.memory_space<vmem>>, vector<1x96xf32>
    %29 = vector.broadcast %28 : vector<1x96xf32> to vector<34x96xf32>
    %30 = arith.addf %27, %29 : vector<34x96xf32>
    %31 = arith.truncf %30 : vector<34x96xf32> to vector<34x96xbf16>
    %c0_14 = arith.constant 0 : index
    %c0_15 = arith.constant 0 : index
    %32 = vector.load %arg6[%c0_14, %c0_15] : memref<34x96xbf16, #tpu.memory_space<vmem>>, vector<34x96xbf16>
    tpu.vector_store %arg6[%c0_14, %c0_15], %31 {strides = array<i32>} : memref<34x96xbf16, #tpu.memory_space<vmem>>, vector<34x96xbf16>,
    return
  }
  func.func @transform_0(%arg0: i32) -> (i32, i32) {
    %c0_i32 = arith.constant 0 : i32
    %c0_i32_0 = arith.constant 0 : i32
    return %arg0, %c0_i32 : i32, i32
  }
  func.func @transform_1(%arg0: i32) -> (i32, i32) {
    %c0_i32 = arith.constant 0 : i32
    %c0_i32_0 = arith.constant 0 : i32
    %c0_i32_1 = arith.constant 0 : i32
    return %c0_i32, %c0_i32_0 : i32, i32
  }
  func.func @transform_2(%arg0: i32) -> (i32, i32) {
    %c0_i32 = arith.constant 0 : i32
    %c0_i32_0 = arith.constant 0 : i32
    %c0_i32_1 = arith.constant 0 : i32
    return %c0_i32, %c0_i32_0 : i32, i32
  }
  func.func @transform_3(%arg0: i32) -> (i32, i32) {
    %c0_i32 = arith.constant 0 : i32
    %c0_i32_0 = arith.constant 0 : i32
    %c0_i32_1 = arith.constant 0 : i32
    return %c0_i32, %c0_i32_0 : i32, i32
  }
  func.func @transform_4(%arg0: i32) -> (i32, i32) {
    %c0_i32 = arith.constant 0 : i32
    %c0_i32_0 = arith.constant 0 : i32
    %c0_i32_1 = arith.constant 0 : i32
    return %c0_i32, %c0_i32_0 : i32, i32
  }
  func.func @transform_5(%arg0: i32) -> (i32, i32) {
    %c0_i32 = arith.constant 0 : i32
    %c0_i32_0 = arith.constant 0 : i32
    return %arg0, %c0_i32 : i32, i32
  }
}

module attributes {stable_mosaic.version = 11 : i64} {
  func.func @_mm_kernel(%arg0: i32, %arg1: memref<34x32xbf16, #tpu.memory_space<vmem>>, %arg2: memref<32x32xbf16, #tpu.memory_space<vmem>>, %arg3: memref<1x32xf32, #tpu.memory_space<vmem>>, %arg4: memref<34x32xf32, #tpu.memory_space<vmem>>, %arg5: memref<34x32xf32, #tpu.memory_space<vmem>>) attributes {dimension_semantics = [#tpu.dimension_semantics<parallel>], iteration_bounds = array<i64: 1>, scalar_prefetch = 0 : i64, scratch_operands = 0 : i64, tpu.core_type = #tpu.core_type<tc>, window_params = [{transform_indices = @transform_0, window_bounds = array<i64: 34, 32>}, {pipeline_mode = #tpu.pipeline_mode<synchronous>, transform_indices = @transform_1, window_bounds = array<i64: 32, 32>}, {pipeline_mode = #tpu.pipeline_mode<synchronous>, transform_indices = @transform_2, window_bounds = array<i64: 1, 32>}, {transform_indices = @transform_3, window_bounds = array<i64: 34, 32>}, {transform_indices = @transform_4, window_bounds = array<i64: 34, 32>}]} {
    %c0 = arith.constant 0 : index
    %c0_0 = arith.constant 0 : index
    %0 = vector.load %arg1[%c0, %c0_0] : memref<34x32xbf16, #tpu.memory_space<vmem>>, vector<34x32xbf16>
    %c0_1 = arith.constant 0 : index
    %c0_2 = arith.constant 0 : index
    %1 = vector.load %arg2[%c0_1, %c0_2] : memref<32x32xbf16, #tpu.memory_space<vmem>>, vector<32x32xbf16>
    %cst = arith.constant dense<0.000000e+00> : vector<34x32xf32>
    %2 = tpu.matmul %0, %1, %cst {dimension_numbers = #tpu.dot_dimension_numbers<[1], [0], [0], [1], [0, 0, 1, 1], [], []>} : vector<34x32xbf16>, vector<32x32xbf16>, vector<34x32xf32> -> vector<34x32xf32>
    %c0_3 = arith.constant 0 : index
    %c0_4 = arith.constant 0 : index
    %3 = vector.load %arg3[%c0_3, %c0_4] : memref<1x32xf32, #tpu.memory_space<vmem>>, vector<1x32xf32>
    %4 = vector.broadcast %3 : vector<1x32xf32> to vector<34x32xf32>
    %5 = arith.addf %2, %4 : vector<34x32xf32>
    %c0_5 = arith.constant 0 : index
    %c0_6 = arith.constant 0 : index
    %6 = vector.load %arg4[%c0_5, %c0_6] : memref<34x32xf32, #tpu.memory_space<vmem>>, vector<34x32xf32>
    %7 = arith.addf %5, %6 : vector<34x32xf32>
    %c0_7 = arith.constant 0 : index
    %c0_8 = arith.constant 0 : index
    %8 = vector.load %arg5[%c0_7, %c0_8] : memref<34x32xf32, #tpu.memory_space<vmem>>, vector<34x32xf32>
    tpu.vector_store %arg5[%c0_7, %c0_8], %7 {strides = array<i32>} : memref<34x32xf32, #tpu.memory_space<vmem>>, vector<34x32xf32>,
    return
  }
  func.func @transform_0(%arg0: i32) -> (i32, i32) {
    %c0_i32 = arith.constant 0 : i32
    %c0_i32_0 = arith.constant 0 : i32
    return %arg0, %c0_i32 : i32, i32
  }
  func.func @transform_1(%arg0: i32) -> (i32, i32) {
    %c0_i32 = arith.constant 0 : i32
    %c0_i32_0 = arith.constant 0 : i32
    %c0_i32_1 = arith.constant 0 : i32
    return %c0_i32, %c0_i32_0 : i32, i32
  }
  func.func @transform_2(%arg0: i32) -> (i32, i32) {
    %c0_i32 = arith.constant 0 : i32
    %c0_i32_0 = arith.constant 0 : i32
    %c0_i32_1 = arith.constant 0 : i32
    return %c0_i32, %c0_i32_0 : i32, i32
  }
  func.func @transform_3(%arg0: i32) -> (i32, i32) {
    %c0_i32 = arith.constant 0 : i32
    %c0_i32_0 = arith.constant 0 : i32
    return %arg0, %c0_i32 : i32, i32
  }
  func.func @transform_4(%arg0: i32) -> (i32, i32) {
    %c0_i32 = arith.constant 0 : i32
    %c0_i32_0 = arith.constant 0 : i32
    return %arg0, %c0_i32 : i32, i32
  }
}

module attributes {stable_mosaic.version = 11 : i64} {
  func.func @_mm_kernel(%arg0: i32, %arg1: memref<34x32xf32, #tpu.memory_space<vmem>>, %arg2: memref<32x128xbf16, #tpu.memory_space<vmem>>, %arg3: memref<1x128xf32, #tpu.memory_space<vmem>>, %arg4: memref<1x32xf32, #tpu.memory_space<vmem>>, %arg5: memref<1x32xf32, #tpu.memory_space<vmem>>, %arg6: memref<34x128xbf16, #tpu.memory_space<vmem>>) attributes {dimension_semantics = [#tpu.dimension_semantics<parallel>], iteration_bounds = array<i64: 1>, scalar_prefetch = 0 : i64, scratch_operands = 0 : i64, tpu.core_type = #tpu.core_type<tc>, window_params = [{transform_indices = @transform_0, window_bounds = array<i64: 34, 32>}, {pipeline_mode = #tpu.pipeline_mode<synchronous>, transform_indices = @transform_1, window_bounds = array<i64: 32, 128>}, {pipeline_mode = #tpu.pipeline_mode<synchronous>, transform_indices = @transform_2, window_bounds = array<i64: 1, 128>}, {pipeline_mode = #tpu.pipeline_mode<synchronous>, transform_indices = @transform_3, window_bounds = array<i64: 1, 32>}, {pipeline_mode = #tpu.pipeline_mode<synchronous>, transform_indices = @transform_4, window_bounds = array<i64: 1, 32>}, {transform_indices = @transform_5, window_bounds = array<i64: 34, 128>}]} {
    %c0 = arith.constant 0 : index
    %c0_0 = arith.constant 0 : index
    %0 = vector.load %arg1[%c0, %c0_0] : memref<34x32xf32, #tpu.memory_space<vmem>>, vector<34x32xf32>
    %cst = arith.constant dense<0.000000e+00> : vector<34xf32>
    %1 = vector.multi_reduction <add>, %0, %cst [1] : vector<34x32xf32> to vector<34xf32>
    %2 = vector.shape_cast %1 : vector<34xf32> to vector<34x1xf32>
    %cst_1 = arith.constant 3.200000e+01 : f32
    %3 = vector.broadcast %cst_1 : f32 to vector<34x1xf32>
    %4 = arith.divf %2, %3 : vector<34x1xf32>
    %5 = vector.broadcast %4 : vector<34x1xf32> to vector<34x32xf32>
    %6 = arith.subf %0, %5 : vector<34x32xf32>
    %7 = arith.mulf %6, %6 : vector<34x32xf32>
    %cst_2 = arith.constant dense<0.000000e+00> : vector<34xf32>
    %8 = vector.multi_reduction <add>, %7, %cst_2 [1] : vector<34x32xf32> to vector<34xf32>
    %9 = vector.shape_cast %8 : vector<34xf32> to vector<34x1xf32>
    %cst_3 = arith.constant 3.200000e+01 : f32
    %10 = vector.broadcast %cst_3 : f32 to vector<34x1xf32>
    %11 = arith.divf %9, %10 : vector<34x1xf32>
    %12 = vector.broadcast %4 : vector<34x1xf32> to vector<34x32xf32>
    %13 = arith.subf %0, %12 : vector<34x32xf32>
    %cst_4 = arith.constant 9.99999997E-7 : f32
    %14 = vector.broadcast %cst_4 : f32 to vector<34x1xf32>
    %15 = arith.addf %11, %14 : vector<34x1xf32>
    %16 = math.rsqrt %15 : vector<34x1xf32>
    %17 = vector.broadcast %16 : vector<34x1xf32> to vector<34x32xf32>
    %18 = arith.mulf %13, %17 : vector<34x32xf32>
    %c0_5 = arith.constant 0 : index
    %c0_6 = arith.constant 0 : index
    %19 = vector.load %arg4[%c0_5, %c0_6] : memref<1x32xf32, #tpu.memory_space<vmem>>, vector<1x32xf32>
    %20 = vector.broadcast %19 : vector<1x32xf32> to vector<34x32xf32>
    %21 = arith.mulf %18, %20 : vector<34x32xf32>
    %c0_7 = arith.constant 0 : index
    %c0_8 = arith.constant 0 : index
    %22 = vector.load %arg5[%c0_7, %c0_8] : memref<1x32xf32, #tpu.memory_space<vmem>>, vector<1x32xf32>
    %23 = vector.broadcast %22 : vector<1x32xf32> to vector<34x32xf32>
    %24 = arith.addf %21, %23 : vector<34x32xf32>
    %25 = arith.truncf %24 : vector<34x32xf32> to vector<34x32xbf16>
    %c0_9 = arith.constant 0 : index
    %c0_10 = arith.constant 0 : index
    %26 = vector.load %arg2[%c0_9, %c0_10] : memref<32x128xbf16, #tpu.memory_space<vmem>>, vector<32x128xbf16>
    %cst_11 = arith.constant dense<0.000000e+00> : vector<34x128xf32>
    %27 = tpu.matmul %25, %26, %cst_11 {dimension_numbers = #tpu.dot_dimension_numbers<[1], [0], [0], [1], [0, 0, 1, 1], [], []>} : vector<34x32xbf16>, vector<32x128xbf16>, vector<34x128xf32> -> vector<34x128xf32>
    %c0_12 = arith.constant 0 : index
    %c0_13 = arith.constant 0 : index
    %28 = vector.load %arg3[%c0_12, %c0_13] : memref<1x128xf32, #tpu.memory_space<vmem>>, vector<1x128xf32>
    %29 = vector.broadcast %28 : vector<1x128xf32> to vector<34x128xf32>
    %30 = arith.addf %27, %29 : vector<34x128xf32>
    %31 = arith.mulf %30, %30 : vector<34x128xf32>
    %32 = arith.mulf %30, %31 : vector<34x128xf32>
    %cst_14 = arith.constant 4.471500e-02 : f32
    %33 = vector.broadcast %cst_14 : f32 to vector<34x128xf32>
    %34 = arith.mulf %33, %32 : vector<34x128xf32>
    %35 = arith.addf %30, %34 : vector<34x128xf32>
    %cst_15 = arith.constant 0.797884583 : f32
    %36 = vector.broadcast %cst_15 : f32 to vector<34x128xf32>
    %37 = arith.mulf %36, %35 : vector<34x128xf32>
    %38 = math.tanh %37 : vector<34x128xf32>
    %cst_16 = arith.constant 1.000000e+00 : f32
    %39 = vector.broadcast %cst_16 : f32 to vector<34x128xf32>
    %40 = arith.addf %39, %38 : vector<34x128xf32>
    %cst_17 = arith.constant 5.000000e-01 : f32
    %41 = vector.broadcast %cst_17 : f32 to vector<34x128xf32>
    %42 = arith.mulf %41, %40 : vector<34x128xf32>
    %43 = arith.mulf %30, %42 : vector<34x128xf32>
    %44 = arith.truncf %43 : vector<34x128xf32> to vector<34x128xbf16>
    %c0_18 = arith.constant 0 : index
    %c0_19 = arith.constant 0 : index
    %45 = vector.load %arg6[%c0_18, %c0_19] : memref<34x128xbf16, #tpu.memory_space<vmem>>, vector<34x128xbf16>
    tpu.vector_store %arg6[%c0_18, %c0_19], %44 {strides = array<i32>} : memref<34x128xbf16, #tpu.memory_space<vmem>>, vector<34x128xbf16>,
    return
  }
  func.func @transform_0(%arg0: i32) -> (i32, i32) {
    %c0_i32 = arith.constant 0 : i32
    %c0_i32_0 = arith.constant 0 : i32
    return %arg0, %c0_i32 : i32, i32
  }
  func.func @transform_1(%arg0: i32) -> (i32, i32) {
    %c0_i32 = arith.constant 0 : i32
    %c0_i32_0 = arith.constant 0 : i32
    %c0_i32_1 = arith.constant 0 : i32
    return %c0_i32, %c0_i32_0 : i32, i32
  }
  func.func @transform_2(%arg0: i32) -> (i32, i32) {
    %c0_i32 = arith.constant 0 : i32
    %c0_i32_0 = arith.constant 0 : i32
    %c0_i32_1 = arith.constant 0 : i32
    return %c0_i32, %c0_i32_0 : i32, i32
  }
  func.func @transform_3(%arg0: i32) -> (i32, i32) {
    %c0_i32 = arith.constant 0 : i32
    %c0_i32_0 = arith.constant 0 : i32
    %c0_i32_1 = arith.constant 0 : i32
    return %c0_i32, %c0_i32_0 : i32, i32
  }
  func.func @transform_4(%arg0: i32) -> (i32, i32) {
    %c0_i32 = arith.constant 0 : i32
    %c0_i32_0 = arith.constant 0 : i32
    %c0_i32_1 = arith.constant 0 : i32
    return %c0_i32, %c0_i32_0 : i32, i32
  }
  func.func @transform_5(%arg0: i32) -> (i32, i32) {
    %c0_i32 = arith.constant 0 : i32
    %c0_i32_0 = arith.constant 0 : i32
    return %arg0, %c0_i32 : i32, i32
  }
}

module attributes {stable_mosaic.version = 11 : i64} {
  func.func @_mm_kernel(%arg0: i32, %arg1: memref<34x128xbf16, #tpu.memory_space<vmem>>, %arg2: memref<128x32xbf16, #tpu.memory_space<vmem>>, %arg3: memref<1x32xf32, #tpu.memory_space<vmem>>, %arg4: memref<34x32xf32, #tpu.memory_space<vmem>>, %arg5: memref<34x32xf32, #tpu.memory_space<vmem>>) attributes {dimension_semantics = [#tpu.dimension_semantics<parallel>], iteration_bounds = array<i64: 1>, scalar_prefetch = 0 : i64, scratch_operands = 0 : i64, tpu.core_type = #tpu.core_type<tc>, window_params = [{transform_indices = @transform_0, window_bounds = array<i64: 34, 128>}, {pipeline_mode = #tpu.pipeline_mode<synchronous>, transform_indices = @transform_1, window_bounds = array<i64: 128, 32>}, {pipeline_mode = #tpu.pipeline_mode<synchronous>, transform_indices = @transform_2, window_bounds = array<i64: 1, 32>}, {transform_indices = @transform_3, window_bounds = array<i64: 34, 32>}, {transform_indices = @transform_4, window_bounds = array<i64: 34, 32>}]} {
    %c0 = arith.constant 0 : index
    %c0_0 = arith.constant 0 : index
    %0 = vector.load %arg1[%c0, %c0_0] : memref<34x128xbf16, #tpu.memory_space<vmem>>, vector<34x128xbf16>
    %c0_1 = arith.constant 0 : index
    %c0_2 = arith.constant 0 : index
    %1 = vector.load %arg2[%c0_1, %c0_2] : memref<128x32xbf16, #tpu.memory_space<vmem>>, vector<128x32xbf16>
    %cst = arith.constant dense<0.000000e+00> : vector<34x32xf32>
    %2 = tpu.matmul %0, %1, %cst {dimension_numbers = #tpu.dot_dimension_numbers<[1], [0], [0], [1], [0, 0, 1, 1], [], []>} : vector<34x128xbf16>, vector<128x32xbf16>, vector<34x32xf32> -> vector<34x32xf32>
    %c0_3 = arith.constant 0 : index
    %c0_4 = arith.constant 0 : index
    %3 = vector.load %arg3[%c0_3, %c0_4] : memref<1x32xf32, #tpu.memory_space<vmem>>, vector<1x32xf32>
    %4 = vector.broadcast %3 : vector<1x32xf32> to vector<34x32xf32>
    %5 = arith.addf %2, %4 : vector<34x32xf32>
    %c0_5 = arith.constant 0 : index
    %c0_6 = arith.constant 0 : index
    %6 = vector.load %arg4[%c0_5, %c0_6] : memref<34x32xf32, #tpu.memory_space<vmem>>, vector<34x32xf32>
    %7 = arith.addf %5, %6 : vector<34x32xf32>
    %c0_7 = arith.constant 0 : index
    %c0_8 = arith.constant 0 : index
    %8 = vector.load %arg5[%c0_7, %c0_8] : memref<34x32xf32, #tpu.memory_space<vmem>>, vector<34x32xf32>
    tpu.vector_store %arg5[%c0_7, %c0_8], %7 {strides = array<i32>} : memref<34x32xf32, #tpu.memory_space<vmem>>, vector<34x32xf32>,
    return
  }
  func.func @transform_0(%arg0: i32) -> (i32, i32) {
    %c0_i32 = arith.constant 0 : i32
    %c0_i32_0 = arith.constant 0 : i32
    return %arg0, %c0_i32 : i32, i32
  }
  func.func @transform_1(%arg0: i32) -> (i32, i32) {
    %c0_i32 = arith.constant 0 : i32
    %c0_i32_0 = arith.constant 0 : i32
    %c0_i32_1 = arith.constant 0 : i32
    return %c0_i32, %c0_i32_0 : i32, i32
  }
  func.func @transform_2(%arg0: i32) -> (i32, i32) {
    %c0_i32 = arith.constant 0 : i32
    %c0_i32_0 = arith.constant 0 : i32
    %c0_i32_1 = arith.constant 0 : i32
    return %c0_i32, %c0_i32_0 : i32, i32
  }
  func.func @transform_3(%arg0: i32) -> (i32, i32) {
    %c0_i32 = arith.constant 0 : i32
    %c0_i32_0 = arith.constant 0 : i32
    return %arg0, %c0_i32 : i32, i32
  }
  func.func @transform_4(%arg0: i32) -> (i32, i32) {
    %c0_i32 = arith.constant 0 : i32
    %c0_i32_0 = arith.constant 0 : i32
    return %arg0, %c0_i32 : i32, i32
  }
}

module attributes {stable_mosaic.version = 11 : i64} {
  func.func @_mm_kernel(%arg0: i32, %arg1: memref<34x32xf32, #tpu.memory_space<vmem>>, %arg2: memref<32x48xbf16, #tpu.memory_space<vmem>>, %arg3: memref<1x48xf32, #tpu.memory_space<vmem>>, %arg4: memref<1x32xf32, #tpu.memory_space<vmem>>, %arg5: memref<1x32xf32, #tpu.memory_space<vmem>>, %arg6: memref<34x48xf32, #tpu.memory_space<vmem>>) attributes {dimension_semantics = [#tpu.dimension_semantics<parallel>], iteration_bounds = array<i64: 1>, scalar_prefetch = 0 : i64, scratch_operands = 0 : i64, tpu.core_type = #tpu.core_type<tc>, window_params = [{transform_indices = @transform_0, window_bounds = array<i64: 34, 32>}, {pipeline_mode = #tpu.pipeline_mode<synchronous>, transform_indices = @transform_1, window_bounds = array<i64: 32, 48>}, {pipeline_mode = #tpu.pipeline_mode<synchronous>, transform_indices = @transform_2, window_bounds = array<i64: 1, 48>}, {pipeline_mode = #tpu.pipeline_mode<synchronous>, transform_indices = @transform_3, window_bounds = array<i64: 1, 32>}, {pipeline_mode = #tpu.pipeline_mode<synchronous>, transform_indices = @transform_4, window_bounds = array<i64: 1, 32>}, {transform_indices = @transform_5, window_bounds = array<i64: 34, 48>}]} {
    %c0 = arith.constant 0 : index
    %c0_0 = arith.constant 0 : index
    %0 = vector.load %arg1[%c0, %c0_0] : memref<34x32xf32, #tpu.memory_space<vmem>>, vector<34x32xf32>
    %cst = arith.constant dense<0.000000e+00> : vector<34xf32>
    %1 = vector.multi_reduction <add>, %0, %cst [1] : vector<34x32xf32> to vector<34xf32>
    %2 = vector.shape_cast %1 : vector<34xf32> to vector<34x1xf32>
    %cst_1 = arith.constant 3.200000e+01 : f32
    %3 = vector.broadcast %cst_1 : f32 to vector<34x1xf32>
    %4 = arith.divf %2, %3 : vector<34x1xf32>
    %5 = vector.broadcast %4 : vector<34x1xf32> to vector<34x32xf32>
    %6 = arith.subf %0, %5 : vector<34x32xf32>
    %7 = arith.mulf %6, %6 : vector<34x32xf32>
    %cst_2 = arith.constant dense<0.000000e+00> : vector<34xf32>
    %8 = vector.multi_reduction <add>, %7, %cst_2 [1] : vector<34x32xf32> to vector<34xf32>
    %9 = vector.shape_cast %8 : vector<34xf32> to vector<34x1xf32>
    %cst_3 = arith.constant 3.200000e+01 : f32
    %10 = vector.broadcast %cst_3 : f32 to vector<34x1xf32>
    %11 = arith.divf %9, %10 : vector<34x1xf32>
    %12 = vector.broadcast %4 : vector<34x1xf32> to vector<34x32xf32>
    %13 = arith.subf %0, %12 : vector<34x32xf32>
    %cst_4 = arith.constant 9.99999997E-7 : f32
    %14 = vector.broadcast %cst_4 : f32 to vector<34x1xf32>
    %15 = arith.addf %11, %14 : vector<34x1xf32>
    %16 = math.rsqrt %15 : vector<34x1xf32>
    %17 = vector.broadcast %16 : vector<34x1xf32> to vector<34x32xf32>
    %18 = arith.mulf %13, %17 : vector<34x32xf32>
    %c0_5 = arith.constant 0 : index
    %c0_6 = arith.constant 0 : index
    %19 = vector.load %arg4[%c0_5, %c0_6] : memref<1x32xf32, #tpu.memory_space<vmem>>, vector<1x32xf32>
    %20 = vector.broadcast %19 : vector<1x32xf32> to vector<34x32xf32>
    %21 = arith.mulf %18, %20 : vector<34x32xf32>
    %c0_7 = arith.constant 0 : index
    %c0_8 = arith.constant 0 : index
    %22 = vector.load %arg5[%c0_7, %c0_8] : memref<1x32xf32, #tpu.memory_space<vmem>>, vector<1x32xf32>
    %23 = vector.broadcast %22 : vector<1x32xf32> to vector<34x32xf32>
    %24 = arith.addf %21, %23 : vector<34x32xf32>
    %25 = arith.truncf %24 : vector<34x32xf32> to vector<34x32xbf16>
    %c0_9 = arith.constant 0 : index
    %c0_10 = arith.constant 0 : index
    %26 = vector.load %arg2[%c0_9, %c0_10] : memref<32x48xbf16, #tpu.memory_space<vmem>>, vector<32x48xbf16>
    %cst_11 = arith.constant dense<0.000000e+00> : vector<34x48xf32>
    %27 = tpu.matmul %25, %26, %cst_11 {dimension_numbers = #tpu.dot_dimension_numbers<[1], [0], [0], [1], [0, 0, 1, 1], [], []>} : vector<34x32xbf16>, vector<32x48xbf16>, vector<34x48xf32> -> vector<34x48xf32>
    %c0_12 = arith.constant 0 : index
    %c0_13 = arith.constant 0 : index
    %28 = vector.load %arg3[%c0_12, %c0_13] : memref<1x48xf32, #tpu.memory_space<vmem>>, vector<1x48xf32>
    %29 = vector.broadcast %28 : vector<1x48xf32> to vector<34x48xf32>
    %30 = arith.addf %27, %29 : vector<34x48xf32>
    %c0_14 = arith.constant 0 : index
    %c0_15 = arith.constant 0 : index
    %31 = vector.load %arg6[%c0_14, %c0_15] : memref<34x48xf32, #tpu.memory_space<vmem>>, vector<34x48xf32>
    tpu.vector_store %arg6[%c0_14, %c0_15], %30 {strides = array<i32>} : memref<34x48xf32, #tpu.memory_space<vmem>>, vector<34x48xf32>,
    return
  }
  func.func @transform_0(%arg0: i32) -> (i32, i32) {
    %c0_i32 = arith.constant 0 : i32
    %c0_i32_0 = arith.constant 0 : i32
    return %arg0, %c0_i32 : i32, i32
  }
  func.func @transform_1(%arg0: i32) -> (i32, i32) {
    %c0_i32 = arith.constant 0 : i32
    %c0_i32_0 = arith.constant 0 : i32
    %c0_i32_1 = arith.constant 0 : i32
    return %c0_i32, %c0_i32_0 : i32, i32
  }
  func.func @transform_2(%arg0: i32) -> (i32, i32) {
    %c0_i32 = arith.constant 0 : i32
    %c0_i32_0 = arith.constant 0 : i32
    %c0_i32_1 = arith.constant 0 : i32
    return %c0_i32, %c0_i32_0 : i32, i32
  }
  func.func @transform_3(%arg0: i32) -> (i32, i32) {
    %c0_i32 = arith.constant 0 : i32
    %c0_i32_0 = arith.constant 0 : i32
    %c0_i32_1 = arith.constant 0 : i32
    return %c0_i32, %c0_i32_0 : i32, i32
  }
  func.func @transform_4(%arg0: i32) -> (i32, i32) {
    %c0_i32 = arith.constant 0 : i32
    %c0_i32_0 = arith.constant 0 : i32
    %c0_i32_1 = arith.constant 0 : i32
    return %c0_i32, %c0_i32_0 : i32, i32
  }
  func.func @transform_5(%arg0: i32) -> (i32, i32) {
    %c0_i32 = arith.constant 0 : i32
    %c0_i32_0 = arith.constant 0 : i32
    return %arg0, %c0_i32 : i32, i32
  }
}

module attributes {stable_mosaic.version = 11 : i64} {
  func.func @_mm_kernel(%arg0: i32, %arg1: memref<8x128xf32, #tpu.memory_space<vmem>>, %arg2: memref<128x8xf32, #tpu.memory_space<vmem>>, %arg3: memref<1x8xf32, #tpu.memory_space<vmem>>, %arg4: memref<8x8xf32, #tpu.memory_space<vmem>>) attributes {dimension_semantics = [#tpu.dimension_semantics<parallel>], iteration_bounds = array<i64: 1>, scalar_prefetch = 0 : i64, scratch_operands = 0 : i64, tpu.core_type = #tpu.core_type<tc>, window_params = [{transform_indices = @transform_0, window_bounds = array<i64: 8, 128>}, {pipeline_mode = #tpu.pipeline_mode<synchronous>, transform_indices = @transform_1, window_bounds = array<i64: 128, 8>}, {pipeline_mode = #tpu.pipeline_mode<synchronous>, transform_indices = @transform_2, window_bounds = array<i64: 1, 8>}, {transform_indices = @transform_3, window_bounds = array<i64: 8, 8>}]} {
    %c0 = arith.constant 0 : index
    %c0_0 = arith.constant 0 : index
    %0 = vector.load %arg1[%c0, %c0_0] : memref<8x128xf32, #tpu.memory_space<vmem>>, vector<8x128xf32>
    %1 = arith.truncf %0 : vector<8x128xf32> to vector<8x128xbf16>
    %c0_1 = arith.constant 0 : index
    %c0_2 = arith.constant 0 : index
    %2 = vector.load %arg2[%c0_1, %c0_2] : memref<128x8xf32, #tpu.memory_space<vmem>>, vector<128x8xf32>
    %3 = arith.truncf %2 : vector<128x8xf32> to vector<128x8xbf16>
    %cst = arith.constant dense<0.000000e+00> : vector<8x8xf32>
    %4 = tpu.matmul %1, %3, %cst {dimension_numbers = #tpu.dot_dimension_numbers<[1], [0], [0], [1], [0, 0, 1, 1], [], []>} : vector<8x128xbf16>, vector<128x8xbf16>, vector<8x8xf32> -> vector<8x8xf32>
    %c0_3 = arith.constant 0 : index
    %c0_4 = arith.constant 0 : index
    %5 = vector.load %arg3[%c0_3, %c0_4] : memref<1x8xf32, #tpu.memory_space<vmem>>, vector<1x8xf32>
    %6 = vector.broadcast %5 : vector<1x8xf32> to vector<8x8xf32>
    %7 = arith.addf %4, %6 : vector<8x8xf32>
    %c0_5 = arith.constant 0 : index
    %c0_6 = arith.constant 0 : index
    %8 = vector.load %arg4[%c0_5, %c0_6] : memref<8x8xf32, #tpu.memory_space<vmem>>, vector<8x8xf32>
    tpu.vector_store %arg4[%c0_5, %c0_6], %7 {strides = array<i32>} : memref<8x8xf32, #tpu.memory_space<vmem>>, vector<8x8xf32>,
    return
  }
  func.func @transform_0(%arg0: i32) -> (i32, i32) {
    %c0_i32 = arith.constant 0 : i32
    %c0_i32_0 = arith.constant 0 : i32
    return %arg0, %c0_i32 : i32, i32
  }
  func.func @transform_1(%arg0: i32) -> (i32, i32) {
    %c0_i32 = arith.constant 0 : i32
    %c0_i32_0 = arith.constant 0 : i32
    %c0_i32_1 = arith.constant 0 : i32
    return %c0_i32, %c0_i32_0 : i32, i32
  }
  func.func @transform_2(%arg0: i32) -> (i32, i32) {
    %c0_i32 = arith.constant 0 : i32
    %c0_i32_0 = arith.constant 0 : i32
    %c0_i32_1 = arith.constant 0 : i32
    return %c0_i32, %c0_i32_0 : i32, i32
  }
  func.func @transform_3(%arg0: i32) -> (i32, i32) {
    %c0_i32 = arith.constant 0 : i32
    %c0_i32_0 = arith.constant 0 : i32
    return %arg0, %c0_i32 : i32, i32
  }
}

</mosaic_0001>

<llo_original>
// kernel: tpu_custom_call.1
$region0: #{tpu_custom_call.1}
  #allocation0 [shape = 'u32[]', space=smem, size = 0x4, offset = 0x4, fixed_abs, tag = 'smem constant byte address 0x4 - core index']
  #allocation1 [shape = 'u32[144,128]{1,0:T(1,128)}', space=vmem, size = 0x12000, scoped, tag = 'internal scratch']
  %s0 = inlined_call_operand.hbm [shape: f32[8,128], index: 0, kind: input, shape index: {}]
  %s1 = inlined_call_operand.hbm [shape: f32[8,128], index: 1, kind: output, shape index: {}]
  %s2 = sld [smem:[#allocation0]]
  $region41: #{tpu_custom_call.1} parent=0
    _
  %s4 = ssub.s32 1, %s2
  %s5 = scalar_select 0, %s4, %s2
  $region1: #{tpu_custom_call.1} parent=0
    #allocation2 [shape = 'u8[4096]{0}', space=vmem, size = 0x1000, scoped, tag = 'input window, operand 0, single buffered']
    #allocation3 [shape = 's32[2]{0}', space=sflag, size = 0x8, scoped, tag = 'scoped memory for tpu_custom_call.1']
    #allocation4 [shape = 's32[2]{0}', space=sflag, size = 0x8, scoped, tag = 'scoped memory for tpu_custom_call.1']
    #allocation5 [shape = 'u8[4096]{0}', space=vmem, size = 0x1000, scoped, tag = 'output window, operand 0, single buffered']
    %6 = vsyncpa [#allocation3], 0
    %7 = vsyncpa [#allocation4], 0
    loop: start=0, step=1, limit=4
    $region2: #{tpu_custom_call.1} parent=1 // loop_pre_header
      _
    $region3: #{tpu_custom_call.1} parent=1 // loop_header
      %s9 = sphi 0, %s13
      %p10 = scmp.ge.s32.totalorder %s9, 4
      %s17 = sphi 0, %s17
      %s19 = sphi 0, %s17
      %s20 = sphi 0, %s19
      %s34 = sphi 0, %s20
      %s38 = sphi 0, %s38
      %s40 = sphi 0, %s38
      %s41 = sphi 0, %s40
      %s55 = sphi 0, %s41
    $region4: #{tpu_custom_call.1} parent=1 // loop_header_branch
      %12 = sbr.rel (%p10) target = $region8
    $region5: #{tpu_custom_call.1} parent=1 // loop_body
      %s14 = ssub.s32 %s9, 1
      %s15 = ssub.s32 %s9, 2
      %s16 = sadd.s32 %s9, 1
      %s18 = sadd.s32 %s17, 1
      %p21 = scmp.eq.s32.totalorder %s9, 1
      %p22 = scmp.ne.s32.totalorder %s17, %s19
      %p23 = scmp.eq.s32.totalorder %s9, 0
      %p24 = por %p22, %p23
      %p25 = scmp.ne.s32.totalorder %s17, %s19
      %p26 = scmp.eq.s32.totalorder %s14, 1
      %p27 = por %p25, %p26
      %p28 = scmp.ne.s32.totalorder %s19, %s20
      %p29 = scmp.eq.s32.totalorder %s14, 0
      %p30 = por %p28, %p29
      %p31 = scmp.ne.s32.totalorder %s19, %s20
      %p32 = scmp.eq.s32.totalorder %s15, 1
      %p33 = por %p31, %p32
      %p35 = scmp.ne.s32.totalorder %s20, %s34
      %p36 = scmp.eq.s32.totalorder %s15, 0
      %p37 = por %p35, %p36
      %s39 = sadd.s32 %s38, 1
      %p42 = scmp.eq.s32.totalorder %s9, 1
      %p43 = scmp.ne.s32.totalorder %s38, %s40
      %p44 = scmp.eq.s32.totalorder %s9, 0
      %p45 = por %p43, %p44
      %p46 = scmp.ne.s32.totalorder %s38, %s40
      %p47 = scmp.eq.s32.totalorder %s14, 1
      %p48 = por %p46, %p47
      %p49 = scmp.ne.s32.totalorder %s40, %s41
      %p50 = scmp.eq.s32.totalorder %s14, 0
      %p51 = por %p49, %p50
      %p52 = scmp.ne.s32.totalorder %s40, %s41
      %p53 = scmp.eq.s32.totalorder %s15, 1
      %p54 = por %p52, %p53
      %p56 = scmp.ne.s32.totalorder %s41, %s55
      %p57 = scmp.eq.s32.totalorder %s15, 0
      %p58 = por %p56, %p57
      %p59 = scmp.le.s32.totalorder 1, %s9
      %p60 = scmp.lt.s32.totalorder %s9, 3
      %p61 = pnand %p59, %p60
      %p62 = pneg %p61
      // Predicated region
      $region9: #{tpu_custom_call.1} parent=5 // pred_check
        _
      $region10: #{tpu_custom_call.1} parent=5 // pred_check_branch
        %64 = sbr.rel (%p61) target = $region12
      $region11: #{tpu_custom_call.1} parent=5 // pred_region
        %s65 = ssub.s32 %s9, 1
        // Predicated region
        $region13: #{tpu_custom_call.1} parent=11 // pred_check
          %p66 = pneg %p30
        $region14: #{tpu_custom_call.1} parent=11 // pred_check_branch
          %68 = sbr.rel (%p66) target = $region16
        $region15: #{tpu_custom_call.1} parent=11 // pred_region
          %s70 = ssub.s32 128, 128
          %71 = vsyncadd [#allocation3], %s70
          %s73 = sshll.u32 [#allocation2], 4
          %s74 = int_to_ptr.vmem [resolvable:$true] %s73
          %76 = dma.hbm_to_vmem [thread:$0]  %s0, 128, %s74, [#allocation3]
        $region16: #{tpu_custom_call.1} parent=11 // pred_fallthru
          _
      $region12: #{tpu_custom_call.1} parent=5 // pred_fallthru
        _
      %p77 = scmp.lt.s32.totalorder %s9, 2
      // Predicated region
      $region17: #{tpu_custom_call.1} parent=5 // pred_check
        %p78 = pneg %p77
      $region18: #{tpu_custom_call.1} parent=5 // pred_check_branch
        %80 = sbr.rel (%p78) target = $region20
      $region19: #{tpu_custom_call.1} parent=5 // pred_region
        _
      $region20: #{tpu_custom_call.1} parent=5 // pred_fallthru
        _
      %p81 = scmp.le.s32.totalorder 1, %s9
      %p82 = scmp.lt.s32.totalorder %s9, 3
      %p83 = pnand %p81, %p82
      %p84 = pneg %p83
      // Predicated region
      $region21: #{tpu_custom_call.1} parent=5 // pred_check
        _
      $region22: #{tpu_custom_call.1} parent=5 // pred_check_branch
        %86 = sbr.rel (%p83) target = $region24
      $region23: #{tpu_custom_call.1} parent=5 // pred_region
        %s87 = ssub.s32 %s9, 1
        // Predicated region
        $region25: #{tpu_custom_call.1} parent=23 // pred_check
          %p88 = pneg %p30
        $region26: #{tpu_custom_call.1} parent=23 // pred_check_branch
          %90 = sbr.rel (%p88) target = $region28
        $region27: #{tpu_custom_call.1} parent=23 // pred_region
          %91 = dma.done [#allocation3], 128
        $region28: #{tpu_custom_call.1} parent=23 // pred_fallthru
          _
        %p92 = pneg %p30
        %p93 = pneg %p27
        %p94 = pneg %p51
        %p95 = pneg %p48
        %v96 = vld [vmem:[#allocation2] sm:$0xff]
        %v97 = vmul.f32 %v96, 2.0
        %98 = vst [vmem:[#allocation5] sm:$0xff] %v97
        // Predicated region
        $region29: #{tpu_custom_call.1} parent=23 // pred_check
          %p99 = pneg %p48
        $region30: #{tpu_custom_call.1} parent=23 // pred_check_branch
          %101 = sbr.rel (%p99) target = $region32
        $region31: #{tpu_custom_call.1} parent=23 // pred_region
          %s103 = ssub.s32 128, 128
          %104 = vsyncadd [#allocation4], %s103
          %s106 = sshll.u32 [#allocation5], 4
          %s107 = int_to_ptr.vmem [resolvable:$true] %s106
          %109 = dma.vmem_to_hbm [thread:$0]  %s107, 128, %s1, [#allocation4]
        $region32: #{tpu_custom_call.1} parent=23 // pred_fallthru
          _
        // Predicated region
        $region33: #{tpu_custom_call.1} parent=23 // pred_check
          %p110 = pneg %p48
        $region34: #{tpu_custom_call.1} parent=23 // pred_check_branch
          %112 = sbr.rel (%p110) target = $region36
        $region35: #{tpu_custom_call.1} parent=23 // pred_region
          %113 = dma.done [#allocation4], 128
        $region36: #{tpu_custom_call.1} parent=23 // pred_fallthru
          _
      $region24: #{tpu_custom_call.1} parent=5 // pred_fallthru
        _
      %p114 = scmp.le.s32.totalorder 2, %s9
      // Predicated region
      $region37: #{tpu_custom_call.1} parent=5 // pred_check
        %p115 = pneg %p114
      $region38: #{tpu_custom_call.1} parent=5 // pred_check_branch
        %117 = sbr.rel (%p115) target = $region40
      $region39: #{tpu_custom_call.1} parent=5 // pred_region
        %s118 = ssub.s32 %s9, 2
      $region40: #{tpu_custom_call.1} parent=5 // pred_fallthru
        _
    $region6: #{tpu_custom_call.1} parent=1 // loop_footer
      %s13 = sadd.s32 1, %s9
    $region7: #{tpu_custom_call.1} parent=1 // loop_footer_branch
      %8 = sbr.rel target = $region3
    $region8: #{tpu_custom_call.1} parent=1 // loop_exit
      _
    %119 = vsyncpa [#allocation3], 1
    %s120 = scalar_lea.sflag [#allocation3], 1
    %121 = vsyncpa %s120, 1
    %122 = vsyncpa [#allocation4], 1
    %s123 = scalar_lea.sflag [#allocation4], 1
    %124 = vsyncpa %s123, 1

// kernel: _lambda_.27
$region0: #{_lambda_.27}
  #allocation0 [shape = 'u32[]', space=smem, size = 0x4, offset = 0x4, fixed_abs, tag = 'smem constant byte address 0x4 - core index']
  #allocation1 [shape = 'u32[144,128]{1,0:T(1,128)}', space=vmem, size = 0x12000, scoped, tag = 'internal scratch']
  %s0 = inlined_call_operand.vmem [shape: f32[32,48], index: 0, kind: input, shape index: {}]
  %s1 = inlined_call_operand.vmem [shape: bf16[48,32], index: 1, kind: input, shape index: {}]
  %s2 = inlined_call_operand.vmem [shape: f32[1,32], index: 2, kind: input, shape index: {}]
  %s3 = inlined_call_operand.vmem [shape: f32[32,32], index: 3, kind: output, shape index: {}]
  %s4 = sld [smem:[#allocation0]]
  $region45: #{_lambda_.27} parent=0
    _
  %s6 = ssub.s32 1, %s4
  %s7 = scalar_select 0, %s6, %s4
  loop: start=0, step=1, limit=4
  $region2: #{_lambda_.27} parent=0 // loop_pre_header
    _
  $region3: #{_lambda_.27} parent=0 // loop_header
    %s9 = sphi 0, %s13
    %p10 = scmp.ge.s32.totalorder %s9, 4
    %s19 = sphi 0, %s21
    %s22 = sphi 0, %s19
    %s23 = sphi 0, %s22
    %s39 = sphi 0, %s23
    %s43 = sphi 0, %s43
    %s45 = sphi 0, %s43
    %s46 = sphi 0, %s45
    %s60 = sphi 0, %s46
    %s64 = sphi 0, %s64
    %s66 = sphi 0, %s64
    %s67 = sphi 0, %s66
    %s81 = sphi 0, %s67
    %s87 = sphi 0, %s89
    %s90 = sphi 0, %s87
    %s91 = sphi 0, %s90
    %s107 = sphi 0, %s91
  $region4: #{_lambda_.27} parent=0 // loop_header_branch
    %12 = sbr.rel (%p10) target = $region8
  $region5: #{_lambda_.27} parent=0 // loop_body
    %s14 = ssub.s32 %s9, 1
    %s15 = ssub.s32 %s9, 2
    %s16 = sadd.s32 %s9, 1
    %s17 = ssub.s32 %s9, %s16
    %p18 = scmp.eq.s32.totalorder %s17, 0
    %s20 = sadd.s32 %s19, 1
    %s21 = scalar_select %p18, %s19, %s20
    %p24 = pneg %p18
    %p25 = scmp.eq.s32.totalorder %s9, 1
    %p26 = por %p24, %p25
    %p27 = scmp.ne.s32.totalorder %s19, %s22
    %p28 = scmp.eq.s32.totalorder %s9, 0
    %p29 = por %p27, %p28
    %p30 = scmp.ne.s32.totalorder %s19, %s22
    %p31 = scmp.eq.s32.totalorder %s14, 1
    %p32 = por %p30, %p31
    %p33 = scmp.ne.s32.totalorder %s22, %s23
    %p34 = scmp.eq.s32.totalorder %s14, 0
    %p35 = por %p33, %p34
    %p36 = scmp.ne.s32.totalorder %s22, %s23
    %p37 = scmp.eq.s32.totalorder %s15, 1
    %p38 = por %p36, %p37
    %p40 = scmp.ne.s32.totalorder %s23, %s39
    %p41 = scmp.eq.s32.totalorder %s15, 0
    %p42 = por %p40, %p41
    %s44 = sadd.s32 %s43, 1
    %p47 = scmp.eq.s32.totalorder %s9, 1
    %p48 = scmp.ne.s32.totalorder %s43, %s45
    %p49 = scmp.eq.s32.totalorder %s9, 0
    %p50 = por %p48, %p49
    %p51 = scmp.ne.s32.totalorder %s43, %s45
    %p52 = scmp.eq.s32.totalorder %s14, 1
    %p53 = por %p51, %p52
    %p54 = scmp.ne.s32.totalorder %s45, %s46
    %p55 = scmp.eq.s32.totalorder %s14, 0
    %p56 = por %p54, %p55
    %p57 = scmp.ne.s32.totalorder %s45, %s46
    %p58 = scmp.eq.s32.totalorder %s15, 1
    %p59 = por %p57, %p58
    %p61 = scmp.ne.s32.totalorder %s46, %s60
    %p62 = scmp.eq.s32.totalorder %s15, 0
    %p63 = por %p61, %p62
    %s65 = sadd.s32 %s64, 1
    %p68 = scmp.eq.s32.totalorder %s9, 1
    %p69 = scmp.ne.s32.totalorder %s64, %s66
    %p70 = scmp.eq.s32.totalorder %s9, 0
    %p71 = por %p69, %p70
    %p72 = scmp.ne.s32.totalorder %s64, %s66
    %p73 = scmp.eq.s32.totalorder %s14, 1
    %p74 = por %p72, %p73
    %p75 = scmp.ne.s32.totalorder %s66, %s67
    %p76 = scmp.eq.s32.totalorder %s14, 0
    %p77 = por %p75, %p76
    %p78 = scmp.ne.s32.totalorder %s66, %s67
    %p79 = scmp.eq.s32.totalorder %s15, 1
    %p80 = por %p78, %p79
    %p82 = scmp.ne.s32.totalorder %s67, %s81
    %p83 = scmp.eq.s32.totalorder %s15, 0
    %p84 = por %p82, %p83
    %s85 = ssub.s32 %s9, %s16
    %p86 = scmp.eq.s32.totalorder %s85, 0
    %s88 = sadd.s32 %s87, 1
    %s89 = scalar_select %p86, %s87, %s88
    %p92 = pneg %p86
    %p93 = scmp.eq.s32.totalorder %s9, 1
    %p94 = por %p92, %p93
    %p95 = scmp.ne.s32.totalorder %s87, %s90
    %p96 = scmp.eq.s32.totalorder %s9, 0
    %p97 = por %p95, %p96
    %p98 = scmp.ne.s32.totalorder %s87, %s90
    %p99 = scmp.eq.s32.totalorder %s14, 1
    %p100 = por %p98, %p99
    %p101 = scmp.ne.s32.totalorder %s90, %s91
    %p102 = scmp.eq.s32.totalorder %s14, 0
    %p103 = por %p101, %p102
    %p104 = scmp.ne.s32.totalorder %s90, %s91
    %p105 = scmp.eq.s32.totalorder %s15, 1
    %p106 = por %p104, %p105
    %p108 = scmp.ne.s32.totalorder %s91, %s107
    %p109 = scmp.eq.s32.totalorder %s15, 0
    %p110 = por %p108, %p109
    %p111 = scmp.le.s32.totalorder 1, %s9
    %p112 = scmp.lt.s32.totalorder %s9, 3
    %p113 = pnand %p111, %p112
    %p114 = pneg %p113
    // Predicated region
    $region9: #{_lambda_.27} parent=5 // pred_check
      _
    $region10: #{_lambda_.27} parent=5 // pred_check_branch
      %116 = sbr.rel (%p113) target = $region12
    $region11: #{_lambda_.27} parent=5 // pred_region
      %s117 = ssub.s32 %s9, 1
      // Predicated region
      $region13: #{_lambda_.27} parent=11 // pred_check
        %p118 = pneg %p56
      $region14: #{_lambda_.27} parent=11 // pred_check_branch
        %120 = sbr.rel (%p118) target = $region16
      $region15: #{_lambda_.27} parent=11 // pred_region
        _
      $region16: #{_lambda_.27} parent=11 // pred_fallthru
        _
      // Predicated region
      $region17: #{_lambda_.27} parent=11 // pred_check
        %p121 = pneg %p77
      $region18: #{_lambda_.27} parent=11 // pred_check_branch
        %123 = sbr.rel (%p121) target = $region20
      $region19: #{_lambda_.27} parent=11 // pred_region
        _
      $region20: #{_lambda_.27} parent=11 // pred_fallthru
        _
    $region12: #{_lambda_.27} parent=5 // pred_fallthru
      _
    %p124 = scmp.lt.s32.totalorder %s9, 2
    // Predicated region
    $region21: #{_lambda_.27} parent=5 // pred_check
      %p125 = pneg %p124
    $region22: #{_lambda_.27} parent=5 // pred_check_branch
      %127 = sbr.rel (%p125) target = $region24
    $region23: #{_lambda_.27} parent=5 // pred_region
      // Predicated region
      $region25: #{_lambda_.27} parent=23 // pred_check
        %p128 = pneg %p29
      $region26: #{_lambda_.27} parent=23 // pred_check_branch
        %130 = sbr.rel (%p128) target = $region28
      $region27: #{_lambda_.27} parent=23 // pred_region
        %s131 = smul.u32 2, %s9
        %p132 = scmp.lt.s32.totalorder %s131, 3
        %s133 = scalar_select %p132, %s131, 3
        %s134 = smul.addr %s133, 8
        %s135 = scalar_lea.vmem %s0, %s134
        %s136 = smul.u32 2, %s9
      $region28: #{_lambda_.27} parent=23 // pred_fallthru
        _
    $region24: #{_lambda_.27} parent=5 // pred_fallthru
      _
    %p137 = scmp.le.s32.totalorder 1, %s9
    %p138 = scmp.lt.s32.totalorder %s9, 3
    %p139 = pnand %p137, %p138
    %p140 = pneg %p139
    // Predicated region
    $region29: #{_lambda_.27} parent=5 // pred_check
      _
    $region30: #{_lambda_.27} parent=5 // pred_check_branch
      %142 = sbr.rel (%p139) target = $region32
    $region31: #{_lambda_.27} parent=5 // pred_region
      %s143 = ssub.s32 %s9, 1
      %s144 = smul.u32 2, %s14
      %p145 = scmp.lt.s32.totalorder %s144, 3
      %s146 = scalar_select %p145, %s144, 3
      %s147 = smul.addr %s146, 8
      %s148 = scalar_lea.vmem %s0, %s147
      %p149 = pneg %p35
      %p150 = pneg %p32
      %p151 = pneg %p56
      %p152 = pneg %p53
      %p153 = pneg %p77
      %p154 = pneg %p74
      %p155 = pneg %p103
      %p156 = pneg %p100
      %s157 = smul.u32 2, %s14
      %p158 = scmp.lt.s32.totalorder %s157, 3
      %s159 = scalar_select %p158, %s157, 3
      %s160 = smul.addr %s159, 8
      %s161 = scalar_lea.vmem %s3, %s160
      %s162 = smul.u32 2, %s14
      %p163 = scmp.lt.s32.totalorder %s162, 3
      %s164 = scalar_select %p163, %s162, 3
      %s165 = smul.addr %s164, 8
      %s166 = scalar_lea.vmem %s0, %s165
      %s167 = smul.u32 2, %s14
      %s168 = smul.u32 2, %s14
      %p169 = scmp.lt.s32.totalorder %s168, 3
      %s170 = scalar_select %p169, %s168, 3
      %s171 = smul.addr %s170, 8
      %s172 = scalar_lea.vmem %s3, %s171
      %s173 = smul.u32 2, %s14
      %v175 = vld [vmem:[%s166] sm:$0xff]
      %v176 = vld [vmem:[%s166 + $0x8] sm:$0xff]
      %v177 = vpack.c.bf16 %v176, %v175
      %v178 = vld [vmem:[%s1] sm:$0xf]
      %v179 = vld [vmem:[%s1 + $0x4] sm:$0xf]
      %v180 = vld [vmem:[%s1 + $0x8] sm:$0xf]
      %v181 = vld [vmem:[%s1 + $0xc] sm:$0xf]
      %v182 = vld [vmem:[%s1 + $0x10] sm:$0xf]
      %v183 = vld [vmem:[%s1 + $0x14] sm:$0xf]
      %v184 = vld [vmem:[%s2] sm:$0x1]
      %v186 = vlaneseq
      %v187 = vshrl.u32 %v186, 7
      %v188 = vsub.s32 0, %v187
      %v189 = vrot.slane %v184, %v188
      %v197 = vunpack.c.l.b16 %v178
      %v198 = vunpack.c.l.b16 %v179
      %v199 = vunpack.c.l.b16 %v180
      %v200 = vunpack.c.l.b16 %v181
      %v201 = vunpack.c.l.b16 %v182
      %v202 = vunpack.c.l.b16 %v183
      %v203 = vpack.c.b16 %v198, %v197
      %v204 = vpack.c.b16 %v200, %v199
      %v205 = vpack.c.b16 %v202, %v201
      %vm209 = vcmask 392192
      %v211 = vsel %vm209, %v177, 0
      %213 = vmatprep.subr.bf16.mxu0 0
      %214 = vmatpush1.bf16.msra.mxu0 %v203
      %215 = vmatprep.subr.bf16.mxu0 0
      %216 = vmatpush1.bf16.msra.mxu0 %v204
      %217 = vmatprep.subr.bf16.mxu0 0
      %218 = vmatpush1.bf16.msra.mxu0 %v205
      %219 = vmatprep.subr.bf16.mxu0 0
      %220 = vmatpush1.bf16.msra.mxu0 0
      %221 = vmatprep.subr.bf16.mxu0 0
      %222 = vmatpush1.bf16.msra.mxu0 0
      %223 = vmatprep.subr.bf16.mxu0 0
      %224 = vmatpush1.bf16.msra.mxu0 0
      %225 = vmatprep.subr.bf16.mxu0 0
      %226 = vmatpush1.bf16.msra.mxu0 0
      %227 = vmatprep.subr.bf16.mxu0 0
      %228 = vmatpush1.bf16.msra.mxu0 0
      %229 = vmatprep.subr.bf16.mxu0 0
      %230 = vmatpush1.bf16.msra.mxu0 0
      %231 = vmatprep.subr.bf16.mxu0 0
      %232 = vmatpush1.bf16.msra.mxu0 0
      %233 = vmatprep.subr.bf16.mxu0 0
      %234 = vmatpush1.bf16.msra.mxu0 0
      %235 = vmatprep.subr.bf16.mxu0 0
      %236 = vmatpush1.bf16.msra.mxu0 0
      %237 = vmatprep.subr.bf16.mxu0 0
      %238 = vmatpush1.bf16.msra.mxu0 0
      %239 = vmatprep.subr.bf16.mxu0 0
      %240 = vmatpush1.bf16.msra.mxu0 0
      %241 = vmatprep.subr.bf16.mxu0 0
      %242 = vmatpush1.bf16.msra.mxu0 0
      %243 = vmatprep.subr.bf16.mxu0 0
      %244 = vmatpush1.bf16.msra.mxu0 0
      %245 = vmatprep.mubr.bf16.mxu0 0
      %246 = vmatmul.mubr.bf16.gmra.mrb[0].mxu0 %v211
      %v247 = vpop.f32.mrb[0].mxu0
      %v248 = vadd.f32 %v189, %v247
      %v249 = vpop.f32.mrb[0].mxu0
      %v250 = vpop.f32.mrb[0].mxu0
      %v251 = vadd.f32 %v189, %v250
      %v252 = vpop.f32.mrb[0].mxu0
      %253 = vdwg.mxu0
      %vm254 = vcmask 261120
      %255 = vst.msk [vmem:[%s172] sm:$0xff] %vm254, %v248
      %256 = vst.msk [vmem:[%s172 + $0x8] sm:$0xff] %vm254, %v251
      %s257 = smul.u32 2, %s14
      %p258 = scmp.lt.s32.totalorder %s257, 3
      %s259 = scalar_select %p258, %s257, 3
      %s260 = smul.addr %s259, 8
      %s261 = scalar_lea.vmem %s3, %s260
      // Predicated region
      $region33: #{_lambda_.27} parent=31 // pred_check
        %p262 = pneg %p100
      $region34: #{_lambda_.27} parent=31 // pred_check_branch
        %264 = sbr.rel (%p262) target = $region36
      $region35: #{_lambda_.27} parent=31 // pred_region
        %s265 = smul.u32 2, %s14
      $region36: #{_lambda_.27} parent=31 // pred_fallthru
        _
    $region32: #{_lambda_.27} parent=5 // pred_fallthru
      _
    %p266 = scmp.le.s32.totalorder 2, %s9
    // Predicated region
    $region37: #{_lambda_.27} parent=5 // pred_check
      %p267 = pneg %p266
    $region38: #{_lambda_.27} parent=5 // pred_check_branch
      %269 = sbr.rel (%p267) target = $region40
    $region39: #{_lambda_.27} parent=5 // pred_region
      %s270 = ssub.s32 %s9, 2
      // Predicated region
      $region41: #{_lambda_.27} parent=39 // pred_check
        %p271 = pneg %p106
      $region42: #{_lambda_.27} parent=39 // pred_check_branch
        %273 = sbr.rel (%p271) target = $region44
      $region43: #{_lambda_.27} parent=39 // pred_region
        %s274 = smul.u32 2, %s15
        %p275 = scmp.lt.s32.totalorder %s274, 3
        %s276 = scalar_select %p275, %s274, 3
        %s277 = smul.addr %s276, 8
        %s278 = scalar_lea.vmem %s3, %s277
      $region44: #{_lambda_.27} parent=39 // pred_fallthru
        _
    $region40: #{_lambda_.27} parent=5 // pred_fallthru
      _
  $region6: #{_lambda_.27} parent=0 // loop_footer
    %s13 = sadd.s32 1, %s9
  $region7: #{_lambda_.27} parent=0 // loop_footer_branch
    %8 = sbr.rel target = $region3
  $region8: #{_lambda_.27} parent=0 // loop_exit
    _

// kernel: _lambda_.26
$region0: #{_lambda_.26}
  #allocation0 [shape = 'u32[]', space=smem, size = 0x4, offset = 0x4, fixed_abs, tag = 'smem constant byte address 0x4 - core index']
  #allocation1 [shape = 'u32[144,128]{1,0:T(1,128)}', space=vmem, size = 0x12000, scoped, tag = 'internal scratch']
  %s0 = inlined_call_operand.vmem [shape: f32[128,4], index: 0, kind: input, shape index: {}]
  %s1 = inlined_call_operand.vmem [shape: bf16[4,8], index: 1, kind: input, shape index: {}]
  %s2 = inlined_call_operand.vmem [shape: f32[1,8], index: 2, kind: input, shape index: {}]
  %s3 = inlined_call_operand.vmem [shape: f32[128,8], index: 3, kind: output, shape index: {}]
  %s4 = sld [smem:[#allocation0]]
  $region45: #{_lambda_.26} parent=0
    _
  %s6 = ssub.s32 1, %s4
  %s7 = scalar_select 0, %s6, %s4
  loop: start=0, step=1, limit=4
  $region2: #{_lambda_.26} parent=0 // loop_pre_header
    _
  $region3: #{_lambda_.26} parent=0 // loop_header
    %s9 = sphi 0, %s13
    %p10 = scmp.ge.s32.totalorder %s9, 4
    %s19 = sphi 0, %s21
    %s22 = sphi 0, %s19
    %s23 = sphi 0, %s22
    %s39 = sphi 0, %s23
    %s43 = sphi 0, %s43
    %s45 = sphi 0, %s43
    %s46 = sphi 0, %s45
    %s60 = sphi 0, %s46
    %s64 = sphi 0, %s64
    %s66 = sphi 0, %s64
    %s67 = sphi 0, %s66
    %s81 = sphi 0, %s67
    %s87 = sphi 0, %s89
    %s90 = sphi 0, %s87
    %s91 = sphi 0, %s90
    %s107 = sphi 0, %s91
  $region4: #{_lambda_.26} parent=0 // loop_header_branch
    %12 = sbr.rel (%p10) target = $region8
  $region5: #{_lambda_.26} parent=0 // loop_body
    %s14 = ssub.s32 %s9, 1
    %s15 = ssub.s32 %s9, 2
    %s16 = sadd.s32 %s9, 1
    %s17 = ssub.s32 %s9, %s16
    %p18 = scmp.eq.s32.totalorder %s17, 0
    %s20 = sadd.s32 %s19, 1
    %s21 = scalar_select %p18, %s19, %s20
    %p24 = pneg %p18
    %p25 = scmp.eq.s32.totalorder %s9, 1
    %p26 = por %p24, %p25
    %p27 = scmp.ne.s32.totalorder %s19, %s22
    %p28 = scmp.eq.s32.totalorder %s9, 0
    %p29 = por %p27, %p28
    %p30 = scmp.ne.s32.totalorder %s19, %s22
    %p31 = scmp.eq.s32.totalorder %s14, 1
    %p32 = por %p30, %p31
    %p33 = scmp.ne.s32.totalorder %s22, %s23
    %p34 = scmp.eq.s32.totalorder %s14, 0
    %p35 = por %p33, %p34
    %p36 = scmp.ne.s32.totalorder %s22, %s23
    %p37 = scmp.eq.s32.totalorder %s15, 1
    %p38 = por %p36, %p37
    %p40 = scmp.ne.s32.totalorder %s23, %s39
    %p41 = scmp.eq.s32.totalorder %s15, 0
    %p42 = por %p40, %p41
    %s44 = sadd.s32 %s43, 1
    %p47 = scmp.eq.s32.totalorder %s9, 1
    %p48 = scmp.ne.s32.totalorder %s43, %s45
    %p49 = scmp.eq.s32.totalorder %s9, 0
    %p50 = por %p48, %p49
    %p51 = scmp.ne.s32.totalorder %s43, %s45
    %p52 = scmp.eq.s32.totalorder %s14, 1
    %p53 = por %p51, %p52
    %p54 = scmp.ne.s32.totalorder %s45, %s46
    %p55 = scmp.eq.s32.totalorder %s14, 0
    %p56 = por %p54, %p55
    %p57 = scmp.ne.s32.totalorder %s45, %s46
    %p58 = scmp.eq.s32.totalorder %s15, 1
    %p59 = por %p57, %p58
    %p61 = scmp.ne.s32.totalorder %s46, %s60
    %p62 = scmp.eq.s32.totalorder %s15, 0
    %p63 = por %p61, %p62
    %s65 = sadd.s32 %s64, 1
    %p68 = scmp.eq.s32.totalorder %s9, 1
    %p69 = scmp.ne.s32.totalorder %s64, %s66
    %p70 = scmp.eq.s32.totalorder %s9, 0
    %p71 = por %p69, %p70
    %p72 = scmp.ne.s32.totalorder %s64, %s66
    %p73 = scmp.eq.s32.totalorder %s14, 1
    %p74 = por %p72, %p73
    %p75 = scmp.ne.s32.totalorder %s66, %s67
    %p76 = scmp.eq.s32.totalorder %s14, 0
    %p77 = por %p75, %p76
    %p78 = scmp.ne.s32.totalorder %s66, %s67
    %p79 = scmp.eq.s32.totalorder %s15, 1
    %p80 = por %p78, %p79
    %p82 = scmp.ne.s32.totalorder %s67, %s81
    %p83 = scmp.eq.s32.totalorder %s15, 0
    %p84 = por %p82, %p83
    %s85 = ssub.s32 %s9, %s16
    %p86 = scmp.eq.s32.totalorder %s85, 0
    %s88 = sadd.s32 %s87, 1
    %s89 = scalar_select %p86, %s87, %s88
    %p92 = pneg %p86
    %p93 = scmp.eq.s32.totalorder %s9, 1
    %p94 = por %p92, %p93
    %p95 = scmp.ne.s32.totalorder %s87, %s90
    %p96 = scmp.eq.s32.totalorder %s9, 0
    %p97 = por %p95, %p96
    %p98 = scmp.ne.s32.totalorder %s87, %s90
    %p99 = scmp.eq.s32.totalorder %s14, 1
    %p100 = por %p98, %p99
    %p101 = scmp.ne.s32.totalorder %s90, %s91
    %p102 = scmp.eq.s32.totalorder %s14, 0
    %p103 = por %p101, %p102
    %p104 = scmp.ne.s32.totalorder %s90, %s91
    %p105 = scmp.eq.s32.totalorder %s15, 1
    %p106 = por %p104, %p105
    %p108 = scmp.ne.s32.totalorder %s91, %s107
    %p109 = scmp.eq.s32.totalorder %s15, 0
    %p110 = por %p108, %p109
    %p111 = scmp.le.s32.totalorder 1, %s9
    %p112 = scmp.lt.s32.totalorder %s9, 3
    %p113 = pnand %p111, %p112
    %p114 = pneg %p113
    // Predicated region
    $region9: #{_lambda_.26} parent=5 // pred_check
      _
    $region10: #{_lambda_.26} parent=5 // pred_check_branch
      %116 = sbr.rel (%p113) target = $region12
    $region11: #{_lambda_.26} parent=5 // pred_region
      %s117 = ssub.s32 %s9, 1
      // Predicated region
      $region13: #{_lambda_.26} parent=11 // pred_check
        %p118 = pneg %p56
      $region14: #{_lambda_.26} parent=11 // pred_check_branch
        %120 = sbr.rel (%p118) target = $region16
      $region15: #{_lambda_.26} parent=11 // pred_region
        _
      $region16: #{_lambda_.26} parent=11 // pred_fallthru
        _
      // Predicated region
      $region17: #{_lambda_.26} parent=11 // pred_check
        %p121 = pneg %p77
      $region18: #{_lambda_.26} parent=11 // pred_check_branch
        %123 = sbr.rel (%p121) target = $region20
      $region19: #{_lambda_.26} parent=11 // pred_region
        _
      $region20: #{_lambda_.26} parent=11 // pred_fallthru
        _
    $region12: #{_lambda_.26} parent=5 // pred_fallthru
      _
    %p124 = scmp.lt.s32.totalorder %s9, 2
    // Predicated region
    $region21: #{_lambda_.26} parent=5 // pred_check
      %p125 = pneg %p124
    $region22: #{_lambda_.26} parent=5 // pred_check_branch
      %127 = sbr.rel (%p125) target = $region24
    $region23: #{_lambda_.26} parent=5 // pred_region
      // Predicated region
      $region25: #{_lambda_.26} parent=23 // pred_check
        %p128 = pneg %p29
      $region26: #{_lambda_.26} parent=23 // pred_check_branch
        %130 = sbr.rel (%p128) target = $region28
      $region27: #{_lambda_.26} parent=23 // pred_region
        %s131 = smul.u32 8, %s9
        %p132 = scmp.lt.s32.totalorder %s131, 15
        %s133 = scalar_select %p132, %s131, 15
        %s134 = smul.addr %s133, 8
        %s135 = scalar_lea.vmem %s0, %s134
        %s136 = smul.u32 8, %s9
      $region28: #{_lambda_.26} parent=23 // pred_fallthru
        _
    $region24: #{_lambda_.26} parent=5 // pred_fallthru
      _
    %p137 = scmp.le.s32.totalorder 1, %s9
    %p138 = scmp.lt.s32.totalorder %s9, 3
    %p139 = pnand %p137, %p138
    %p140 = pneg %p139
    // Predicated region
    $region29: #{_lambda_.26} parent=5 // pred_check
      _
    $region30: #{_lambda_.26} parent=5 // pred_check_branch
      %142 = sbr.rel (%p139) target = $region32
    $region31: #{_lambda_.26} parent=5 // pred_region
      %s143 = ssub.s32 %s9, 1
      %s144 = smul.u32 8, %s14
      %p145 = scmp.lt.s32.totalorder %s144, 15
      %s146 = scalar_select %p145, %s144, 15
      %s147 = smul.addr %s146, 8
      %s148 = scalar_lea.vmem %s0, %s147
      %p149 = pneg %p35
      %p150 = pneg %p32
      %p151 = pneg %p56
      %p152 = pneg %p53
      %p153 = pneg %p77
      %p154 = pneg %p74
      %p155 = pneg %p103
      %p156 = pneg %p100
      %s157 = smul.u32 8, %s14
      %p158 = scmp.lt.s32.totalorder %s157, 15
      %s159 = scalar_select %p158, %s157, 15
      %s160 = smul.addr %s159, 8
      %s161 = scalar_lea.vmem %s3, %s160
      %s162 = smul.u32 8, %s14
      %p163 = scmp.lt.s32.totalorder %s162, 15
      %s164 = scalar_select %p163, %s162, 15
      %s165 = smul.addr %s164, 8
      %s166 = scalar_lea.vmem %s0, %s165
      %s167 = smul.u32 8, %s14
      %s168 = smul.u32 8, %s14
      %p169 = scmp.lt.s32.totalorder %s168, 15
      %s170 = scalar_select %p169, %s168, 15
      %s171 = smul.addr %s170, 8
      %s172 = scalar_lea.vmem %s3, %s171
      %s173 = smul.u32 8, %s14
      %v175 = vld [vmem:[%s166] sm:$0xff]
      %v176 = vld [vmem:[%s166 + $0x8] sm:$0xff]
      %v177 = vld [vmem:[%s166 + $0x10] sm:$0xff]
      %v178 = vld [vmem:[%s166 + $0x18] sm:$0xff]
      %v179 = vld [vmem:[%s166 + $0x20] sm:$0xff]
      %v180 = vld [vmem:[%s166 + $0x28] sm:$0xff]
      %v181 = vld [vmem:[%s166 + $0x30] sm:$0xff]
      %v182 = vld [vmem:[%s166 + $0x38] sm:$0xff]
      %v183 = vpack.c.bf16 %v176, %v175
      %v184 = vpack.c.bf16 %v178, %v177
      %v185 = vpack.c.bf16 %v180, %v179
      %v186 = vpack.c.bf16 %v182, %v181
      %v187 = vld [vmem:[%s1] sm:$0x3]
      %v188 = vld [vmem:[%s2] sm:$0x1]
      %v190 = vlaneseq
      %v191 = vshrl.u32 %v190, 7
      %v192 = vsub.s32 0, %v191
      %v193 = vrot.slane %v188, %v192
      %vm195 = vcmask 31744
      %v197 = vsel %vm195, %v183, 0
      %v200 = vsel %vm195, %v184, 0
      %v203 = vsel %vm195, %v185, 0
      %v206 = vsel %vm195, %v186, 0
      %vm208 = vcmask 1041408
      %v210 = vsel %vm208, %v187, 0
      %212 = vmatprep.subr.bf16.mxu0 0
      %213 = vmatpush1.bf16.msra.mxu0 %v210
      %214 = vmatprep.subr.bf16.mxu0 0
      %215 = vmatpush1.bf16.msra.mxu0 0
      %216 = vmatprep.subr.bf16.mxu0 0
      %217 = vmatpush1.bf16.msra.mxu0 0
      %218 = vmatprep.subr.bf16.mxu0 0
      %219 = vmatpush1.bf16.msra.mxu0 0
      %220 = vmatprep.subr.bf16.mxu0 0
      %221 = vmatpush1.bf16.msra.mxu0 0
      %222 = vmatprep.subr.bf16.mxu0 0
      %223 = vmatpush1.bf16.msra.mxu0 0
      %224 = vmatprep.subr.bf16.mxu0 0
      %225 = vmatpush1.bf16.msra.mxu0 0
      %226 = vmatprep.subr.bf16.mxu0 0
      %227 = vmatpush1.bf16.msra.mxu0 0
      %228 = vmatprep.subr.bf16.mxu0 0
      %229 = vmatpush1.bf16.msra.mxu0 0
      %230 = vmatprep.subr.bf16.mxu0 0
      %231 = vmatpush1.bf16.msra.mxu0 0
      %232 = vmatprep.subr.bf16.mxu0 0
      %233 = vmatpush1.bf16.msra.mxu0 0
      %234 = vmatprep.subr.bf16.mxu0 0
      %235 = vmatpush1.bf16.msra.mxu0 0
      %236 = vmatprep.subr.bf16.mxu0 0
      %237 = vmatpush1.bf16.msra.mxu0 0
      %238 = vmatprep.subr.bf16.mxu0 0
      %239 = vmatpush1.bf16.msra.mxu0 0
      %240 = vmatprep.subr.bf16.mxu0 0
      %241 = vmatpush1.bf16.msra.mxu0 0
      %242 = vmatprep.subr.bf16.mxu0 0
      %243 = vmatpush1.bf16.msra.mxu0 0
      %244 = vmatprep.mubr.bf16.mxu0 0
      %245 = vmatmul.mubr.bf16.gmra.mrb[0].mxu0 %v197
      %v246 = vpop.f32.mrb[0].mxu0
      %v247 = vadd.f32 %v193, %v246
      %v248 = vpop.f32.mrb[0].mxu0
      %v249 = vpop.f32.mrb[0].mxu0
      %v250 = vadd.f32 %v193, %v249
      %v251 = vpop.f32.mrb[0].mxu0
      %252 = vmatprep.mubr.bf16.mxu0 0
      %253 = vmatmul.mubr.bf16.gmra.mrb[0].mxu0 %v200
      %v254 = vpop.f32.mrb[0].mxu0
      %v255 = vadd.f32 %v193, %v254
      %v256 = vpop.f32.mrb[0].mxu0
      %v257 = vpop.f32.mrb[0].mxu0
      %v258 = vadd.f32 %v193, %v257
      %v259 = vpop.f32.mrb[0].mxu0
      %260 = vmatprep.mubr.bf16.mxu0 0
      %261 = vmatmul.mubr.bf16.gmra.mrb[0].mxu0 %v203
      %v262 = vpop.f32.mrb[0].mxu0
      %v263 = vadd.f32 %v193, %v262
      %v264 = vpop.f32.mrb[0].mxu0
      %v265 = vpop.f32.mrb[0].mxu0
      %v266 = vadd.f32 %v193, %v265
      %v267 = vpop.f32.mrb[0].mxu0
      %268 = vmatprep.mubr.bf16.mxu0 0
      %269 = vmatmul.mubr.bf16.gmra.mrb[0].mxu0 %v206
      %v270 = vpop.f32.mrb[0].mxu0
      %v271 = vadd.f32 %v193, %v270
      %v272 = vpop.f32.mrb[0].mxu0
      %v273 = vpop.f32.mrb[0].mxu0
      %v274 = vadd.f32 %v193, %v273
      %v275 = vpop.f32.mrb[0].mxu0
      %276 = vdwg.mxu0
      %vm277 = vcmask 64512
      %278 = vst.msk [vmem:[%s172] sm:$0xff] %vm277, %v247
      %279 = vst.msk [vmem:[%s172 + $0x8] sm:$0xff] %vm277, %v250
      %280 = vst.msk [vmem:[%s172 + $0x10] sm:$0xff] %vm277, %v255
      %281 = vst.msk [vmem:[%s172 + $0x18] sm:$0xff] %vm277, %v258
      %282 = vst.msk [vmem:[%s172 + $0x20] sm:$0xff] %vm277, %v263
      %283 = vst.msk [vmem:[%s172 + $0x28] sm:$0xff] %vm277, %v266
      %284 = vst.msk [vmem:[%s172 + $0x30] sm:$0xff] %vm277, %v271
      %285 = vst.msk [vmem:[%s172 + $0x38] sm:$0xff] %vm277, %v274
      %s286 = smul.u32 8, %s14
      %p287 = scmp.lt.s32.totalorder %s286, 15
      %s288 = scalar_select %p287, %s286, 15
      %s289 = smul.addr %s288, 8
      %s290 = scalar_lea.vmem %s3, %s289
      // Predicated region
      $region33: #{_lambda_.26} parent=31 // pred_check
        %p291 = pneg %p100
      $region34: #{_lambda_.26} parent=31 // pred_check_branch
        %293 = sbr.rel (%p291) target = $region36
      $region35: #{_lambda_.26} parent=31 // pred_region
        %s294 = smul.u32 8, %s14
      $region36: #{_lambda_.26} parent=31 // pred_fallthru
        _
    $region32: #{_lambda_.26} parent=5 // pred_fallthru
      _
    %p295 = scmp.le.s32.totalorder 2, %s9
    // Predicated region
    $region37: #{_lambda_.26} parent=5 // pred_check
      %p296 = pneg %p295
    $region38: #{_lambda_.26} parent=5 // pred_check_branch
      %298 = sbr.rel (%p296) target = $region40
    $region39: #{_lambda_.26} parent=5 // pred_region
      %s299 = ssub.s32 %s9, 2
      // Predicated region
      $region41: #{_lambda_.26} parent=39 // pred_check
        %p300 = pneg %p106
      $region42: #{_lambda_.26} parent=39 // pred_check_branch
        %302 = sbr.rel (%p300) target = $region44
      $region43: #{_lambda_.26} parent=39 // pred_region
        %s303 = smul.u32 8, %s15
        %p304 = scmp.lt.s32.totalorder %s303, 15
        %s305 = scalar_select %p304, %s303, 15
        %s306 = smul.addr %s305, 8
        %s307 = scalar_lea.vmem %s3, %s306
      $region44: #{_lambda_.26} parent=39 // pred_fallthru
        _
    $region40: #{_lambda_.26} parent=5 // pred_fallthru
      _
  $region6: #{_lambda_.26} parent=0 // loop_footer
    %s13 = sadd.s32 1, %s9
  $region7: #{_lambda_.26} parent=0 // loop_footer_branch
    %8 = sbr.rel target = $region3
  $region8: #{_lambda_.26} parent=0 // loop_exit
    _

// kernel: _lambda_.28
$region0: #{_lambda_.28}
  #allocation0 [shape = 'u32[]', space=smem, size = 0x4, offset = 0x4, fixed_abs, tag = 'smem constant byte address 0x4 - core index']
  #allocation1 [shape = 'u32[144,128]{1,0:T(1,128)}', space=vmem, size = 0x12000, scoped, tag = 'internal scratch']
  %s0 = inlined_call_operand.vmem [shape: f32[18,32], index: 0, kind: input, shape index: {}]
  %s1 = inlined_call_operand.vmem [shape: bf16[32,96], index: 1, kind: input, shape index: {}]
  %s2 = inlined_call_operand.vmem [shape: f32[1,96], index: 2, kind: input, shape index: {}]
  %s3 = inlined_call_operand.vmem [shape: f32[1,32], index: 3, kind: input, shape index: {}]
  %s4 = inlined_call_operand.vmem [shape: f32[1,32], index: 4, kind: input, shape index: {}]
  %s5 = inlined_call_operand.vmem [shape: bf16[18,96], index: 5, kind: output, shape index: {}]
  %s6 = sld [smem:[#allocation0]]
  $region30: #{_lambda_.28} parent=0
    _
  %s8 = ssub.s32 1, %s6
  %s9 = scalar_select 0, %s8, %s6
  // Predicated region
  $region2: #{_lambda_.28} parent=0 // pred_check
    _
  $region3: #{_lambda_.28} parent=0 // pred_check_branch
    %11 = sbr.rel (0) target = $region5
  $region4: #{_lambda_.28} parent=0 // pred_region
    _
  $region5: #{_lambda_.28} parent=0 // pred_fallthru
    _
  // Predicated region
  $region6: #{_lambda_.28} parent=0 // pred_check
    _
  $region7: #{_lambda_.28} parent=0 // pred_check_branch
    %13 = sbr.rel (0) target = $region9
  $region8: #{_lambda_.28} parent=0 // pred_region
    _
  $region9: #{_lambda_.28} parent=0 // pred_fallthru
    _
  // Predicated region
  $region10: #{_lambda_.28} parent=0 // pred_check
    _
  $region11: #{_lambda_.28} parent=0 // pred_check_branch
    %15 = sbr.rel (0) target = $region13
  $region12: #{_lambda_.28} parent=0 // pred_region
    _
  $region13: #{_lambda_.28} parent=0 // pred_fallthru
    _
  // Predicated region
  $region14: #{_lambda_.28} parent=0 // pred_check
    _
  $region15: #{_lambda_.28} parent=0 // pred_check_branch
    %17 = sbr.rel (0) target = $region17
  $region16: #{_lambda_.28} parent=0 // pred_region
    _
  $region17: #{_lambda_.28} parent=0 // pred_fallthru
    _
  // Predicated region
  $region18: #{_lambda_.28} parent=0 // pred_check
    _
  $region19: #{_lambda_.28} parent=0 // pred_check_branch
    %19 = sbr.rel (0) target = $region21
  $region20: #{_lambda_.28} parent=0 // pred_region
    _
  $region21: #{_lambda_.28} parent=0 // pred_fallthru
    _
  %v21 = vld [vmem:[%s0] sm:$0xff]
  %v22 = vld [vmem:[%s0 + $0x8] sm:$0xff]
  %v23 = vld [vmem:[%s0 + $0x10] sm:$0x3]
  %vm24 = vcmask 261120
  %v25 = vsel %vm24, %v21, 0.0
  %26 = vadd.xlane.f32.xlu0 %v25
  %v27 = vpop.xlane.xlu0 %26
  %v28 = vsel %vm24, %v22, 0.0
  %29 = vadd.xlane.f32.xlu0 %v28
  %v30 = vpop.xlane.xlu0 %29
  %vm31 = vcmask 254976
  %v32 = vsel %vm31, %v23, 0.0
  %33 = vadd.xlane.f32.xlu0 %v32
  %v34 = vpop.xlane.xlu0 %33
  %v35 = vrcp.pop 32.0
  %v36 = vmul.f32 %v27, %v35
  %v37 = vmul.f32 %v30, %v35
  %v38 = vmul.f32 %v34, %v35
  %v39 = vsub.f32 %v21, %v36
  %v40 = vsub.f32 %v22, %v37
  %v41 = vsub.f32 %v23, %v38
  %v42 = vmul.f32 %v39, %v39
  %v43 = vmul.f32 %v40, %v40
  %v44 = vmul.f32 %v41, %v41
  %v45 = vsel %vm24, %v42, 0.0
  %46 = vadd.xlane.f32.xlu0 %v45
  %v47 = vpop.xlane.xlu0 %46
  %v48 = vsel %vm24, %v43, 0.0
  %49 = vadd.xlane.f32.xlu0 %v48
  %v50 = vpop.xlane.xlu0 %49
  %v51 = vsel %vm31, %v44, 0.0
  %52 = vadd.xlane.f32.xlu0 %v51
  %v53 = vpop.xlane.xlu0 %52
  %v54 = vmul.f32 %v47, %v35
  %v55 = vmul.f32 %v50, %v35
  %v56 = vmul.f32 %v53, %v35
  %v57 = vadd.f32 %v54, 1e-06
  %v58 = vadd.f32 %v55, 1e-06
  %v59 = vadd.f32 %v56, 1e-06
  %v60 = vrsqrt.pop %v57
  %v61 = vrsqrt.pop %v58
  %v62 = vrsqrt.pop %v59
  %v63 = vmul.f32 %v39, %v60
  %v64 = vmul.f32 %v40, %v61
  %v65 = vmul.f32 %v41, %v62
  %v66 = vld [vmem:[%s3] sm:$0x1]
  %v68 = vlaneseq
  %v69 = vshrl.u32 %v68, 7
  %v70 = vsub.s32 0, %v69
  %v71 = vrot.slane %v66, %v70
  %v73 = vmul.f32 %v63, %v71
  %v74 = vmul.f32 %v64, %v71
  %v75 = vmul.f32 %v65, %v71
  %v76 = vld [vmem:[%s4] sm:$0x1]
  %v78 = vlaneseq
  %v79 = vshrl.u32 %v78, 7
  %v80 = vsub.s32 0, %v79
  %v81 = vrot.slane %v76, %v80
  %v83 = vadd.f32 %v73, %v81
  %v84 = vadd.f32 %v74, %v81
  %v85 = vadd.f32 %v75, %v81
  %v86 = vpack.c.bf16 %v84, %v83
  %v87 = vpack.c.bf16 %v85, %v85
  %v88 = vld [vmem:[%s1] sm:$0xf]
  %v89 = vld [vmem:[%s1 + $0x4] sm:$0xf]
  %v90 = vld [vmem:[%s1 + $0x8] sm:$0xf]
  %v91 = vld [vmem:[%s1 + $0xc] sm:$0xf]
  %v92 = vld [vmem:[%s2] sm:$0x1]
  %v94 = vlaneseq
  %v95 = vshrl.u32 %v94, 7
  %v96 = vsub.s32 0, %v95
  %v97 = vrot.slane %v92, %v96
  %v103 = vunpack.c.l.b16 %v88
  %v104 = vunpack.c.l.b16 %v89
  %v105 = vunpack.c.l.b16 %v90
  %v106 = vunpack.c.l.b16 %v91
  %v107 = vpack.c.b16 %v104, %v103
  %v108 = vpack.c.b16 %v106, %v105
  %v112 = vsel %vm24, %v86, 0
  %v115 = vsel %vm24, %v87, 0
  %117 = vmatprep.subr.bf16.mxu0 0
  %118 = vmatpush1.bf16.msra.mxu0 %v107
  %119 = vmatprep.subr.bf16.mxu0 0
  %120 = vmatpush1.bf16.msra.mxu0 %v108
  %121 = vmatprep.subr.bf16.mxu0 0
  %122 = vmatpush1.bf16.msra.mxu0 0
  %123 = vmatprep.subr.bf16.mxu0 0
  %124 = vmatpush1.bf16.msra.mxu0 0
  %125 = vmatprep.subr.bf16.mxu0 0
  %126 = vmatpush1.bf16.msra.mxu0 0
  %127 = vmatprep.subr.bf16.mxu0 0
  %128 = vmatpush1.bf16.msra.mxu0 0
  %129 = vmatprep.subr.bf16.mxu0 0
  %130 = vmatpush1.bf16.msra.mxu0 0
  %131 = vmatprep.subr.bf16.mxu0 0
  %132 = vmatpush1.bf16.msra.mxu0 0
  %133 = vmatprep.subr.bf16.mxu0 0
  %134 = vmatpush1.bf16.msra.mxu0 0
  %135 = vmatprep.subr.bf16.mxu0 0
  %136 = vmatpush1.bf16.msra.mxu0 0
  %137 = vmatprep.subr.bf16.mxu0 0
  %138 = vmatpush1.bf16.msra.mxu0 0
  %139 = vmatprep.subr.bf16.mxu0 0
  %140 = vmatpush1.bf16.msra.mxu0 0
  %141 = vmatprep.subr.bf16.mxu0 0
  %142 = vmatpush1.bf16.msra.mxu0 0
  %143 = vmatprep.subr.bf16.mxu0 0
  %144 = vmatpush1.bf16.msra.mxu0 0
  %145 = vmatprep.subr.bf16.mxu0 0
  %146 = vmatpush1.bf16.msra.mxu0 0
  %147 = vmatprep.subr.bf16.mxu0 0
  %148 = vmatpush1.bf16.msra.mxu0 0
  %149 = vmatprep.mubr.bf16.mxu0 0
  %150 = vmatmul.mubr.bf16.gmra.mrb[0].mxu0 %v112
  %v151 = vpop.f32.mrb[0].mxu0
  %v152 = vadd.f32 %v97, %v151
  %v153 = vpop.f32.mrb[0].mxu0
  %v154 = vpop.f32.mrb[0].mxu0
  %v155 = vadd.f32 %v97, %v154
  %v156 = vpop.f32.mrb[0].mxu0
  %157 = vmatprep.mubr.bf16.mxu0 0
  %158 = vmatmul.mubr.bf16.gmra.mrb[0].mxu0 %v115
  %v159 = vpop.f32.mrb[0].mxu0
  %v160 = vadd.f32 %v97, %v159
  %v161 = vpop.f32.mrb[0].mxu0
  %v162 = vpop.f32.mrb[0].mxu0
  %v163 = vpop.f32.mrb[0].mxu0
  %164 = vdwg.mxu0
  %v165 = vpack.c.bf16 %v155, %v152
  %v166 = vpack.c.bf16 %v160, %v160
  %v169 = vunpack.c.l.b16 %v165
  %v170 = vunpack.c.h.b16 %v165
  %v171 = vunpack.c.l.b16 %v166
  %v172 = vpack.c.b16 %v169, %v169
  %v173 = vpack.c.b16 %v170, %v170
  %v174 = vpack.c.b16 %v171, %v171
  %vm178 = vcmask 781312
  %179 = vst.msk [vmem:[%s5] sm:$0xf] %vm178, %v172
  %180 = vst.msk [vmem:[%s5 + $0x4] sm:$0xf] %vm178, %v173
  %vm181 = vcmask 778240
  %182 = vst.msk [vmem:[%s5 + $0x8] sm:$0x1] %vm181, %v174
  // Predicated region
  $region22: #{_lambda_.28} parent=0 // pred_check
    _
  $region23: #{_lambda_.28} parent=0 // pred_check_branch
    %184 = sbr.rel (0) target = $region25
  $region24: #{_lambda_.28} parent=0 // pred_region
    _
  $region25: #{_lambda_.28} parent=0 // pred_fallthru
    _
  // Predicated region
  $region26: #{_lambda_.28} parent=0 // pred_check
    _
  $region27: #{_lambda_.28} parent=0 // pred_check_branch
    %186 = sbr.rel (0) target = $region29
  $region28: #{_lambda_.28} parent=0 // pred_region
    _
  $region29: #{_lambda_.28} parent=0 // pred_fallthru
    _

// kernel: _lambda_.29
$region0: #{_lambda_.29}
  #allocation0 [shape = 'u32[]', space=smem, size = 0x4, offset = 0x4, fixed_abs, tag = 'smem constant byte address 0x4 - core index']
  #allocation1 [shape = 'u32[144,128]{1,0:T(1,128)}', space=vmem, size = 0x12000, scoped, tag = 'internal scratch']
  %s0 = inlined_call_operand.vmem [shape: bf16[2,9,96], index: 0, kind: input, shape index: {}]
  %s1 = inlined_call_operand.vmem [shape: bf16[2,9,32], index: 1, kind: output, shape index: {}]
  %s2 = sld [smem:[#allocation0]]
  $region37: #{_lambda_.29} parent=0
    _
  %s4 = ssub.s32 1, %s2
  %s5 = scalar_select 0, %s4, %s2
  loop: start=0, step=1, limit=4
  $region2: #{_lambda_.29} parent=0 // loop_pre_header
    _
  $region3: #{_lambda_.29} parent=0 // loop_header
    %s7 = sphi 0, %s11
    %p8 = scmp.ge.s32.totalorder %s7, 4
    %s17 = sphi 0, %s19
    %s20 = sphi 0, %s17
    %s21 = sphi 0, %s20
    %s37 = sphi 0, %s21
    %s43 = sphi 0, %s45
    %s46 = sphi 0, %s43
    %s47 = sphi 0, %s46
    %s63 = sphi 0, %s47
  $region4: #{_lambda_.29} parent=0 // loop_header_branch
    %10 = sbr.rel (%p8) target = $region8
  $region5: #{_lambda_.29} parent=0 // loop_body
    %s12 = ssub.s32 %s7, 1
    %s13 = ssub.s32 %s7, 2
    %s14 = sadd.s32 %s7, 1
    %s15 = ssub.s32 %s7, %s14
    %p16 = scmp.eq.s32.totalorder %s15, 0
    %s18 = sadd.s32 %s17, 1
    %s19 = scalar_select %p16, %s17, %s18
    %p22 = pneg %p16
    %p23 = scmp.eq.s32.totalorder %s7, 1
    %p24 = por %p22, %p23
    %p25 = scmp.ne.s32.totalorder %s17, %s20
    %p26 = scmp.eq.s32.totalorder %s7, 0
    %p27 = por %p25, %p26
    %p28 = scmp.ne.s32.totalorder %s17, %s20
    %p29 = scmp.eq.s32.totalorder %s12, 1
    %p30 = por %p28, %p29
    %p31 = scmp.ne.s32.totalorder %s20, %s21
    %p32 = scmp.eq.s32.totalorder %s12, 0
    %p33 = por %p31, %p32
    %p34 = scmp.ne.s32.totalorder %s20, %s21
    %p35 = scmp.eq.s32.totalorder %s13, 1
    %p36 = por %p34, %p35
    %p38 = scmp.ne.s32.totalorder %s21, %s37
    %p39 = scmp.eq.s32.totalorder %s13, 0
    %p40 = por %p38, %p39
    %s41 = ssub.s32 %s7, %s14
    %p42 = scmp.eq.s32.totalorder %s41, 0
    %s44 = sadd.s32 %s43, 1
    %s45 = scalar_select %p42, %s43, %s44
    %p48 = pneg %p42
    %p49 = scmp.eq.s32.totalorder %s7, 1
    %p50 = por %p48, %p49
    %p51 = scmp.ne.s32.totalorder %s43, %s46
    %p52 = scmp.eq.s32.totalorder %s7, 0
    %p53 = por %p51, %p52
    %p54 = scmp.ne.s32.totalorder %s43, %s46
    %p55 = scmp.eq.s32.totalorder %s12, 1
    %p56 = por %p54, %p55
    %p57 = scmp.ne.s32.totalorder %s46, %s47
    %p58 = scmp.eq.s32.totalorder %s12, 0
    %p59 = por %p57, %p58
    %p60 = scmp.ne.s32.totalorder %s46, %s47
    %p61 = scmp.eq.s32.totalorder %s13, 1
    %p62 = por %p60, %p61
    %p64 = scmp.ne.s32.totalorder %s47, %s63
    %p65 = scmp.eq.s32.totalorder %s13, 0
    %p66 = por %p64, %p65
    %p67 = scmp.le.s32.totalorder 1, %s7
    %p68 = scmp.lt.s32.totalorder %s7, 3
    %p69 = pnand %p67, %p68
    %p70 = pneg %p69
    // Predicated region
    $region9: #{_lambda_.29} parent=5 // pred_check
      _
    $region10: #{_lambda_.29} parent=5 // pred_check_branch
      %72 = sbr.rel (%p69) target = $region12
    $region11: #{_lambda_.29} parent=5 // pred_region
      %s73 = ssub.s32 %s7, 1
    $region12: #{_lambda_.29} parent=5 // pred_fallthru
      _
    %p74 = scmp.lt.s32.totalorder %s7, 2
    // Predicated region
    $region13: #{_lambda_.29} parent=5 // pred_check
      %p75 = pneg %p74
    $region14: #{_lambda_.29} parent=5 // pred_check_branch
      %77 = sbr.rel (%p75) target = $region16
    $region15: #{_lambda_.29} parent=5 // pred_region
      // Predicated region
      $region17: #{_lambda_.29} parent=15 // pred_check
        %p78 = pneg %p27
      $region18: #{_lambda_.29} parent=15 // pred_check_branch
        %80 = sbr.rel (%p78) target = $region20
      $region19: #{_lambda_.29} parent=15 // pred_region
        %p81 = scmp.lt.s32.totalorder %s7, 1
        %s82 = scalar_select %p81, %s7, 1
        %s83 = smul.addr %s82, 2
        %s84 = smul.addr %s83, 4
        %s85 = scalar_lea.vmem %s0, %s84
      $region20: #{_lambda_.29} parent=15 // pred_fallthru
        _
    $region16: #{_lambda_.29} parent=5 // pred_fallthru
      _
    %p86 = scmp.le.s32.totalorder 1, %s7
    %p87 = scmp.lt.s32.totalorder %s7, 3
    %p88 = pnand %p86, %p87
    %p89 = pneg %p88
    // Predicated region
    $region21: #{_lambda_.29} parent=5 // pred_check
      _
    $region22: #{_lambda_.29} parent=5 // pred_check_branch
      %91 = sbr.rel (%p88) target = $region24
    $region23: #{_lambda_.29} parent=5 // pred_region
      %s92 = ssub.s32 %s7, 1
      %p93 = scmp.lt.s32.totalorder %s12, 1
      %s94 = scalar_select %p93, %s12, 1
      %s95 = smul.addr %s94, 2
      %s96 = smul.addr %s95, 4
      %s97 = scalar_lea.vmem %s0, %s96
      %p98 = pneg %p33
      %p99 = pneg %p30
      %p100 = pneg %p59
      %p101 = pneg %p56
      %p102 = scmp.lt.s32.totalorder %s12, 1
      %s103 = scalar_select %p102, %s12, 1
      %s104 = smul.addr %s103, 2
      %s105 = smul.addr %s104, 4
      %s106 = scalar_lea.vmem %s1, %s105
      %p107 = scmp.lt.s32.totalorder %s12, 1
      %s108 = scalar_select %p107, %s12, 1
      %s109 = smul.addr %s108, 2
      %s110 = smul.addr %s109, 4
      %s111 = scalar_lea.vmem %s0, %s110
      %p112 = scmp.lt.s32.totalorder %s12, 1
      %s113 = scalar_select %p112, %s12, 1
      %s114 = smul.addr %s113, 2
      %s115 = smul.addr %s114, 4
      %s116 = scalar_lea.vmem %s1, %s115
      %v118 = vld [vmem:[%s111] sm:$0xf]
      %v119 = vld [vmem:[%s111 + $0x4] sm:$0x1]
      %v122 = vunpack.c.l.b16 %v118
      %v123 = vunpack.c.l.b16 %v119
      %v124 = vpack.c.b16 %v123, %v122
      %125 = vrot.lane.b32.xlu0 %v124, 96
      %v126 = vpop.permute.xlu0 %125
      %vm127 = vcmask 64512
      %v129 = vsel %vm127, %v124, 0
      %v132 = vsel %vm127, %v126, 0
      %134 = vmatprep.subr.bf16.mxu0 0
      %135 = vmatpush1.bf16.xpose.msra.mxu0 %v132
      %136 = vmatprep.subr.bf16.mxu0 0
      %137 = vmatpush1.bf16.xpose.msra.mxu0 0
      %138 = vmatprep.subr.bf16.mxu0 0
      %139 = vmatpush1.bf16.xpose.msra.mxu0 0
      %140 = vmatprep.subr.bf16.mxu0 0
      %141 = vmatpush1.bf16.xpose.msra.mxu0 0
      %142 = vmatprep.subr.bf16.mxu0 0
      %143 = vmatpush1.bf16.xpose.msra.mxu0 0
      %144 = vmatprep.subr.bf16.mxu0 0
      %145 = vmatpush1.bf16.xpose.msra.mxu0 0
      %146 = vmatprep.subr.bf16.mxu0 0
      %147 = vmatpush1.bf16.xpose.msra.mxu0 0
      %148 = vmatprep.subr.bf16.mxu0 0
      %149 = vmatpush1.bf16.xpose.msra.mxu0 0
      %150 = vmatprep.subr.bf16.mxu0 0
      %151 = vmatpush1.bf16.xpose.msra.mxu0 0
      %152 = vmatprep.subr.bf16.mxu0 0
      %153 = vmatpush1.bf16.xpose.msra.mxu0 0
      %154 = vmatprep.subr.bf16.mxu0 0
      %155 = vmatpush1.bf16.xpose.msra.mxu0 0
      %156 = vmatprep.subr.bf16.mxu0 0
      %157 = vmatpush1.bf16.xpose.msra.mxu0 0
      %158 = vmatprep.subr.bf16.mxu0 0
      %159 = vmatpush1.bf16.xpose.msra.mxu0 0
      %160 = vmatprep.subr.bf16.mxu0 0
      %161 = vmatpush1.bf16.xpose.msra.mxu0 0
      %162 = vmatprep.subr.bf16.mxu0 0
      %163 = vmatpush1.bf16.xpose.msra.mxu0 0
      %164 = vmatprep.subr.bf16.mxu0 0
      %165 = vmatpush1.bf16.xpose.msra.mxu0 0
      %166 = vmatprep.mubr.bf16.mxu0 0
      %167 = vmatmul.mubr.bf16.gmra.mrb[0].mxu0 %v129
      %v168 = vpop.f32.mrb[0].mxu0
      %v169 = vadd.f32 0.0, %v168
      %v170 = vpop.f32.mrb[0].mxu0
      %v171 = vpop.f32.mrb[0].mxu0
      %v172 = vadd.f32 0.0, %v171
      %v173 = vpop.f32.mrb[0].mxu0
      %174 = vdwg.mxu0
      %v175 = vmul.f32 %v169, 0.35355338
      %v176 = vmul.f32 %v172, 0.35355338
      %vm177 = vcmask 72704
      %v178 = vsel %vm177, %v175, -inf
      %179 = vmax.xlane.f32.xlu0 %v178
      %v180 = vpop.xlane.xlu0 %179
      %vm181 = vcmask 65536
      %v182 = vsel %vm181, %v176, -inf
      %183 = vmax.xlane.f32.xlu0 %v182
      %v184 = vpop.xlane.xlu0 %183
      %v185 = vsub.f32 %v175, %v180
      %v186 = vsub.f32 %v176, %v184
      %v187 = vmul.f32 %v185, 1.442695
      %v188 = vpow.pop %v187
      %v189 = vmul.f32 %v186, 1.442695
      %v190 = vpow.pop %v189
      %v191 = vsel %vm177, %v188, 0.0
      %192 = vadd.xlane.f32.xlu0 %v191
      %v193 = vpop.xlane.xlu0 %192
      %v194 = vsel %vm181, %v190, 0.0
      %195 = vadd.xlane.f32.xlu0 %v194
      %v196 = vpop.xlane.xlu0 %195
      %v197 = vrcp.pop %v193
      %v198 = vmul.f32 %v188, %v197
      %v199 = vrcp.pop %v196
      %v200 = vmul.f32 %v190, %v199
      %v201 = vpack.c.bf16 %v200, %v198
      %202 = vrot.lane.b32.xlu0 %v124, 64
      %v203 = vpop.permute.xlu0 %202
      %v205 = vsel %vm177, %v201, 0
      %vm207 = vcmask 1043456
      %vm208 = vcmask 1044480
      %v209 = vsel %vm207, 4294967295, 65535
      %v210 = vsel %vm208, %v209, 0
      %v212 = vand.u32 %v203, %v210
      %214 = vmatprep.subr.bf16.mxu0 0
      %215 = vmatpush1.bf16.msra.mxu0 %v212
      %216 = vmatprep.subr.bf16.mxu0 0
      %217 = vmatpush1.bf16.msra.mxu0 0
      %218 = vmatprep.subr.bf16.mxu0 0
      %219 = vmatpush1.bf16.msra.mxu0 0
      %220 = vmatprep.subr.bf16.mxu0 0
      %221 = vmatpush1.bf16.msra.mxu0 0
      %222 = vmatprep.subr.bf16.mxu0 0
      %223 = vmatpush1.bf16.msra.mxu0 0
      %224 = vmatprep.subr.bf16.mxu0 0
      %225 = vmatpush1.bf16.msra.mxu0 0
      %226 = vmatprep.subr.bf16.mxu0 0
      %227 = vmatpush1.bf16.msra.mxu0 0
      %228 = vmatprep.subr.bf16.mxu0 0
      %229 = vmatpush1.bf16.msra.mxu0 0
      %230 = vmatprep.subr.bf16.mxu0 0
      %231 = vmatpush1.bf16.msra.mxu0 0
      %232 = vmatprep.subr.bf16.mxu0 0
      %233 = vmatpush1.bf16.msra.mxu0 0
      %234 = vmatprep.subr.bf16.mxu0 0
      %235 = vmatpush1.bf16.msra.mxu0 0
      %236 = vmatprep.subr.bf16.mxu0 0
      %237 = vmatpush1.bf16.msra.mxu0 0
      %238 = vmatprep.subr.bf16.mxu0 0
      %239 = vmatpush1.bf16.msra.mxu0 0
      %240 = vmatprep.subr.bf16.mxu0 0
      %241 = vmatpush1.bf16.msra.mxu0 0
      %242 = vmatprep.subr.bf16.mxu0 0
      %243 = vmatpush1.bf16.msra.mxu0 0
      %244 = vmatprep.subr.bf16.mxu0 0
      %245 = vmatpush1.bf16.msra.mxu0 0
      %246 = vmatprep.mubr.bf16.mxu0 0
      %247 = vmatmul.mubr.bf16.gmra.mrb[0].mxu0 %v205
      %v248 = vpop.f32.mrb[0].mxu0
      %v249 = vadd.f32 0.0, %v248
      %v250 = vpop.f32.mrb[0].mxu0
      %v251 = vpop.f32.mrb[0].mxu0
      %v252 = vadd.f32 0.0, %v251
      %v253 = vpop.f32.mrb[0].mxu0
      %254 = vdwg.mxu0
      %255 = vrot.lane.b32.xlu0 %v124, 120
      %v256 = vpop.permute.xlu0 %255
      %257 = vrot.lane.b32.xlu0 %v124, 88
      %v258 = vpop.permute.xlu0 %257
      %v260 = vsel %vm127, %v256, 0
      %v263 = vsel %vm127, %v258, 0
      %265 = vmatprep.subr.bf16.mxu0 0
      %266 = vmatpush1.bf16.xpose.msra.mxu0 %v263
      %267 = vmatprep.subr.bf16.mxu0 0
      %268 = vmatpush1.bf16.xpose.msra.mxu0 0
      %269 = vmatprep.subr.bf16.mxu0 0
      %270 = vmatpush1.bf16.xpose.msra.mxu0 0
      %271 = vmatprep.subr.bf16.mxu0 0
      %272 = vmatpush1.bf16.xpose.msra.mxu0 0
      %273 = vmatprep.subr.bf16.mxu0 0
      %274 = vmatpush1.bf16.xpose.msra.mxu0 0
      %275 = vmatprep.subr.bf16.mxu0 0
      %276 = vmatpush1.bf16.xpose.msra.mxu0 0
      %277 = vmatprep.subr.bf16.mxu0 0
      %278 = vmatpush1.bf16.xpose.msra.mxu0 0
      %279 = vmatprep.subr.bf16.mxu0 0
      %280 = vmatpush1.bf16.xpose.msra.mxu0 0
      %281 = vmatprep.subr.bf16.mxu0 0
      %282 = vmatpush1.bf16.xpose.msra.mxu0 0
      %283 = vmatprep.subr.bf16.mxu0 0
      %284 = vmatpush1.bf16.xpose.msra.mxu0 0
      %285 = vmatprep.subr.bf16.mxu0 0
      %286 = vmatpush1.bf16.xpose.msra.mxu0 0
      %287 = vmatprep.subr.bf16.mxu0 0
      %288 = vmatpush1.bf16.xpose.msra.mxu0 0
      %289 = vmatprep.subr.bf16.mxu0 0
      %290 = vmatpush1.bf16.xpose.msra.mxu0 0
      %291 = vmatprep.subr.bf16.mxu0 0
      %292 = vmatpush1.bf16.xpose.msra.mxu0 0
      %293 = vmatprep.subr.bf16.mxu0 0
      %294 = vmatpush1.bf16.xpose.msra.mxu0 0
      %295 = vmatprep.subr.bf16.mxu0 0
      %296 = vmatpush1.bf16.xpose.msra.mxu0 0
      %297 = vmatprep.mubr.bf16.mxu0 0
      %298 = vmatmul.mubr.bf16.gmra.mrb[0].mxu0 %v260
      %v299 = vpop.f32.mrb[0].mxu0
      %v300 = vadd.f32 0.0, %v299
      %v301 = vpop.f32.mrb[0].mxu0
      %v302 = vpop.f32.mrb[0].mxu0
      %v303 = vadd.f32 0.0, %v302
      %v304 = vpop.f32.mrb[0].mxu0
      %305 = vdwg.mxu0
      %v306 = vmul.f32 %v300, 0.35355338
      %v307 = vmul.f32 %v303, 0.35355338
      %v308 = vsel %vm177, %v306, -inf
      %309 = vmax.xlane.f32.xlu0 %v308
      %v310 = vpop.xlane.xlu0 %309
      %v311 = vsel %vm181, %v307, -inf
      %312 = vmax.xlane.f32.xlu0 %v311
      %v313 = vpop.xlane.xlu0 %312
      %v314 = vsub.f32 %v306, %v310
      %v315 = vsub.f32 %v307, %v313
      %v316 = vmul.f32 %v314, 1.442695
      %v317 = vpow.pop %v316
      %v318 = vmul.f32 %v315, 1.442695
      %v319 = vpow.pop %v318
      %v320 = vsel %vm177, %v317, 0.0
      %321 = vadd.xlane.f32.xlu0 %v320
      %v322 = vpop.xlane.xlu0 %321
      %v323 = vsel %vm181, %v319, 0.0
      %324 = vadd.xlane.f32.xlu0 %v323
      %v325 = vpop.xlane.xlu0 %324
      %v326 = vrcp.pop %v322
      %v327 = vmul.f32 %v317, %v326
      %v328 = vrcp.pop %v325
      %v329 = vmul.f32 %v319, %v328
      %v330 = vpack.c.bf16 %v329, %v327
      %331 = vrot.lane.b32.xlu0 %v124, 56
      %v332 = vpop.permute.xlu0 %331
      %v334 = vsel %vm177, %v330, 0
      %v337 = vand.u32 %v332, %v210
      %339 = vmatprep.subr.bf16.mxu0 0
      %340 = vmatpush1.bf16.msra.mxu0 %v337
      %341 = vmatprep.subr.bf16.mxu0 0
      %342 = vmatpush1.bf16.msra.mxu0 0
      %343 = vmatprep.subr.bf16.mxu0 0
      %344 = vmatpush1.bf16.msra.mxu0 0
      %345 = vmatprep.subr.bf16.mxu0 0
      %346 = vmatpush1.bf16.msra.mxu0 0
      %347 = vmatprep.subr.bf16.mxu0 0
      %348 = vmatpush1.bf16.msra.mxu0 0
      %349 = vmatprep.subr.bf16.mxu0 0
      %350 = vmatpush1.bf16.msra.mxu0 0
      %351 = vmatprep.subr.bf16.mxu0 0
      %352 = vmatpush1.bf16.msra.mxu0 0
      %353 = vmatprep.subr.bf16.mxu0 0
      %354 = vmatpush1.bf16.msra.mxu0 0
      %355 = vmatprep.subr.bf16.mxu0 0
      %356 = vmatpush1.bf16.msra.mxu0 0
      %357 = vmatprep.subr.bf16.mxu0 0
      %358 = vmatpush1.bf16.msra.mxu0 0
      %359 = vmatprep.subr.bf16.mxu0 0
      %360 = vmatpush1.bf16.msra.mxu0 0
      %361 = vmatprep.subr.bf16.mxu0 0
      %362 = vmatpush1.bf16.msra.mxu0 0
      %363 = vmatprep.subr.bf16.mxu0 0
      %364 = vmatpush1.bf16.msra.mxu0 0
      %365 = vmatprep.subr.bf16.mxu0 0
      %366 = vmatpush1.bf16.msra.mxu0 0
      %367 = vmatprep.subr.bf16.mxu0 0
      %368 = vmatpush1.bf16.msra.mxu0 0
      %369 = vmatprep.subr.bf16.mxu0 0
      %370 = vmatpush1.bf16.msra.mxu0 0
      %371 = vmatprep.mubr.bf16.mxu0 0
      %372 = vmatmul.mubr.bf16.gmra.mrb[0].mxu0 %v334
      %v373 = vpop.f32.mrb[0].mxu0
      %v374 = vadd.f32 0.0, %v373
      %v375 = vpop.f32.mrb[0].mxu0
      %v376 = vpop.f32.mrb[0].mxu0
      %v377 = vadd.f32 0.0, %v376
      %v378 = vpop.f32.mrb[0].mxu0
      %379 = vdwg.mxu0
      %380 = vrot.lane.b32.xlu0 %v124, 112
      %v381 = vpop.permute.xlu0 %380
      %382 = vrot.lane.b32.xlu0 %v124, 80
      %v383 = vpop.permute.xlu0 %382
      %v385 = vsel %vm127, %v381, 0
      %v388 = vsel %vm127, %v383, 0
      %390 = vmatprep.subr.bf16.mxu0 0
      %391 = vmatpush1.bf16.xpose.msra.mxu0 %v388
      %392 = vmatprep.subr.bf16.mxu0 0
      %393 = vmatpush1.bf16.xpose.msra.mxu0 0
      %394 = vmatprep.subr.bf16.mxu0 0
      %395 = vmatpush1.bf16.xpose.msra.mxu0 0
      %396 = vmatprep.subr.bf16.mxu0 0
      %397 = vmatpush1.bf16.xpose.msra.mxu0 0
      %398 = vmatprep.subr.bf16.mxu0 0
      %399 = vmatpush1.bf16.xpose.msra.mxu0 0
      %400 = vmatprep.subr.bf16.mxu0 0
      %401 = vmatpush1.bf16.xpose.msra.mxu0 0
      %402 = vmatprep.subr.bf16.mxu0 0
      %403 = vmatpush1.bf16.xpose.msra.mxu0 0
      %404 = vmatprep.subr.bf16.mxu0 0
      %405 = vmatpush1.bf16.xpose.msra.mxu0 0
      %406 = vmatprep.subr.bf16.mxu0 0
      %407 = vmatpush1.bf16.xpose.msra.mxu0 0
      %408 = vmatprep.subr.bf16.mxu0 0
      %409 = vmatpush1.bf16.xpose.msra.mxu0 0
      %410 = vmatprep.subr.bf16.mxu0 0
      %411 = vmatpush1.bf16.xpose.msra.mxu0 0
      %412 = vmatprep.subr.bf16.mxu0 0
      %413 = vmatpush1.bf16.xpose.msra.mxu0 0
      %414 = vmatprep.subr.bf16.mxu0 0
      %415 = vmatpush1.bf16.xpose.msra.mxu0 0
      %416 = vmatprep.subr.bf16.mxu0 0
      %417 = vmatpush1.bf16.xpose.msra.mxu0 0
      %418 = vmatprep.subr.bf16.mxu0 0
      %419 = vmatpush1.bf16.xpose.msra.mxu0 0
      %420 = vmatprep.subr.bf16.mxu0 0
      %421 = vmatpush1.bf16.xpose.msra.mxu0 0
      %422 = vmatprep.mubr.bf16.mxu0 0
      %423 = vmatmul.mubr.bf16.gmra.mrb[0].mxu0 %v385
      %v424 = vpop.f32.mrb[0].mxu0
      %v425 = vadd.f32 0.0, %v424
      %v426 = vpop.f32.mrb[0].mxu0
      %v427 = vpop.f32.mrb[0].mxu0
      %v428 = vadd.f32 0.0, %v427
      %v429 = vpop.f32.mrb[0].mxu0
      %430 = vdwg.mxu0
      %v431 = vmul.f32 %v425, 0.35355338
      %v432 = vmul.f32 %v428, 0.35355338
      %v433 = vsel %vm177, %v431, -inf
      %434 = vmax.xlane.f32.xlu0 %v433
      %v435 = vpop.xlane.xlu0 %434
      %v436 = vsel %vm181, %v432, -inf
      %437 = vmax.xlane.f32.xlu0 %v436
      %v438 = vpop.xlane.xlu0 %437
      %v439 = vsub.f32 %v431, %v435
      %v440 = vsub.f32 %v432, %v438
      %v441 = vmul.f32 %v439, 1.442695
      %v442 = vpow.pop %v441
      %v443 = vmul.f32 %v440, 1.442695
      %v444 = vpow.pop %v443
      %v445 = vsel %vm177, %v442, 0.0
      %446 = vadd.xlane.f32.xlu0 %v445
      %v447 = vpop.xlane.xlu0 %446
      %v448 = vsel %vm181, %v444, 0.0
      %449 = vadd.xlane.f32.xlu0 %v448
      %v450 = vpop.xlane.xlu0 %449
      %v451 = vrcp.pop %v447
      %v452 = vmul.f32 %v442, %v451
      %v453 = vrcp.pop %v450
      %v454 = vmul.f32 %v444, %v453
      %v455 = vpack.c.bf16 %v454, %v452
      %456 = vrot.lane.b32.xlu0 %v124, 48
      %v457 = vpop.permute.xlu0 %456
      %v459 = vsel %vm177, %v455, 0
      %v462 = vand.u32 %v457, %v210
      %464 = vmatprep.subr.bf16.mxu0 0
      %465 = vmatpush1.bf16.msra.mxu0 %v462
      %466 = vmatprep.subr.bf16.mxu0 0
      %467 = vmatpush1.bf16.msra.mxu0 0
      %468 = vmatprep.subr.bf16.mxu0 0
      %469 = vmatpush1.bf16.msra.mxu0 0
      %470 = vmatprep.subr.bf16.mxu0 0
      %471 = vmatpush1.bf16.msra.mxu0 0
      %472 = vmatprep.subr.bf16.mxu0 0
      %473 = vmatpush1.bf16.msra.mxu0 0
      %474 = vmatprep.subr.bf16.mxu0 0
      %475 = vmatpush1.bf16.msra.mxu0 0
      %476 = vmatprep.subr.bf16.mxu0 0
      %477 = vmatpush1.bf16.msra.mxu0 0
      %478 = vmatprep.subr.bf16.mxu0 0
      %479 = vmatpush1.bf16.msra.mxu0 0
      %480 = vmatprep.subr.bf16.mxu0 0
      %481 = vmatpush1.bf16.msra.mxu0 0
      %482 = vmatprep.subr.bf16.mxu0 0
      %483 = vmatpush1.bf16.msra.mxu0 0
      %484 = vmatprep.subr.bf16.mxu0 0
      %485 = vmatpush1.bf16.msra.mxu0 0
      %486 = vmatprep.subr.bf16.mxu0 0
      %487 = vmatpush1.bf16.msra.mxu0 0
      %488 = vmatprep.subr.bf16.mxu0 0
      %489 = vmatpush1.bf16.msra.mxu0 0
      %490 = vmatprep.subr.bf16.mxu0 0
      %491 = vmatpush1.bf16.msra.mxu0 0
      %492 = vmatprep.subr.bf16.mxu0 0
      %493 = vmatpush1.bf16.msra.mxu0 0
      %494 = vmatprep.subr.bf16.mxu0 0
      %495 = vmatpush1.bf16.msra.mxu0 0
      %496 = vmatprep.mubr.bf16.mxu0 0
      %497 = vmatmul.mubr.bf16.gmra.mrb[0].mxu0 %v459
      %v498 = vpop.f32.mrb[0].mxu0
      %v499 = vadd.f32 0.0, %v498
      %v500 = vpop.f32.mrb[0].mxu0
      %v501 = vpop.f32.mrb[0].mxu0
      %v502 = vadd.f32 0.0, %v501
      %v503 = vpop.f32.mrb[0].mxu0
      %504 = vdwg.mxu0
      %505 = vrot.lane.b32.xlu0 %v124, 104
      %v506 = vpop.permute.xlu0 %505
      %507 = vrot.lane.b32.xlu0 %v124, 72
      %v508 = vpop.permute.xlu0 %507
      %v510 = vsel %vm127, %v506, 0
      %v513 = vsel %vm127, %v508, 0
      %515 = vmatprep.subr.bf16.mxu0 0
      %516 = vmatpush1.bf16.xpose.msra.mxu0 %v513
      %517 = vmatprep.subr.bf16.mxu0 0
      %518 = vmatpush1.bf16.xpose.msra.mxu0 0
      %519 = vmatprep.subr.bf16.mxu0 0
      %520 = vmatpush1.bf16.xpose.msra.mxu0 0
      %521 = vmatprep.subr.bf16.mxu0 0
      %522 = vmatpush1.bf16.xpose.msra.mxu0 0
      %523 = vmatprep.subr.bf16.mxu0 0
      %524 = vmatpush1.bf16.xpose.msra.mxu0 0
      %525 = vmatprep.subr.bf16.mxu0 0
      %526 = vmatpush1.bf16.xpose.msra.mxu0 0
      %527 = vmatprep.subr.bf16.mxu0 0
      %528 = vmatpush1.bf16.xpose.msra.mxu0 0
      %529 = vmatprep.subr.bf16.mxu0 0
      %530 = vmatpush1.bf16.xpose.msra.mxu0 0
      %531 = vmatprep.subr.bf16.mxu0 0
      %532 = vmatpush1.bf16.xpose.msra.mxu0 0
      %533 = vmatprep.subr.bf16.mxu0 0
      %534 = vmatpush1.bf16.xpose.msra.mxu0 0
      %535 = vmatprep.subr.bf16.mxu0 0
      %536 = vmatpush1.bf16.xpose.msra.mxu0 0
      %537 = vmatprep.subr.bf16.mxu0 0
      %538 = vmatpush1.bf16.xpose.msra.mxu0 0
      %539 = vmatprep.subr.bf16.mxu0 0
      %540 = vmatpush1.bf16.xpose.msra.mxu0 0
      %541 = vmatprep.subr.bf16.mxu0 0
      %542 = vmatpush1.bf16.xpose.msra.mxu0 0
      %543 = vmatprep.subr.bf16.mxu0 0
      %544 = vmatpush1.bf16.xpose.msra.mxu0 0
      %545 = vmatprep.subr.bf16.mxu0 0
      %546 = vmatpush1.bf16.xpose.msra.mxu0 0
      %547 = vmatprep.mubr.bf16.mxu0 0
      %548 = vmatmul.mubr.bf16.gmra.mrb[0].mxu0 %v510
      %v549 = vpop.f32.mrb[0].mxu0
      %v550 = vadd.f32 0.0, %v549
      %v551 = vpop.f32.mrb[0].mxu0
      %v552 = vpop.f32.mrb[0].mxu0
      %v553 = vadd.f32 0.0, %v552
      %v554 = vpop.f32.mrb[0].mxu0
      %555 = vdwg.mxu0
      %v556 = vmul.f32 %v550, 0.35355338
      %v557 = vmul.f32 %v553, 0.35355338
      %v558 = vsel %vm177, %v556, -inf
      %559 = vmax.xlane.f32.xlu0 %v558
      %v560 = vpop.xlane.xlu0 %559
      %v561 = vsel %vm181, %v557, -inf
      %562 = vmax.xlane.f32.xlu0 %v561
      %v563 = vpop.xlane.xlu0 %562
      %v564 = vsub.f32 %v556, %v560
      %v565 = vsub.f32 %v557, %v563
      %v566 = vmul.f32 %v564, 1.442695
      %v567 = vpow.pop %v566
      %v568 = vmul.f32 %v565, 1.442695
      %v569 = vpow.pop %v568
      %v570 = vsel %vm177, %v567, 0.0
      %571 = vadd.xlane.f32.xlu0 %v570
      %v572 = vpop.xlane.xlu0 %571
      %v573 = vsel %vm181, %v569, 0.0
      %574 = vadd.xlane.f32.xlu0 %v573
      %v575 = vpop.xlane.xlu0 %574
      %v576 = vrcp.pop %v572
      %v577 = vmul.f32 %v567, %v576
      %v578 = vrcp.pop %v575
      %v579 = vmul.f32 %v569, %v578
      %v580 = vpack.c.bf16 %v579, %v577
      %581 = vrot.lane.b32.xlu0 %v124, 40
      %v582 = vpop.permute.xlu0 %581
      %v584 = vsel %vm177, %v580, 0
      %v587 = vand.u32 %v582, %v210
      %589 = vmatprep.subr.bf16.mxu0 0
      %590 = vmatpush1.bf16.msra.mxu0 %v587
      %591 = vmatprep.subr.bf16.mxu0 0
      %592 = vmatpush1.bf16.msra.mxu0 0
      %593 = vmatprep.subr.bf16.mxu0 0
      %594 = vmatpush1.bf16.msra.mxu0 0
      %595 = vmatprep.subr.bf16.mxu0 0
      %596 = vmatpush1.bf16.msra.mxu0 0
      %597 = vmatprep.subr.bf16.mxu0 0
      %598 = vmatpush1.bf16.msra.mxu0 0
      %599 = vmatprep.subr.bf16.mxu0 0
      %600 = vmatpush1.bf16.msra.mxu0 0
      %601 = vmatprep.subr.bf16.mxu0 0
      %602 = vmatpush1.bf16.msra.mxu0 0
      %603 = vmatprep.subr.bf16.mxu0 0
      %604 = vmatpush1.bf16.msra.mxu0 0
      %605 = vmatprep.subr.bf16.mxu0 0
      %606 = vmatpush1.bf16.msra.mxu0 0
      %607 = vmatprep.subr.bf16.mxu0 0
      %608 = vmatpush1.bf16.msra.mxu0 0
      %609 = vmatprep.subr.bf16.mxu0 0
      %610 = vmatpush1.bf16.msra.mxu0 0
      %611 = vmatprep.subr.bf16.mxu0 0
      %612 = vmatpush1.bf16.msra.mxu0 0
      %613 = vmatprep.subr.bf16.mxu0 0
      %614 = vmatpush1.bf16.msra.mxu0 0
      %615 = vmatprep.subr.bf16.mxu0 0
      %616 = vmatpush1.bf16.msra.mxu0 0
      %617 = vmatprep.subr.bf16.mxu0 0
      %618 = vmatpush1.bf16.msra.mxu0 0
      %619 = vmatprep.subr.bf16.mxu0 0
      %620 = vmatpush1.bf16.msra.mxu0 0
      %621 = vmatprep.mubr.bf16.mxu0 0
      %622 = vmatmul.mubr.bf16.gmra.mrb[0].mxu0 %v584
      %v623 = vpop.f32.mrb[0].mxu0
      %v624 = vadd.f32 0.0, %v623
      %v625 = vpop.f32.mrb[0].mxu0
      %v626 = vpop.f32.mrb[0].mxu0
      %v627 = vadd.f32 0.0, %v626
      %v628 = vpop.f32.mrb[0].mxu0
      %629 = vdwg.mxu0
      %632 = vrot.lane.b32.xlu0 %v374, 8
      %v633 = vpop.permute.xlu0 %632
      %634 = vrot.lane.b32.xlu0 %v377, 8
      %v635 = vpop.permute.xlu0 %634
      %640 = vrot.lane.b32.xlu0 %v499, 16
      %v641 = vpop.permute.xlu0 %640
      %642 = vrot.lane.b32.xlu0 %v502, 16
      %v643 = vpop.permute.xlu0 %642
      %648 = vrot.lane.b32.xlu0 %v624, 24
      %v649 = vpop.permute.xlu0 %648
      %650 = vrot.lane.b32.xlu0 %v627, 24
      %v651 = vpop.permute.xlu0 %650
      %v654 = vsel %vm127, %v249, %v633
      %v655 = vsel %vm127, %v252, %v635
      %vm656 = vcmask 130048
      %v657 = vsel %vm656, %v654, %v641
      %v658 = vsel %vm656, %v655, %v643
      %vm659 = vcmask 195584
      %v660 = vsel %vm659, %v657, %v649
      %v661 = vsel %vm659, %v658, %v651
      %v662 = vpack.c.bf16 %v661, %v660
      %v664 = vunpack.c.l.b16 %v662
      %v665 = vunpack.c.h.b16 %v662
      %v666 = vpack.c.b16 %v664, %v664
      %v667 = vpack.c.b16 %v665, %v665
      %vm670 = vcmask 257024
      %671 = vst.msk [vmem:[%s116] sm:$0xf] %vm670, %v666
      %vm672 = vcmask 253952
      %vm673 = vsmask.f32 256
      %vm674 = vmand %vm672, %vm673
      %v675 = vld [vmem:[%s116 + $0x4] sm:$0x1]
      %v676 = vsel %vm674, %v667, %v675
      %677 = vst [vmem:[%s116 + $0x4] sm:$0x1] %v676
      %p678 = scmp.lt.s32.totalorder %s12, 1
      %s679 = scalar_select %p678, %s12, 1
      %s680 = smul.addr %s679, 2
      %s681 = smul.addr %s680, 4
      %s682 = scalar_lea.vmem %s1, %s681
      // Predicated region
      $region25: #{_lambda_.29} parent=23 // pred_check
        %p683 = pneg %p56
      $region26: #{_lambda_.29} parent=23 // pred_check_branch
        %685 = sbr.rel (%p683) target = $region28
      $region27: #{_lambda_.29} parent=23 // pred_region
        _
      $region28: #{_lambda_.29} parent=23 // pred_fallthru
        _
    $region24: #{_lambda_.29} parent=5 // pred_fallthru
      _
    %p686 = scmp.le.s32.totalorder 2, %s7
    // Predicated region
    $region29: #{_lambda_.29} parent=5 // pred_check
      %p687 = pneg %p686
    $region30: #{_lambda_.29} parent=5 // pred_check_branch
      %689 = sbr.rel (%p687) target = $region32
    $region31: #{_lambda_.29} parent=5 // pred_region
      %s690 = ssub.s32 %s7, 2
      // Predicated region
      $region33: #{_lambda_.29} parent=31 // pred_check
        %p691 = pneg %p62
      $region34: #{_lambda_.29} parent=31 // pred_check_branch
        %693 = sbr.rel (%p691) target = $region36
      $region35: #{_lambda_.29} parent=31 // pred_region
        %p694 = scmp.lt.s32.totalorder %s13, 1
        %s695 = scalar_select %p694, %s13, 1
        %s696 = smul.addr %s695, 2
        %s697 = smul.addr %s696, 4
        %s698 = scalar_lea.vmem %s1, %s697
      $region36: #{_lambda_.29} parent=31 // pred_fallthru
        _
    $region32: #{_lambda_.29} parent=5 // pred_fallthru
      _
  $region6: #{_lambda_.29} parent=0 // loop_footer
    %s11 = sadd.s32 1, %s7
  $region7: #{_lambda_.29} parent=0 // loop_footer_branch
    %6 = sbr.rel target = $region3
  $region8: #{_lambda_.29} parent=0 // loop_exit
    _

// kernel: _lambda_.30
$region0: #{_lambda_.30}
  #allocation0 [shape = 'u32[]', space=smem, size = 0x4, offset = 0x4, fixed_abs, tag = 'smem constant byte address 0x4 - core index']
  #allocation1 [shape = 'u32[144,128]{1,0:T(1,128)}', space=vmem, size = 0x12000, scoped, tag = 'internal scratch']
  %s0 = inlined_call_operand.vmem [shape: bf16[18,32], index: 0, kind: input, shape index: {}]
  %s1 = inlined_call_operand.vmem [shape: bf16[32,32], index: 1, kind: input, shape index: {}]
  %s2 = inlined_call_operand.vmem [shape: f32[1,32], index: 2, kind: input, shape index: {}]
  %s3 = inlined_call_operand.vmem [shape: f32[18,32], index: 3, kind: input, shape index: {}]
  %s4 = inlined_call_operand.vmem [shape: f32[18,32], index: 4, kind: output, shape index: {}]
  %s5 = sld [smem:[#allocation0]]
  $region26: #{_lambda_.30} parent=0
    _
  %s7 = ssub.s32 1, %s5
  %s8 = scalar_select 0, %s7, %s5
  // Predicated region
  $region2: #{_lambda_.30} parent=0 // pred_check
    _
  $region3: #{_lambda_.30} parent=0 // pred_check_branch
    %10 = sbr.rel (0) target = $region5
  $region4: #{_lambda_.30} parent=0 // pred_region
    _
  $region5: #{_lambda_.30} parent=0 // pred_fallthru
    _
  // Predicated region
  $region6: #{_lambda_.30} parent=0 // pred_check
    _
  $region7: #{_lambda_.30} parent=0 // pred_check_branch
    %12 = sbr.rel (0) target = $region9
  $region8: #{_lambda_.30} parent=0 // pred_region
    _
  $region9: #{_lambda_.30} parent=0 // pred_fallthru
    _
  // Predicated region
  $region10: #{_lambda_.30} parent=0 // pred_check
    _
  $region11: #{_lambda_.30} parent=0 // pred_check_branch
    %14 = sbr.rel (0) target = $region13
  $region12: #{_lambda_.30} parent=0 // pred_region
    _
  $region13: #{_lambda_.30} parent=0 // pred_fallthru
    _
  // Predicated region
  $region14: #{_lambda_.30} parent=0 // pred_check
    _
  $region15: #{_lambda_.30} parent=0 // pred_check_branch
    %16 = sbr.rel (0) target = $region17
  $region16: #{_lambda_.30} parent=0 // pred_region
    _
  $region17: #{_lambda_.30} parent=0 // pred_fallthru
    _
  %v18 = vld [vmem:[%s0] sm:$0xf]
  %v19 = vld [vmem:[%s0 + $0x4] sm:$0xf]
  %v20 = vld [vmem:[%s0 + $0x8] sm:$0x1]
  %v21 = vld [vmem:[%s1] sm:$0xf]
  %v22 = vld [vmem:[%s1 + $0x4] sm:$0xf]
  %v23 = vld [vmem:[%s1 + $0x8] sm:$0xf]
  %v24 = vld [vmem:[%s1 + $0xc] sm:$0xf]
  %v25 = vld [vmem:[%s2] sm:$0x1]
  %v27 = vlaneseq
  %v28 = vshrl.u32 %v27, 7
  %v29 = vsub.s32 0, %v28
  %v30 = vrot.slane %v25, %v29
  %v35 = vunpack.c.l.b16 %v18
  %v36 = vunpack.c.l.b16 %v19
  %v37 = vunpack.c.l.b16 %v20
  %v38 = vpack.c.b16 %v36, %v35
  %v39 = vpack.c.b16 %v37, %v37
  %v44 = vunpack.c.l.b16 %v21
  %v45 = vunpack.c.l.b16 %v22
  %v46 = vunpack.c.l.b16 %v23
  %v47 = vunpack.c.l.b16 %v24
  %v48 = vpack.c.b16 %v45, %v44
  %v49 = vpack.c.b16 %v47, %v46
  %vm52 = vcmask 261120
  %v54 = vsel %vm52, %v38, 0
  %v57 = vsel %vm52, %v39, 0
  %59 = vmatprep.subr.bf16.mxu0 0
  %60 = vmatpush1.bf16.msra.mxu0 %v48
  %61 = vmatprep.subr.bf16.mxu0 0
  %62 = vmatpush1.bf16.msra.mxu0 %v49
  %63 = vmatprep.subr.bf16.mxu0 0
  %64 = vmatpush1.bf16.msra.mxu0 0
  %65 = vmatprep.subr.bf16.mxu0 0
  %66 = vmatpush1.bf16.msra.mxu0 0
  %67 = vmatprep.subr.bf16.mxu0 0
  %68 = vmatpush1.bf16.msra.mxu0 0
  %69 = vmatprep.subr.bf16.mxu0 0
  %70 = vmatpush1.bf16.msra.mxu0 0
  %71 = vmatprep.subr.bf16.mxu0 0
  %72 = vmatpush1.bf16.msra.mxu0 0
  %73 = vmatprep.subr.bf16.mxu0 0
  %74 = vmatpush1.bf16.msra.mxu0 0
  %75 = vmatprep.subr.bf16.mxu0 0
  %76 = vmatpush1.bf16.msra.mxu0 0
  %77 = vmatprep.subr.bf16.mxu0 0
  %78 = vmatpush1.bf16.msra.mxu0 0
  %79 = vmatprep.subr.bf16.mxu0 0
  %80 = vmatpush1.bf16.msra.mxu0 0
  %81 = vmatprep.subr.bf16.mxu0 0
  %82 = vmatpush1.bf16.msra.mxu0 0
  %83 = vmatprep.subr.bf16.mxu0 0
  %84 = vmatpush1.bf16.msra.mxu0 0
  %85 = vmatprep.subr.bf16.mxu0 0
  %86 = vmatpush1.bf16.msra.mxu0 0
  %87 = vmatprep.subr.bf16.mxu0 0
  %88 = vmatpush1.bf16.msra.mxu0 0
  %89 = vmatprep.subr.bf16.mxu0 0
  %90 = vmatpush1.bf16.msra.mxu0 0
  %91 = vmatprep.mubr.bf16.mxu0 0
  %92 = vmatmul.mubr.bf16.gmra.mrb[0].mxu0 %v54
  %v93 = vpop.f32.mrb[0].mxu0
  %v94 = vadd.f32 %v30, %v93
  %v95 = vpop.f32.mrb[0].mxu0
  %v96 = vpop.f32.mrb[0].mxu0
  %v97 = vadd.f32 %v30, %v96
  %v98 = vpop.f32.mrb[0].mxu0
  %99 = vmatprep.mubr.bf16.mxu0 0
  %100 = vmatmul.mubr.bf16.gmra.mrb[0].mxu0 %v57
  %v101 = vpop.f32.mrb[0].mxu0
  %v102 = vadd.f32 %v30, %v101
  %v103 = vpop.f32.mrb[0].mxu0
  %v104 = vpop.f32.mrb[0].mxu0
  %v105 = vpop.f32.mrb[0].mxu0
  %106 = vdwg.mxu0
  %v107 = vld [vmem:[%s3] sm:$0xff]
  %v108 = vld [vmem:[%s3 + $0x8] sm:$0xff]
  %v109 = vld [vmem:[%s3 + $0x10] sm:$0x3]
  %v110 = vadd.f32 %v94, %v107
  %v111 = vadd.f32 %v97, %v108
  %v112 = vadd.f32 %v102, %v109
  %113 = vst.msk [vmem:[%s4] sm:$0xff] %vm52, %v110
  %114 = vst.msk [vmem:[%s4 + $0x8] sm:$0xff] %vm52, %v111
  %vm115 = vcmask 254976
  %116 = vst.msk [vmem:[%s4 + $0x10] sm:$0x3] %vm115, %v112
  // Predicated region
  $region18: #{_lambda_.30} parent=0 // pred_check
    _
  $region19: #{_lambda_.30} parent=0 // pred_check_branch
    %118 = sbr.rel (0) target = $region21
  $region20: #{_lambda_.30} parent=0 // pred_region
    _
  $region21: #{_lambda_.30} parent=0 // pred_fallthru
    _
  // Predicated region
  $region22: #{_lambda_.30} parent=0 // pred_check
    _
  $region23: #{_lambda_.30} parent=0 // pred_check_branch
    %120 = sbr.rel (0) target = $region25
  $region24: #{_lambda_.30} parent=0 // pred_region
    _
  $region25: #{_lambda_.30} parent=0 // pred_fallthru
    _

// kernel: _lambda_.31
$region0: #{_lambda_.31}
  #allocation0 [shape = 'u32[]', space=smem, size = 0x4, offset = 0x4, fixed_abs, tag = 'smem constant byte address 0x4 - core index']
  #allocation1 [shape = 'u32[144,128]{1,0:T(1,128)}', space=vmem, size = 0x12000, scoped, tag = 'internal scratch']
  %s0 = inlined_call_operand.vmem [shape: f32[18,32], index: 0, kind: input, shape index: {}]
  %s1 = inlined_call_operand.vmem [shape: bf16[32,128], index: 1, kind: input, shape index: {}]
  %s2 = inlined_call_operand.vmem [shape: f32[1,128], index: 2, kind: input, shape index: {}]
  %s3 = inlined_call_operand.vmem [shape: f32[1,32], index: 3, kind: input, shape index: {}]
  %s4 = inlined_call_operand.vmem [shape: f32[1,32], index: 4, kind: input, shape index: {}]
  %s5 = inlined_call_operand.vmem [shape: bf16[18,128], index: 5, kind: output, shape index: {}]
  %s6 = sld [smem:[#allocation0]]
  $region30: #{_lambda_.31} parent=0
    _
  %s8 = ssub.s32 1, %s6
  %s9 = scalar_select 0, %s8, %s6
  // Predicated region
  $region2: #{_lambda_.31} parent=0 // pred_check
    _
  $region3: #{_lambda_.31} parent=0 // pred_check_branch
    %11 = sbr.rel (0) target = $region5
  $region4: #{_lambda_.31} parent=0 // pred_region
    _
  $region5: #{_lambda_.31} parent=0 // pred_fallthru
    _
  // Predicated region
  $region6: #{_lambda_.31} parent=0 // pred_check
    _
  $region7: #{_lambda_.31} parent=0 // pred_check_branch
    %13 = sbr.rel (0) target = $region9
  $region8: #{_lambda_.31} parent=0 // pred_region
    _
  $region9: #{_lambda_.31} parent=0 // pred_fallthru
    _
  // Predicated region
  $region10: #{_lambda_.31} parent=0 // pred_check
    _
  $region11: #{_lambda_.31} parent=0 // pred_check_branch
    %15 = sbr.rel (0) target = $region13
  $region12: #{_lambda_.31} parent=0 // pred_region
    _
  $region13: #{_lambda_.31} parent=0 // pred_fallthru
    _
  // Predicated region
  $region14: #{_lambda_.31} parent=0 // pred_check
    _
  $region15: #{_lambda_.31} parent=0 // pred_check_branch
    %17 = sbr.rel (0) target = $region17
  $region16: #{_lambda_.31} parent=0 // pred_region
    _
  $region17: #{_lambda_.31} parent=0 // pred_fallthru
    _
  // Predicated region
  $region18: #{_lambda_.31} parent=0 // pred_check
    _
  $region19: #{_lambda_.31} parent=0 // pred_check_branch
    %19 = sbr.rel (0) target = $region21
  $region20: #{_lambda_.31} parent=0 // pred_region
    _
  $region21: #{_lambda_.31} parent=0 // pred_fallthru
    _
  %v21 = vld [vmem:[%s0] sm:$0xff]
  %v22 = vld [vmem:[%s0 + $0x8] sm:$0xff]
  %v23 = vld [vmem:[%s0 + $0x10] sm:$0x3]
  %vm24 = vcmask 261120
  %v25 = vsel %vm24, %v21, 0.0
  %26 = vadd.xlane.f32.xlu0 %v25
  %v27 = vpop.xlane.xlu0 %26
  %v28 = vsel %vm24, %v22, 0.0
  %29 = vadd.xlane.f32.xlu0 %v28
  %v30 = vpop.xlane.xlu0 %29
  %vm31 = vcmask 254976
  %v32 = vsel %vm31, %v23, 0.0
  %33 = vadd.xlane.f32.xlu0 %v32
  %v34 = vpop.xlane.xlu0 %33
  %v35 = vrcp.pop 32.0
  %v36 = vmul.f32 %v27, %v35
  %v37 = vmul.f32 %v30, %v35
  %v38 = vmul.f32 %v34, %v35
  %v39 = vsub.f32 %v21, %v36
  %v40 = vsub.f32 %v22, %v37
  %v41 = vsub.f32 %v23, %v38
  %v42 = vmul.f32 %v39, %v39
  %v43 = vmul.f32 %v40, %v40
  %v44 = vmul.f32 %v41, %v41
  %v45 = vsel %vm24, %v42, 0.0
  %46 = vadd.xlane.f32.xlu0 %v45
  %v47 = vpop.xlane.xlu0 %46
  %v48 = vsel %vm24, %v43, 0.0
  %49 = vadd.xlane.f32.xlu0 %v48
  %v50 = vpop.xlane.xlu0 %49
  %v51 = vsel %vm31, %v44, 0.0
  %52 = vadd.xlane.f32.xlu0 %v51
  %v53 = vpop.xlane.xlu0 %52
  %v54 = vmul.f32 %v47, %v35
  %v55 = vmul.f32 %v50, %v35
  %v56 = vmul.f32 %v53, %v35
  %v57 = vadd.f32 %v54, 1e-06
  %v58 = vadd.f32 %v55, 1e-06
  %v59 = vadd.f32 %v56, 1e-06
  %v60 = vrsqrt.pop %v57
  %v61 = vrsqrt.pop %v58
  %v62 = vrsqrt.pop %v59
  %v63 = vmul.f32 %v39, %v60
  %v64 = vmul.f32 %v40, %v61
  %v65 = vmul.f32 %v41, %v62
  %v66 = vld [vmem:[%s3] sm:$0x1]
  %v68 = vlaneseq
  %v69 = vshrl.u32 %v68, 7
  %v70 = vsub.s32 0, %v69
  %v71 = vrot.slane %v66, %v70
  %v73 = vmul.f32 %v63, %v71
  %v74 = vmul.f32 %v64, %v71
  %v75 = vmul.f32 %v65, %v71
  %v76 = vld [vmem:[%s4] sm:$0x1]
  %v78 = vlaneseq
  %v79 = vshrl.u32 %v78, 7
  %v80 = vsub.s32 0, %v79
  %v81 = vrot.slane %v76, %v80
  %v83 = vadd.f32 %v73, %v81
  %v84 = vadd.f32 %v74, %v81
  %v85 = vadd.f32 %v75, %v81
  %v86 = vpack.c.bf16 %v84, %v83
  %v87 = vpack.c.bf16 %v85, %v85
  %v88 = vld [vmem:[%s1] sm:$0xf]
  %v89 = vld [vmem:[%s1 + $0x4] sm:$0xf]
  %v90 = vld [vmem:[%s1 + $0x8] sm:$0xf]
  %v91 = vld [vmem:[%s1 + $0xc] sm:$0xf]
  %v92 = vld [vmem:[%s2] sm:$0x1]
  %v94 = vlaneseq
  %v95 = vshrl.u32 %v94, 7
  %v96 = vsub.s32 0, %v95
  %v97 = vrot.slane %v92, %v96
  %v103 = vunpack.c.l.b16 %v88
  %v104 = vunpack.c.l.b16 %v89
  %v105 = vunpack.c.l.b16 %v90
  %v106 = vunpack.c.l.b16 %v91
  %v107 = vpack.c.b16 %v104, %v103
  %v108 = vpack.c.b16 %v106, %v105
  %v112 = vsel %vm24, %v86, 0
  %v115 = vsel %vm24, %v87, 0
  %117 = vmatprep.subr.bf16.mxu0 0
  %118 = vmatpush1.bf16.msra.mxu0 %v107
  %119 = vmatprep.subr.bf16.mxu0 0
  %120 = vmatpush1.bf16.msra.mxu0 %v108
  %121 = vmatprep.subr.bf16.mxu0 0
  %122 = vmatpush1.bf16.msra.mxu0 0
  %123 = vmatprep.subr.bf16.mxu0 0
  %124 = vmatpush1.bf16.msra.mxu0 0
  %125 = vmatprep.subr.bf16.mxu0 0
  %126 = vmatpush1.bf16.msra.mxu0 0
  %127 = vmatprep.subr.bf16.mxu0 0
  %128 = vmatpush1.bf16.msra.mxu0 0
  %129 = vmatprep.subr.bf16.mxu0 0
  %130 = vmatpush1.bf16.msra.mxu0 0
  %131 = vmatprep.subr.bf16.mxu0 0
  %132 = vmatpush1.bf16.msra.mxu0 0
  %133 = vmatprep.subr.bf16.mxu0 0
  %134 = vmatpush1.bf16.msra.mxu0 0
  %135 = vmatprep.subr.bf16.mxu0 0
  %136 = vmatpush1.bf16.msra.mxu0 0
  %137 = vmatprep.subr.bf16.mxu0 0
  %138 = vmatpush1.bf16.msra.mxu0 0
  %139 = vmatprep.subr.bf16.mxu0 0
  %140 = vmatpush1.bf16.msra.mxu0 0
  %141 = vmatprep.subr.bf16.mxu0 0
  %142 = vmatpush1.bf16.msra.mxu0 0
  %143 = vmatprep.subr.bf16.mxu0 0
  %144 = vmatpush1.bf16.msra.mxu0 0
  %145 = vmatprep.subr.bf16.mxu0 0
  %146 = vmatpush1.bf16.msra.mxu0 0
  %147 = vmatprep.subr.bf16.mxu0 0
  %148 = vmatpush1.bf16.msra.mxu0 0
  %149 = vmatprep.mubr.bf16.mxu0 0
  %150 = vmatmul.mubr.bf16.gmra.mrb[0].mxu0 %v112
  %v151 = vpop.f32.mrb[0].mxu0
  %v152 = vadd.f32 %v97, %v151
  %v153 = vpop.f32.mrb[0].mxu0
  %v154 = vpop.f32.mrb[0].mxu0
  %v155 = vadd.f32 %v97, %v154
  %v156 = vpop.f32.mrb[0].mxu0
  %157 = vmatprep.mubr.bf16.mxu0 0
  %158 = vmatmul.mubr.bf16.gmra.mrb[0].mxu0 %v115
  %v159 = vpop.f32.mrb[0].mxu0
  %v160 = vadd.f32 %v97, %v159
  %v161 = vpop.f32.mrb[0].mxu0
  %v162 = vpop.f32.mrb[0].mxu0
  %v163 = vpop.f32.mrb[0].mxu0
  %164 = vdwg.mxu0
  %v165 = vmul.f32 %v152, %v152
  %v166 = vmul.f32 %v155, %v155
  %v167 = vmul.f32 %v160, %v160
  %v168 = vmul.f32 %v152, %v165
  %v169 = vmul.f32 %v155, %v166
  %v170 = vmul.f32 %v160, %v167
  %v171 = vmul.f32 %v168, 0.044715
  %v172 = vmul.f32 %v169, 0.044715
  %v173 = vmul.f32 %v170, 0.044715
  %v174 = vadd.f32 %v152, %v171
  %v175 = vadd.f32 %v155, %v172
  %v176 = vadd.f32 %v160, %v173
  %v177 = vmul.f32 %v174, 0.7978846
  %v178 = vmul.f32 %v175, 0.7978846
  %v179 = vmul.f32 %v176, 0.7978846
  %v180 = vtanh.pop %v177
  %v181 = vtanh.pop %v178
  %v182 = vtanh.pop %v179
  %v183 = vadd.f32 %v180, 1.0
  %v184 = vadd.f32 %v181, 1.0
  %v185 = vadd.f32 %v182, 1.0
  %v186 = vmul.f32 %v183, 0.5
  %v187 = vmul.f32 %v184, 0.5
  %v188 = vmul.f32 %v185, 0.5
  %v189 = vmul.f32 %v152, %v186
  %v190 = vmul.f32 %v155, %v187
  %v191 = vmul.f32 %v160, %v188
  %v192 = vpack.c.bf16 %v190, %v189
  %v193 = vpack.c.bf16 %v191, %v191
  %v196 = vunpack.c.l.b16 %v192
  %v197 = vunpack.c.h.b16 %v192
  %v198 = vunpack.c.l.b16 %v193
  %v199 = vpack.c.b16 %v196, %v196
  %v200 = vpack.c.b16 %v197, %v197
  %v201 = vpack.c.b16 %v198, %v198
  %205 = vst [vmem:[%s5] sm:$0xf] %v199
  %206 = vst [vmem:[%s5 + $0x4] sm:$0xf] %v200
  %207 = vst [vmem:[%s5 + $0x8] sm:$0x1] %v201
  // Predicated region
  $region22: #{_lambda_.31} parent=0 // pred_check
    _
  $region23: #{_lambda_.31} parent=0 // pred_check_branch
    %209 = sbr.rel (0) target = $region25
  $region24: #{_lambda_.31} parent=0 // pred_region
    _
  $region25: #{_lambda_.31} parent=0 // pred_fallthru
    _
  // Predicated region
  $region26: #{_lambda_.31} parent=0 // pred_check
    _
  $region27: #{_lambda_.31} parent=0 // pred_check_branch
    %211 = sbr.rel (0) target = $region29
  $region28: #{_lambda_.31} parent=0 // pred_region
    _
  $region29: #{_lambda_.31} parent=0 // pred_fallthru
    _

// kernel: _lambda_.32
$region0: #{_lambda_.32}
  #allocation0 [shape = 'u32[]', space=smem, size = 0x4, offset = 0x4, fixed_abs, tag = 'smem constant byte address 0x4 - core index']
  #allocation1 [shape = 'u32[144,128]{1,0:T(1,128)}', space=vmem, size = 0x12000, scoped, tag = 'internal scratch']
  %s0 = inlined_call_operand.vmem [shape: bf16[18,128], index: 0, kind: input, shape index: {}]
  %s1 = inlined_call_operand.vmem [shape: bf16[128,32], index: 1, kind: input, shape index: {}]
  %s2 = inlined_call_operand.vmem [shape: f32[1,32], index: 2, kind: input, shape index: {}]
  %s3 = inlined_call_operand.vmem [shape: f32[18,32], index: 3, kind: input, shape index: {}]
  %s4 = inlined_call_operand.vmem [shape: f32[18,32], index: 4, kind: output, shape index: {}]
  %s5 = sld [smem:[#allocation0]]
  $region26: #{_lambda_.32} parent=0
    _
  %s7 = ssub.s32 1, %s5
  %s8 = scalar_select 0, %s7, %s5
  // Predicated region
  $region2: #{_lambda_.32} parent=0 // pred_check
    _
  $region3: #{_lambda_.32} parent=0 // pred_check_branch
    %10 = sbr.rel (0) target = $region5
  $region4: #{_lambda_.32} parent=0 // pred_region
    _
  $region5: #{_lambda_.32} parent=0 // pred_fallthru
    _
  // Predicated region
  $region6: #{_lambda_.32} parent=0 // pred_check
    _
  $region7: #{_lambda_.32} parent=0 // pred_check_branch
    %12 = sbr.rel (0) target = $region9
  $region8: #{_lambda_.32} parent=0 // pred_region
    _
  $region9: #{_lambda_.32} parent=0 // pred_fallthru
    _
  // Predicated region
  $region10: #{_lambda_.32} parent=0 // pred_check
    _
  $region11: #{_lambda_.32} parent=0 // pred_check_branch
    %14 = sbr.rel (0) target = $region13
  $region12: #{_lambda_.32} parent=0 // pred_region
    _
  $region13: #{_lambda_.32} parent=0 // pred_fallthru
    _
  // Predicated region
  $region14: #{_lambda_.32} parent=0 // pred_check
    _
  $region15: #{_lambda_.32} parent=0 // pred_check_branch
    %16 = sbr.rel (0) target = $region17
  $region16: #{_lambda_.32} parent=0 // pred_region
    _
  $region17: #{_lambda_.32} parent=0 // pred_fallthru
    _
  %v18 = vld [vmem:[%s0] sm:$0xf]
  %v19 = vld [vmem:[%s0 + $0x4] sm:$0xf]
  %v20 = vld [vmem:[%s0 + $0x8] sm:$0x1]
  %v21 = vld [vmem:[%s1] sm:$0xf]
  %v22 = vld [vmem:[%s1 + $0x4] sm:$0xf]
  %v23 = vld [vmem:[%s1 + $0x8] sm:$0xf]
  %v24 = vld [vmem:[%s1 + $0xc] sm:$0xf]
  %v25 = vld [vmem:[%s1 + $0x10] sm:$0xf]
  %v26 = vld [vmem:[%s1 + $0x14] sm:$0xf]
  %v27 = vld [vmem:[%s1 + $0x18] sm:$0xf]
  %v28 = vld [vmem:[%s1 + $0x1c] sm:$0xf]
  %v29 = vld [vmem:[%s1 + $0x20] sm:$0xf]
  %v30 = vld [vmem:[%s1 + $0x24] sm:$0xf]
  %v31 = vld [vmem:[%s1 + $0x28] sm:$0xf]
  %v32 = vld [vmem:[%s1 + $0x2c] sm:$0xf]
  %v33 = vld [vmem:[%s1 + $0x30] sm:$0xf]
  %v34 = vld [vmem:[%s1 + $0x34] sm:$0xf]
  %v35 = vld [vmem:[%s1 + $0x38] sm:$0xf]
  %v36 = vld [vmem:[%s1 + $0x3c] sm:$0xf]
  %v37 = vld [vmem:[%s2] sm:$0x1]
  %v39 = vlaneseq
  %v40 = vshrl.u32 %v39, 7
  %v41 = vsub.s32 0, %v40
  %v42 = vrot.slane %v37, %v41
  %v47 = vunpack.c.l.b16 %v18
  %v48 = vunpack.c.l.b16 %v19
  %v49 = vunpack.c.l.b16 %v20
  %v50 = vpack.c.b16 %v48, %v47
  %v51 = vpack.c.b16 %v49, %v49
  %v70 = vunpack.c.l.b16 %v21
  %v71 = vunpack.c.l.b16 %v22
  %v72 = vunpack.c.l.b16 %v23
  %v73 = vunpack.c.l.b16 %v24
  %v74 = vunpack.c.l.b16 %v25
  %v75 = vunpack.c.l.b16 %v26
  %v76 = vunpack.c.l.b16 %v27
  %v77 = vunpack.c.l.b16 %v28
  %v78 = vunpack.c.l.b16 %v29
  %v79 = vunpack.c.l.b16 %v30
  %v80 = vunpack.c.l.b16 %v31
  %v81 = vunpack.c.l.b16 %v32
  %v82 = vunpack.c.l.b16 %v33
  %v83 = vunpack.c.l.b16 %v34
  %v84 = vunpack.c.l.b16 %v35
  %v85 = vunpack.c.l.b16 %v36
  %v86 = vpack.c.b16 %v71, %v70
  %v87 = vpack.c.b16 %v73, %v72
  %v88 = vpack.c.b16 %v75, %v74
  %v89 = vpack.c.b16 %v77, %v76
  %v90 = vpack.c.b16 %v79, %v78
  %v91 = vpack.c.b16 %v81, %v80
  %v92 = vpack.c.b16 %v83, %v82
  %v93 = vpack.c.b16 %v85, %v84
  %102 = vmatprep.subr.bf16.mxu0 0
  %103 = vmatpush1.bf16.msra.mxu0 %v86
  %104 = vmatprep.subr.bf16.mxu0 0
  %105 = vmatpush1.bf16.msra.mxu0 %v87
  %106 = vmatprep.subr.bf16.mxu0 0
  %107 = vmatpush1.bf16.msra.mxu0 %v88
  %108 = vmatprep.subr.bf16.mxu0 0
  %109 = vmatpush1.bf16.msra.mxu0 %v89
  %110 = vmatprep.subr.bf16.mxu0 0
  %111 = vmatpush1.bf16.msra.mxu0 %v90
  %112 = vmatprep.subr.bf16.mxu0 0
  %113 = vmatpush1.bf16.msra.mxu0 %v91
  %114 = vmatprep.subr.bf16.mxu0 0
  %115 = vmatpush1.bf16.msra.mxu0 %v92
  %116 = vmatprep.subr.bf16.mxu0 0
  %117 = vmatpush1.bf16.msra.mxu0 %v93
  %118 = vmatprep.subr.bf16.mxu0 0
  %119 = vmatpush1.bf16.msra.mxu0 0
  %120 = vmatprep.subr.bf16.mxu0 0
  %121 = vmatpush1.bf16.msra.mxu0 0
  %122 = vmatprep.subr.bf16.mxu0 0
  %123 = vmatpush1.bf16.msra.mxu0 0
  %124 = vmatprep.subr.bf16.mxu0 0
  %125 = vmatpush1.bf16.msra.mxu0 0
  %126 = vmatprep.subr.bf16.mxu0 0
  %127 = vmatpush1.bf16.msra.mxu0 0
  %128 = vmatprep.subr.bf16.mxu0 0
  %129 = vmatpush1.bf16.msra.mxu0 0
  %130 = vmatprep.subr.bf16.mxu0 0
  %131 = vmatpush1.bf16.msra.mxu0 0
  %132 = vmatprep.subr.bf16.mxu0 0
  %133 = vmatpush1.bf16.msra.mxu0 0
  %134 = vmatprep.mubr.bf16.mxu0 0
  %135 = vmatmul.mubr.bf16.gmra.mrb[0].mxu0 %v50
  %v136 = vpop.f32.mrb[0].mxu0
  %v137 = vadd.f32 %v42, %v136
  %v138 = vpop.f32.mrb[0].mxu0
  %v139 = vpop.f32.mrb[0].mxu0
  %v140 = vadd.f32 %v42, %v139
  %v141 = vpop.f32.mrb[0].mxu0
  %142 = vmatprep.mubr.bf16.mxu0 0
  %143 = vmatmul.mubr.bf16.gmra.mrb[0].mxu0 %v51
  %v144 = vpop.f32.mrb[0].mxu0
  %v145 = vadd.f32 %v42, %v144
  %v146 = vpop.f32.mrb[0].mxu0
  %v147 = vpop.f32.mrb[0].mxu0
  %v148 = vpop.f32.mrb[0].mxu0
  %149 = vdwg.mxu0
  %v150 = vld [vmem:[%s3] sm:$0xff]
  %v151 = vld [vmem:[%s3 + $0x8] sm:$0xff]
  %v152 = vld [vmem:[%s3 + $0x10] sm:$0x3]
  %v153 = vadd.f32 %v137, %v150
  %v154 = vadd.f32 %v140, %v151
  %v155 = vadd.f32 %v145, %v152
  %vm156 = vcmask 261120
  %157 = vst.msk [vmem:[%s4] sm:$0xff] %vm156, %v153
  %158 = vst.msk [vmem:[%s4 + $0x8] sm:$0xff] %vm156, %v154
  %vm159 = vcmask 254976
  %160 = vst.msk [vmem:[%s4 + $0x10] sm:$0x3] %vm159, %v155
  // Predicated region
  $region18: #{_lambda_.32} parent=0 // pred_check
    _
  $region19: #{_lambda_.32} parent=0 // pred_check_branch
    %162 = sbr.rel (0) target = $region21
  $region20: #{_lambda_.32} parent=0 // pred_region
    _
  $region21: #{_lambda_.32} parent=0 // pred_fallthru
    _
  // Predicated region
  $region22: #{_lambda_.32} parent=0 // pred_check
    _
  $region23: #{_lambda_.32} parent=0 // pred_check_branch
    %164 = sbr.rel (0) target = $region25
  $region24: #{_lambda_.32} parent=0 // pred_region
    _
  $region25: #{_lambda_.32} parent=0 // pred_fallthru
    _

// kernel: _lambda_.38
$region0: #{_lambda_.38}
  #allocation0 [shape = 'u32[]', space=smem, size = 0x4, offset = 0x4, fixed_abs, tag = 'smem constant byte address 0x4 - core index']
  #allocation1 [shape = 'u32[144,128]{1,0:T(1,128)}', space=vmem, size = 0x12000, scoped, tag = 'internal scratch']
  %s0 = inlined_call_operand.vmem [shape: f32[18,32], index: 0, kind: input, shape index: {}]
  %s1 = inlined_call_operand.vmem [shape: f32[1,32], index: 1, kind: input, shape index: {}]
  %s2 = inlined_call_operand.vmem [shape: f32[1,32], index: 2, kind: input, shape index: {}]
  %s3 = inlined_call_operand.vmem [shape: f32[18,32], index: 3, kind: output, shape index: {}]
  %s4 = sld [smem:[#allocation0]]
  $region22: #{_lambda_.38} parent=0
    _
  %s6 = ssub.s32 1, %s4
  %s7 = scalar_select 0, %s6, %s4
  // Predicated region
  $region2: #{_lambda_.38} parent=0 // pred_check
    _
  $region3: #{_lambda_.38} parent=0 // pred_check_branch
    %9 = sbr.rel (0) target = $region5
  $region4: #{_lambda_.38} parent=0 // pred_region
    _
  $region5: #{_lambda_.38} parent=0 // pred_fallthru
    _
  // Predicated region
  $region6: #{_lambda_.38} parent=0 // pred_check
    _
  $region7: #{_lambda_.38} parent=0 // pred_check_branch
    %11 = sbr.rel (0) target = $region9
  $region8: #{_lambda_.38} parent=0 // pred_region
    _
  $region9: #{_lambda_.38} parent=0 // pred_fallthru
    _
  // Predicated region
  $region10: #{_lambda_.38} parent=0 // pred_check
    _
  $region11: #{_lambda_.38} parent=0 // pred_check_branch
    %13 = sbr.rel (0) target = $region13
  $region12: #{_lambda_.38} parent=0 // pred_region
    _
  $region13: #{_lambda_.38} parent=0 // pred_fallthru
    _
  %v14 = vld [vmem:[%s0] sm:$0xff]
  %v15 = vld [vmem:[%s0 + $0x8] sm:$0xff]
  %v16 = vld [vmem:[%s0 + $0x10] sm:$0x3]
  %vm17 = vcmask 261120
  %v18 = vsel %vm17, %v14, 0.0
  %19 = vadd.xlane.f32.xlu0 %v18
  %v20 = vpop.xlane.xlu0 %19
  %v21 = vsel %vm17, %v15, 0.0
  %22 = vadd.xlane.f32.xlu0 %v21
  %v23 = vpop.xlane.xlu0 %22
  %vm24 = vcmask 254976
  %v25 = vsel %vm24, %v16, 0.0
  %26 = vadd.xlane.f32.xlu0 %v25
  %v27 = vpop.xlane.xlu0 %26
  %v28 = vrcp.pop 32.0
  %v29 = vmul.f32 %v20, %v28
  %v30 = vmul.f32 %v23, %v28
  %v31 = vmul.f32 %v27, %v28
  %v32 = vsub.f32 %v14, %v29
  %v33 = vsub.f32 %v15, %v30
  %v34 = vsub.f32 %v16, %v31
  %v35 = vmul.f32 %v32, %v32
  %v36 = vmul.f32 %v33, %v33
  %v37 = vmul.f32 %v34, %v34
  %v38 = vsel %vm17, %v35, 0.0
  %39 = vadd.xlane.f32.xlu0 %v38
  %v40 = vpop.xlane.xlu0 %39
  %v41 = vsel %vm17, %v36, 0.0
  %42 = vadd.xlane.f32.xlu0 %v41
  %v43 = vpop.xlane.xlu0 %42
  %v44 = vsel %vm24, %v37, 0.0
  %45 = vadd.xlane.f32.xlu0 %v44
  %v46 = vpop.xlane.xlu0 %45
  %v47 = vmul.f32 %v40, %v28
  %v48 = vmul.f32 %v43, %v28
  %v49 = vmul.f32 %v46, %v28
  %v50 = vadd.f32 %v47, 1e-06
  %v51 = vadd.f32 %v48, 1e-06
  %v52 = vadd.f32 %v49, 1e-06
  %v53 = vrsqrt.pop %v50
  %v54 = vrsqrt.pop %v51
  %v55 = vrsqrt.pop %v52
  %v56 = vmul.f32 %v32, %v53
  %v57 = vmul.f32 %v33, %v54
  %v58 = vmul.f32 %v34, %v55
  %v59 = vld [vmem:[%s1] sm:$0x1]
  %v61 = vlaneseq
  %v62 = vshrl.u32 %v61, 7
  %v63 = vsub.s32 0, %v62
  %v64 = vrot.slane %v59, %v63
  %v66 = vmul.f32 %v56, %v64
  %v67 = vmul.f32 %v57, %v64
  %v68 = vmul.f32 %v58, %v64
  %v69 = vld [vmem:[%s2] sm:$0x1]
  %v71 = vlaneseq
  %v72 = vshrl.u32 %v71, 7
  %v73 = vsub.s32 0, %v72
  %v74 = vrot.slane %v69, %v73
  %v76 = vadd.f32 %v66, %v74
  %v77 = vadd.f32 %v67, %v74
  %v78 = vadd.f32 %v68, %v74
  %79 = vst.msk [vmem:[%s3] sm:$0xff] %vm17, %v76
  %80 = vst.msk [vmem:[%s3 + $0x8] sm:$0xff] %vm17, %v77
  %81 = vst.msk [vmem:[%s3 + $0x10] sm:$0x3] %vm24, %v78
  // Predicated region
  $region14: #{_lambda_.38} parent=0 // pred_check
    _
  $region15: #{_lambda_.38} parent=0 // pred_check_branch
    %83 = sbr.rel (0) target = $region17
  $region16: #{_lambda_.38} parent=0 // pred_region
    _
  $region17: #{_lambda_.38} parent=0 // pred_fallthru
    _
  // Predicated region
  $region18: #{_lambda_.38} parent=0 // pred_check
    _
  $region19: #{_lambda_.38} parent=0 // pred_check_branch
    %85 = sbr.rel (0) target = $region21
  $region20: #{_lambda_.38} parent=0 // pred_region
    _
  $region21: #{_lambda_.38} parent=0 // pred_fallthru
    _

// kernel: _lambda_.39
$region0: #{_lambda_.39}
  #allocation0 [shape = 'u32[]', space=smem, size = 0x4, offset = 0x4, fixed_abs, tag = 'smem constant byte address 0x4 - core index']
  #allocation1 [shape = 'u32[144,128]{1,0:T(1,128)}', space=vmem, size = 0x12000, scoped, tag = 'internal scratch']
  %s0 = inlined_call_operand.vmem [shape: f32[18,32], index: 0, kind: input, shape index: {}]
  %s1 = inlined_call_operand.vmem [shape: bf16[32,32], index: 1, kind: input, shape index: {}]
  %s2 = inlined_call_operand.vmem [shape: f32[1,32], index: 2, kind: input, shape index: {}]
  %s3 = inlined_call_operand.vmem [shape: f32[18,32], index: 3, kind: output, shape index: {}]
  %s4 = sld [smem:[#allocation0]]
  $region22: #{_lambda_.39} parent=0
    _
  %s6 = ssub.s32 1, %s4
  %s7 = scalar_select 0, %s6, %s4
  // Predicated region
  $region2: #{_lambda_.39} parent=0 // pred_check
    _
  $region3: #{_lambda_.39} parent=0 // pred_check_branch
    %9 = sbr.rel (0) target = $region5
  $region4: #{_lambda_.39} parent=0 // pred_region
    _
  $region5: #{_lambda_.39} parent=0 // pred_fallthru
    _
  // Predicated region
  $region6: #{_lambda_.39} parent=0 // pred_check
    _
  $region7: #{_lambda_.39} parent=0 // pred_check_branch
    %11 = sbr.rel (0) target = $region9
  $region8: #{_lambda_.39} parent=0 // pred_region
    _
  $region9: #{_lambda_.39} parent=0 // pred_fallthru
    _
  // Predicated region
  $region10: #{_lambda_.39} parent=0 // pred_check
    _
  $region11: #{_lambda_.39} parent=0 // pred_check_branch
    %13 = sbr.rel (0) target = $region13
  $region12: #{_lambda_.39} parent=0 // pred_region
    _
  $region13: #{_lambda_.39} parent=0 // pred_fallthru
    _
  %v15 = vld [vmem:[%s0] sm:$0xff]
  %v16 = vld [vmem:[%s0 + $0x8] sm:$0xff]
  %v17 = vld [vmem:[%s0 + $0x10] sm:$0x3]
  %v18 = vpack.c.bf16 %v16, %v15
  %v19 = vpack.c.bf16 %v17, %v17
  %v20 = vld [vmem:[%s1] sm:$0xf]
  %v21 = vld [vmem:[%s1 + $0x4] sm:$0xf]
  %v22 = vld [vmem:[%s1 + $0x8] sm:$0xf]
  %v23 = vld [vmem:[%s1 + $0xc] sm:$0xf]
  %v24 = vld [vmem:[%s2] sm:$0x1]
  %v26 = vlaneseq
  %v27 = vshrl.u32 %v26, 7
  %v28 = vsub.s32 0, %v27
  %v29 = vrot.slane %v24, %v28
  %v35 = vunpack.c.l.b16 %v20
  %v36 = vunpack.c.l.b16 %v21
  %v37 = vunpack.c.l.b16 %v22
  %v38 = vunpack.c.l.b16 %v23
  %v39 = vpack.c.b16 %v36, %v35
  %v40 = vpack.c.b16 %v38, %v37
  %vm43 = vcmask 261120
  %v45 = vsel %vm43, %v18, 0
  %v48 = vsel %vm43, %v19, 0
  %50 = vmatprep.subr.bf16.mxu0 0
  %51 = vmatpush1.bf16.msra.mxu0 %v39
  %52 = vmatprep.subr.bf16.mxu0 0
  %53 = vmatpush1.bf16.msra.mxu0 %v40
  %54 = vmatprep.subr.bf16.mxu0 0
  %55 = vmatpush1.bf16.msra.mxu0 0
  %56 = vmatprep.subr.bf16.mxu0 0
  %57 = vmatpush1.bf16.msra.mxu0 0
  %58 = vmatprep.subr.bf16.mxu0 0
  %59 = vmatpush1.bf16.msra.mxu0 0
  %60 = vmatprep.subr.bf16.mxu0 0
  %61 = vmatpush1.bf16.msra.mxu0 0
  %62 = vmatprep.subr.bf16.mxu0 0
  %63 = vmatpush1.bf16.msra.mxu0 0
  %64 = vmatprep.subr.bf16.mxu0 0
  %65 = vmatpush1.bf16.msra.mxu0 0
  %66 = vmatprep.subr.bf16.mxu0 0
  %67 = vmatpush1.bf16.msra.mxu0 0
  %68 = vmatprep.subr.bf16.mxu0 0
  %69 = vmatpush1.bf16.msra.mxu0 0
  %70 = vmatprep.subr.bf16.mxu0 0
  %71 = vmatpush1.bf16.msra.mxu0 0
  %72 = vmatprep.subr.bf16.mxu0 0
  %73 = vmatpush1.bf16.msra.mxu0 0
  %74 = vmatprep.subr.bf16.mxu0 0
  %75 = vmatpush1.bf16.msra.mxu0 0
  %76 = vmatprep.subr.bf16.mxu0 0
  %77 = vmatpush1.bf16.msra.mxu0 0
  %78 = vmatprep.subr.bf16.mxu0 0
  %79 = vmatpush1.bf16.msra.mxu0 0
  %80 = vmatprep.subr.bf16.mxu0 0
  %81 = vmatpush1.bf16.msra.mxu0 0
  %82 = vmatprep.mubr.bf16.mxu0 0
  %83 = vmatmul.mubr.bf16.gmra.mrb[0].mxu0 %v45
  %v84 = vpop.f32.mrb[0].mxu0
  %v85 = vadd.f32 %v29, %v84
  %v86 = vpop.f32.mrb[0].mxu0
  %v87 = vpop.f32.mrb[0].mxu0
  %v88 = vadd.f32 %v29, %v87
  %v89 = vpop.f32.mrb[0].mxu0
  %90 = vmatprep.mubr.bf16.mxu0 0
  %91 = vmatmul.mubr.bf16.gmra.mrb[0].mxu0 %v48
  %v92 = vpop.f32.mrb[0].mxu0
  %v93 = vadd.f32 %v29, %v92
  %v94 = vpop.f32.mrb[0].mxu0
  %v95 = vpop.f32.mrb[0].mxu0
  %v96 = vpop.f32.mrb[0].mxu0
  %97 = vdwg.mxu0
  %98 = vst.msk [vmem:[%s3] sm:$0xff] %vm43, %v85
  %99 = vst.msk [vmem:[%s3 + $0x8] sm:$0xff] %vm43, %v88
  %vm100 = vcmask 254976
  %101 = vst.msk [vmem:[%s3 + $0x10] sm:$0x3] %vm100, %v93
  // Predicated region
  $region14: #{_lambda_.39} parent=0 // pred_check
    _
  $region15: #{_lambda_.39} parent=0 // pred_check_branch
    %103 = sbr.rel (0) target = $region17
  $region16: #{_lambda_.39} parent=0 // pred_region
    _
  $region17: #{_lambda_.39} parent=0 // pred_fallthru
    _
  // Predicated region
  $region18: #{_lambda_.39} parent=0 // pred_check
    _
  $region19: #{_lambda_.39} parent=0 // pred_check_branch
    %105 = sbr.rel (0) target = $region21
  $region20: #{_lambda_.39} parent=0 // pred_region
    _
  $region21: #{_lambda_.39} parent=0 // pred_fallthru
    _

// kernel: _lambda_.40
$region0: #{_lambda_.40}
  #allocation0 [shape = 'u32[]', space=smem, size = 0x4, offset = 0x4, fixed_abs, tag = 'smem constant byte address 0x4 - core index']
  #allocation1 [shape = 'u32[144,128]{1,0:T(1,128)}', space=vmem, size = 0x12000, scoped, tag = 'internal scratch']
  %s0 = inlined_call_operand.vmem [shape: f32[34,32], index: 0, kind: input, shape index: {}]
  %s1 = inlined_call_operand.vmem [shape: bf16[32,96], index: 1, kind: input, shape index: {}]
  %s2 = inlined_call_operand.vmem [shape: f32[1,96], index: 2, kind: input, shape index: {}]
  %s3 = inlined_call_operand.vmem [shape: f32[1,32], index: 3, kind: input, shape index: {}]
  %s4 = inlined_call_operand.vmem [shape: f32[1,32], index: 4, kind: input, shape index: {}]
  %s5 = inlined_call_operand.vmem [shape: bf16[34,96], index: 5, kind: output, shape index: {}]
  %s6 = sld [smem:[#allocation0]]
  $region30: #{_lambda_.40} parent=0
    _
  %s8 = ssub.s32 1, %s6
  %s9 = scalar_select 0, %s8, %s6
  // Predicated region
  $region2: #{_lambda_.40} parent=0 // pred_check
    _
  $region3: #{_lambda_.40} parent=0 // pred_check_branch
    %11 = sbr.rel (0) target = $region5
  $region4: #{_lambda_.40} parent=0 // pred_region
    _
  $region5: #{_lambda_.40} parent=0 // pred_fallthru
    _
  // Predicated region
  $region6: #{_lambda_.40} parent=0 // pred_check
    _
  $region7: #{_lambda_.40} parent=0 // pred_check_branch
    %13 = sbr.rel (0) target = $region9
  $region8: #{_lambda_.40} parent=0 // pred_region
    _
  $region9: #{_lambda_.40} parent=0 // pred_fallthru
    _
  // Predicated region
  $region10: #{_lambda_.40} parent=0 // pred_check
    _
  $region11: #{_lambda_.40} parent=0 // pred_check_branch
    %15 = sbr.rel (0) target = $region13
  $region12: #{_lambda_.40} parent=0 // pred_region
    _
  $region13: #{_lambda_.40} parent=0 // pred_fallthru
    _
  // Predicated region
  $region14: #{_lambda_.40} parent=0 // pred_check
    _
  $region15: #{_lambda_.40} parent=0 // pred_check_branch
    %17 = sbr.rel (0) target = $region17
  $region16: #{_lambda_.40} parent=0 // pred_region
    _
  $region17: #{_lambda_.40} parent=0 // pred_fallthru
    _
  // Predicated region
  $region18: #{_lambda_.40} parent=0 // pred_check
    _
  $region19: #{_lambda_.40} parent=0 // pred_check_branch
    %19 = sbr.rel (0) target = $region21
  $region20: #{_lambda_.40} parent=0 // pred_region
    _
  $region21: #{_lambda_.40} parent=0 // pred_fallthru
    _
  %v21 = vld [vmem:[%s0] sm:$0xff]
  %v22 = vld [vmem:[%s0 + $0x8] sm:$0xff]
  %v23 = vld [vmem:[%s0 + $0x10] sm:$0xff]
  %v24 = vld [vmem:[%s0 + $0x18] sm:$0xff]
  %v25 = vld [vmem:[%s0 + $0x20] sm:$0x3]
  %vm26 = vcmask 261120
  %v27 = vsel %vm26, %v21, 0.0
  %28 = vadd.xlane.f32.xlu0 %v27
  %v29 = vpop.xlane.xlu0 %28
  %v30 = vsel %vm26, %v22, 0.0
  %31 = vadd.xlane.f32.xlu0 %v30
  %v32 = vpop.xlane.xlu0 %31
  %v33 = vsel %vm26, %v23, 0.0
  %34 = vadd.xlane.f32.xlu0 %v33
  %v35 = vpop.xlane.xlu0 %34
  %v36 = vsel %vm26, %v24, 0.0
  %37 = vadd.xlane.f32.xlu0 %v36
  %v38 = vpop.xlane.xlu0 %37
  %vm39 = vcmask 254976
  %v40 = vsel %vm39, %v25, 0.0
  %41 = vadd.xlane.f32.xlu0 %v40
  %v42 = vpop.xlane.xlu0 %41
  %v43 = vrcp.pop 32.0
  %v44 = vmul.f32 %v29, %v43
  %v45 = vmul.f32 %v32, %v43
  %v46 = vmul.f32 %v35, %v43
  %v47 = vmul.f32 %v38, %v43
  %v48 = vmul.f32 %v42, %v43
  %v49 = vsub.f32 %v21, %v44
  %v50 = vsub.f32 %v22, %v45
  %v51 = vsub.f32 %v23, %v46
  %v52 = vsub.f32 %v24, %v47
  %v53 = vsub.f32 %v25, %v48
  %v54 = vmul.f32 %v49, %v49
  %v55 = vmul.f32 %v50, %v50
  %v56 = vmul.f32 %v51, %v51
  %v57 = vmul.f32 %v52, %v52
  %v58 = vmul.f32 %v53, %v53
  %v59 = vsel %vm26, %v54, 0.0
  %60 = vadd.xlane.f32.xlu0 %v59
  %v61 = vpop.xlane.xlu0 %60
  %v62 = vsel %vm26, %v55, 0.0
  %63 = vadd.xlane.f32.xlu0 %v62
  %v64 = vpop.xlane.xlu0 %63
  %v65 = vsel %vm26, %v56, 0.0
  %66 = vadd.xlane.f32.xlu0 %v65
  %v67 = vpop.xlane.xlu0 %66
  %v68 = vsel %vm26, %v57, 0.0
  %69 = vadd.xlane.f32.xlu0 %v68
  %v70 = vpop.xlane.xlu0 %69
  %v71 = vsel %vm39, %v58, 0.0
  %72 = vadd.xlane.f32.xlu0 %v71
  %v73 = vpop.xlane.xlu0 %72
  %v74 = vmul.f32 %v61, %v43
  %v75 = vmul.f32 %v64, %v43
  %v76 = vmul.f32 %v67, %v43
  %v77 = vmul.f32 %v70, %v43
  %v78 = vmul.f32 %v73, %v43
  %v79 = vadd.f32 %v74, 1e-06
  %v80 = vadd.f32 %v75, 1e-06
  %v81 = vadd.f32 %v76, 1e-06
  %v82 = vadd.f32 %v77, 1e-06
  %v83 = vadd.f32 %v78, 1e-06
  %v84 = vrsqrt.pop %v79
  %v85 = vrsqrt.pop %v80
  %v86 = vrsqrt.pop %v81
  %v87 = vrsqrt.pop %v82
  %v88 = vrsqrt.pop %v83
  %v89 = vmul.f32 %v49, %v84
  %v90 = vmul.f32 %v50, %v85
  %v91 = vmul.f32 %v51, %v86
  %v92 = vmul.f32 %v52, %v87
  %v93 = vmul.f32 %v53, %v88
  %v94 = vld [vmem:[%s3] sm:$0x1]
  %v96 = vlaneseq
  %v97 = vshrl.u32 %v96, 7
  %v98 = vsub.s32 0, %v97
  %v99 = vrot.slane %v94, %v98
  %v101 = vmul.f32 %v89, %v99
  %v102 = vmul.f32 %v90, %v99
  %v103 = vmul.f32 %v91, %v99
  %v104 = vmul.f32 %v92, %v99
  %v105 = vmul.f32 %v93, %v99
  %v106 = vld [vmem:[%s4] sm:$0x1]
  %v108 = vlaneseq
  %v109 = vshrl.u32 %v108, 7
  %v110 = vsub.s32 0, %v109
  %v111 = vrot.slane %v106, %v110
  %v113 = vadd.f32 %v101, %v111
  %v114 = vadd.f32 %v102, %v111
  %v115 = vadd.f32 %v103, %v111
  %v116 = vadd.f32 %v104, %v111
  %v117 = vadd.f32 %v105, %v111
  %v118 = vpack.c.bf16 %v114, %v113
  %v119 = vpack.c.bf16 %v116, %v115
  %v120 = vpack.c.bf16 %v117, %v117
  %v121 = vld [vmem:[%s1] sm:$0xf]
  %v122 = vld [vmem:[%s1 + $0x4] sm:$0xf]
  %v123 = vld [vmem:[%s1 + $0x8] sm:$0xf]
  %v124 = vld [vmem:[%s1 + $0xc] sm:$0xf]
  %v125 = vld [vmem:[%s2] sm:$0x1]
  %v127 = vlaneseq
  %v128 = vshrl.u32 %v127, 7
  %v129 = vsub.s32 0, %v128
  %v130 = vrot.slane %v125, %v129
  %v136 = vunpack.c.l.b16 %v121
  %v137 = vunpack.c.l.b16 %v122
  %v138 = vunpack.c.l.b16 %v123
  %v139 = vunpack.c.l.b16 %v124
  %v140 = vpack.c.b16 %v137, %v136
  %v141 = vpack.c.b16 %v139, %v138
  %v145 = vsel %vm26, %v118, 0
  %v148 = vsel %vm26, %v119, 0
  %v151 = vsel %vm26, %v120, 0
  %153 = vmatprep.subr.bf16.mxu0 0
  %154 = vmatpush1.bf16.msra.mxu0 %v140
  %155 = vmatprep.subr.bf16.mxu0 0
  %156 = vmatpush1.bf16.msra.mxu0 %v141
  %157 = vmatprep.subr.bf16.mxu0 0
  %158 = vmatpush1.bf16.msra.mxu0 0
  %159 = vmatprep.subr.bf16.mxu0 0
  %160 = vmatpush1.bf16.msra.mxu0 0
  %161 = vmatprep.subr.bf16.mxu0 0
  %162 = vmatpush1.bf16.msra.mxu0 0
  %163 = vmatprep.subr.bf16.mxu0 0
  %164 = vmatpush1.bf16.msra.mxu0 0
  %165 = vmatprep.subr.bf16.mxu0 0
  %166 = vmatpush1.bf16.msra.mxu0 0
  %167 = vmatprep.subr.bf16.mxu0 0
  %168 = vmatpush1.bf16.msra.mxu0 0
  %169 = vmatprep.subr.bf16.mxu0 0
  %170 = vmatpush1.bf16.msra.mxu0 0
  %171 = vmatprep.subr.bf16.mxu0 0
  %172 = vmatpush1.bf16.msra.mxu0 0
  %173 = vmatprep.subr.bf16.mxu0 0
  %174 = vmatpush1.bf16.msra.mxu0 0
  %175 = vmatprep.subr.bf16.mxu0 0
  %176 = vmatpush1.bf16.msra.mxu0 0
  %177 = vmatprep.subr.bf16.mxu0 0
  %178 = vmatpush1.bf16.msra.mxu0 0
  %179 = vmatprep.subr.bf16.mxu0 0
  %180 = vmatpush1.bf16.msra.mxu0 0
  %181 = vmatprep.subr.bf16.mxu0 0
  %182 = vmatpush1.bf16.msra.mxu0 0
  %183 = vmatprep.subr.bf16.mxu0 0
  %184 = vmatpush1.bf16.msra.mxu0 0
  %185 = vmatprep.mubr.bf16.mxu0 0
  %186 = vmatmul.mubr.bf16.gmra.mrb[0].mxu0 %v145
  %v187 = vpop.f32.mrb[0].mxu0
  %v188 = vadd.f32 %v130, %v187
  %v189 = vpop.f32.mrb[0].mxu0
  %v190 = vpop.f32.mrb[0].mxu0
  %v191 = vadd.f32 %v130, %v190
  %v192 = vpop.f32.mrb[0].mxu0
  %193 = vmatprep.mubr.bf16.mxu0 0
  %194 = vmatmul.mubr.bf16.gmra.mrb[0].mxu0 %v148
  %v195 = vpop.f32.mrb[0].mxu0
  %v196 = vadd.f32 %v130, %v195
  %v197 = vpop.f32.mrb[0].mxu0
  %v198 = vpop.f32.mrb[0].mxu0
  %v199 = vadd.f32 %v130, %v198
  %v200 = vpop.f32.mrb[0].mxu0
  %201 = vmatprep.mubr.bf16.mxu0 0
  %202 = vmatmul.mubr.bf16.gmra.mrb[0].mxu0 %v151
  %v203 = vpop.f32.mrb[0].mxu0
  %v204 = vadd.f32 %v130, %v203
  %v205 = vpop.f32.mrb[0].mxu0
  %v206 = vpop.f32.mrb[0].mxu0
  %v207 = vpop.f32.mrb[0].mxu0
  %208 = vdwg.mxu0
  %v209 = vpack.c.bf16 %v191, %v188
  %v210 = vpack.c.bf16 %v199, %v196
  %v211 = vpack.c.bf16 %v204, %v204
  %v215 = vunpack.c.l.b16 %v209
  %v216 = vunpack.c.h.b16 %v209
  %v217 = vunpack.c.l.b16 %v210
  %v218 = vunpack.c.h.b16 %v210
  %v219 = vunpack.c.l.b16 %v211
  %v220 = vpack.c.b16 %v215, %v215
  %v221 = vpack.c.b16 %v216, %v216
  %v222 = vpack.c.b16 %v217, %v217
  %v223 = vpack.c.b16 %v218, %v218
  %v224 = vpack.c.b16 %v219, %v219
  %vm230 = vcmask 781312
  %231 = vst.msk [vmem:[%s5] sm:$0xf] %vm230, %v220
  %232 = vst.msk [vmem:[%s5 + $0x4] sm:$0xf] %vm230, %v221
  %233 = vst.msk [vmem:[%s5 + $0x8] sm:$0xf] %vm230, %v222
  %234 = vst.msk [vmem:[%s5 + $0xc] sm:$0xf] %vm230, %v223
  %vm235 = vcmask 778240
  %236 = vst.msk [vmem:[%s5 + $0x10] sm:$0x1] %vm235, %v224
  // Predicated region
  $region22: #{_lambda_.40} parent=0 // pred_check
    _
  $region23: #{_lambda_.40} parent=0 // pred_check_branch
    %238 = sbr.rel (0) target = $region25
  $region24: #{_lambda_.40} parent=0 // pred_region
    _
  $region25: #{_lambda_.40} parent=0 // pred_fallthru
    _
  // Predicated region
  $region26: #{_lambda_.40} parent=0 // pred_check
    _
  $region27: #{_lambda_.40} parent=0 // pred_check_branch
    %240 = sbr.rel (0) target = $region29
  $region28: #{_lambda_.40} parent=0 // pred_region
    _
  $region29: #{_lambda_.40} parent=0 // pred_fallthru
    _

// kernel: _lambda_.42
$region0: #{_lambda_.42}
  #allocation0 [shape = 'u32[]', space=smem, size = 0x4, offset = 0x4, fixed_abs, tag = 'smem constant byte address 0x4 - core index']
  #allocation1 [shape = 'u32[144,128]{1,0:T(1,128)}', space=vmem, size = 0x12000, scoped, tag = 'internal scratch']
  %s0 = inlined_call_operand.vmem [shape: bf16[34,32], index: 0, kind: input, shape index: {}]
  %s1 = inlined_call_operand.vmem [shape: bf16[32,32], index: 1, kind: input, shape index: {}]
  %s2 = inlined_call_operand.vmem [shape: f32[1,32], index: 2, kind: input, shape index: {}]
  %s3 = inlined_call_operand.vmem [shape: f32[34,32], index: 3, kind: input, shape index: {}]
  %s4 = inlined_call_operand.vmem [shape: f32[34,32], index: 4, kind: output, shape index: {}]
  %s5 = sld [smem:[#allocation0]]
  $region26: #{_lambda_.42} parent=0
    _
  %s7 = ssub.s32 1, %s5
  %s8 = scalar_select 0, %s7, %s5
  // Predicated region
  $region2: #{_lambda_.42} parent=0 // pred_check
    _
  $region3: #{_lambda_.42} parent=0 // pred_check_branch
    %10 = sbr.rel (0) target = $region5
  $region4: #{_lambda_.42} parent=0 // pred_region
    _
  $region5: #{_lambda_.42} parent=0 // pred_fallthru
    _
  // Predicated region
  $region6: #{_lambda_.42} parent=0 // pred_check
    _
  $region7: #{_lambda_.42} parent=0 // pred_check_branch
    %12 = sbr.rel (0) target = $region9
  $region8: #{_lambda_.42} parent=0 // pred_region
    _
  $region9: #{_lambda_.42} parent=0 // pred_fallthru
    _
  // Predicated region
  $region10: #{_lambda_.42} parent=0 // pred_check
    _
  $region11: #{_lambda_.42} parent=0 // pred_check_branch
    %14 = sbr.rel (0) target = $region13
  $region12: #{_lambda_.42} parent=0 // pred_region
    _
  $region13: #{_lambda_.42} parent=0 // pred_fallthru
    _
  // Predicated region
  $region14: #{_lambda_.42} parent=0 // pred_check
    _
  $region15: #{_lambda_.42} parent=0 // pred_check_branch
    %16 = sbr.rel (0) target = $region17
  $region16: #{_lambda_.42} parent=0 // pred_region
    _
  $region17: #{_lambda_.42} parent=0 // pred_fallthru
    _
  %v18 = vld [vmem:[%s0] sm:$0xf]
  %v19 = vld [vmem:[%s0 + $0x4] sm:$0xf]
  %v20 = vld [vmem:[%s0 + $0x8] sm:$0xf]
  %v21 = vld [vmem:[%s0 + $0xc] sm:$0xf]
  %v22 = vld [vmem:[%s0 + $0x10] sm:$0x1]
  %v23 = vld [vmem:[%s1] sm:$0xf]
  %v24 = vld [vmem:[%s1 + $0x4] sm:$0xf]
  %v25 = vld [vmem:[%s1 + $0x8] sm:$0xf]
  %v26 = vld [vmem:[%s1 + $0xc] sm:$0xf]
  %v27 = vld [vmem:[%s2] sm:$0x1]
  %v29 = vlaneseq
  %v30 = vshrl.u32 %v29, 7
  %v31 = vsub.s32 0, %v30
  %v32 = vrot.slane %v27, %v31
  %v39 = vunpack.c.l.b16 %v18
  %v40 = vunpack.c.l.b16 %v19
  %v41 = vunpack.c.l.b16 %v20
  %v42 = vunpack.c.l.b16 %v21
  %v43 = vunpack.c.l.b16 %v22
  %v44 = vpack.c.b16 %v40, %v39
  %v45 = vpack.c.b16 %v42, %v41
  %v46 = vpack.c.b16 %v43, %v43
  %v51 = vunpack.c.l.b16 %v23
  %v52 = vunpack.c.l.b16 %v24
  %v53 = vunpack.c.l.b16 %v25
  %v54 = vunpack.c.l.b16 %v26
  %v55 = vpack.c.b16 %v52, %v51
  %v56 = vpack.c.b16 %v54, %v53
  %vm59 = vcmask 261120
  %v61 = vsel %vm59, %v44, 0
  %v64 = vsel %vm59, %v45, 0
  %v67 = vsel %vm59, %v46, 0
  %69 = vmatprep.subr.bf16.mxu0 0
  %70 = vmatpush1.bf16.msra.mxu0 %v55
  %71 = vmatprep.subr.bf16.mxu0 0
  %72 = vmatpush1.bf16.msra.mxu0 %v56
  %73 = vmatprep.subr.bf16.mxu0 0
  %74 = vmatpush1.bf16.msra.mxu0 0
  %75 = vmatprep.subr.bf16.mxu0 0
  %76 = vmatpush1.bf16.msra.mxu0 0
  %77 = vmatprep.subr.bf16.mxu0 0
  %78 = vmatpush1.bf16.msra.mxu0 0
  %79 = vmatprep.subr.bf16.mxu0 0
  %80 = vmatpush1.bf16.msra.mxu0 0
  %81 = vmatprep.subr.bf16.mxu0 0
  %82 = vmatpush1.bf16.msra.mxu0 0
  %83 = vmatprep.subr.bf16.mxu0 0
  %84 = vmatpush1.bf16.msra.mxu0 0
  %85 = vmatprep.subr.bf16.mxu0 0
  %86 = vmatpush1.bf16.msra.mxu0 0
  %87 = vmatprep.subr.bf16.mxu0 0
  %88 = vmatpush1.bf16.msra.mxu0 0
  %89 = vmatprep.subr.bf16.mxu0 0
  %90 = vmatpush1.bf16.msra.mxu0 0
  %91 = vmatprep.subr.bf16.mxu0 0
  %92 = vmatpush1.bf16.msra.mxu0 0
  %93 = vmatprep.subr.bf16.mxu0 0
  %94 = vmatpush1.bf16.msra.mxu0 0
  %95 = vmatprep.subr.bf16.mxu0 0
  %96 = vmatpush1.bf16.msra.mxu0 0
  %97 = vmatprep.subr.bf16.mxu0 0
  %98 = vmatpush1.bf16.msra.mxu0 0
  %99 = vmatprep.subr.bf16.mxu0 0
  %100 = vmatpush1.bf16.msra.mxu0 0
  %101 = vmatprep.mubr.bf16.mxu0 0
  %102 = vmatmul.mubr.bf16.gmra.mrb[0].mxu0 %v61
  %v103 = vpop.f32.mrb[0].mxu0
  %v104 = vadd.f32 %v32, %v103
  %v105 = vpop.f32.mrb[0].mxu0
  %v106 = vpop.f32.mrb[0].mxu0
  %v107 = vadd.f32 %v32, %v106
  %v108 = vpop.f32.mrb[0].mxu0
  %109 = vmatprep.mubr.bf16.mxu0 0
  %110 = vmatmul.mubr.bf16.gmra.mrb[0].mxu0 %v64
  %v111 = vpop.f32.mrb[0].mxu0
  %v112 = vadd.f32 %v32, %v111
  %v113 = vpop.f32.mrb[0].mxu0
  %v114 = vpop.f32.mrb[0].mxu0
  %v115 = vadd.f32 %v32, %v114
  %v116 = vpop.f32.mrb[0].mxu0
  %117 = vmatprep.mubr.bf16.mxu0 0
  %118 = vmatmul.mubr.bf16.gmra.mrb[0].mxu0 %v67
  %v119 = vpop.f32.mrb[0].mxu0
  %v120 = vadd.f32 %v32, %v119
  %v121 = vpop.f32.mrb[0].mxu0
  %v122 = vpop.f32.mrb[0].mxu0
  %v123 = vpop.f32.mrb[0].mxu0
  %124 = vdwg.mxu0
  %v125 = vld [vmem:[%s3] sm:$0xff]
  %v126 = vld [vmem:[%s3 + $0x8] sm:$0xff]
  %v127 = vld [vmem:[%s3 + $0x10] sm:$0xff]
  %v128 = vld [vmem:[%s3 + $0x18] sm:$0xff]
  %v129 = vld [vmem:[%s3 + $0x20] sm:$0x3]
  %v130 = vadd.f32 %v104, %v125
  %v131 = vadd.f32 %v107, %v126
  %v132 = vadd.f32 %v112, %v127
  %v133 = vadd.f32 %v115, %v128
  %v134 = vadd.f32 %v120, %v129
  %135 = vst.msk [vmem:[%s4] sm:$0xff] %vm59, %v130
  %136 = vst.msk [vmem:[%s4 + $0x8] sm:$0xff] %vm59, %v131
  %137 = vst.msk [vmem:[%s4 + $0x10] sm:$0xff] %vm59, %v132
  %138 = vst.msk [vmem:[%s4 + $0x18] sm:$0xff] %vm59, %v133
  %vm139 = vcmask 254976
  %140 = vst.msk [vmem:[%s4 + $0x20] sm:$0x3] %vm139, %v134
  // Predicated region
  $region18: #{_lambda_.42} parent=0 // pred_check
    _
  $region19: #{_lambda_.42} parent=0 // pred_check_branch
    %142 = sbr.rel (0) target = $region21
  $region20: #{_lambda_.42} parent=0 // pred_region
    _
  $region21: #{_lambda_.42} parent=0 // pred_fallthru
    _
  // Predicated region
  $region22: #{_lambda_.42} parent=0 // pred_check
    _
  $region23: #{_lambda_.42} parent=0 // pred_check_branch
    %144 = sbr.rel (0) target = $region25
  $region24: #{_lambda_.42} parent=0 // pred_region
    _
  $region25: #{_lambda_.42} parent=0 // pred_fallthru
    _

// kernel: _lambda_.41
$region0: #{_lambda_.41}
  #allocation0 [shape = 'u32[]', space=smem, size = 0x4, offset = 0x4, fixed_abs, tag = 'smem constant byte address 0x4 - core index']
  #allocation1 [shape = 'u32[144,128]{1,0:T(1,128)}', space=vmem, size = 0x12000, scoped, tag = 'internal scratch']
  %s0 = inlined_call_operand.vmem [shape: bf16[2,17,96], index: 0, kind: input, shape index: {}]
  %s1 = inlined_call_operand.vmem [shape: bf16[2,17,32], index: 1, kind: output, shape index: {}]
  %s2 = sld [smem:[#allocation0]]
  $region37: #{_lambda_.41} parent=0
    _
  %s4 = ssub.s32 1, %s2
  %s5 = scalar_select 0, %s4, %s2
  loop: start=0, step=1, limit=4
  $region2: #{_lambda_.41} parent=0 // loop_pre_header
    _
  $region3: #{_lambda_.41} parent=0 // loop_header
    %s7 = sphi 0, %s11
    %p8 = scmp.ge.s32.totalorder %s7, 4
    %s17 = sphi 0, %s19
    %s20 = sphi 0, %s17
    %s21 = sphi 0, %s20
    %s37 = sphi 0, %s21
    %s43 = sphi 0, %s45
    %s46 = sphi 0, %s43
    %s47 = sphi 0, %s46
    %s63 = sphi 0, %s47
  $region4: #{_lambda_.41} parent=0 // loop_header_branch
    %10 = sbr.rel (%p8) target = $region8
  $region5: #{_lambda_.41} parent=0 // loop_body
    %s12 = ssub.s32 %s7, 1
    %s13 = ssub.s32 %s7, 2
    %s14 = sadd.s32 %s7, 1
    %s15 = ssub.s32 %s7, %s14
    %p16 = scmp.eq.s32.totalorder %s15, 0
    %s18 = sadd.s32 %s17, 1
    %s19 = scalar_select %p16, %s17, %s18
    %p22 = pneg %p16
    %p23 = scmp.eq.s32.totalorder %s7, 1
    %p24 = por %p22, %p23
    %p25 = scmp.ne.s32.totalorder %s17, %s20
    %p26 = scmp.eq.s32.totalorder %s7, 0
    %p27 = por %p25, %p26
    %p28 = scmp.ne.s32.totalorder %s17, %s20
    %p29 = scmp.eq.s32.totalorder %s12, 1
    %p30 = por %p28, %p29
    %p31 = scmp.ne.s32.totalorder %s20, %s21
    %p32 = scmp.eq.s32.totalorder %s12, 0
    %p33 = por %p31, %p32
    %p34 = scmp.ne.s32.totalorder %s20, %s21
    %p35 = scmp.eq.s32.totalorder %s13, 1
    %p36 = por %p34, %p35
    %p38 = scmp.ne.s32.totalorder %s21, %s37
    %p39 = scmp.eq.s32.totalorder %s13, 0
    %p40 = por %p38, %p39
    %s41 = ssub.s32 %s7, %s14
    %p42 = scmp.eq.s32.totalorder %s41, 0
    %s44 = sadd.s32 %s43, 1
    %s45 = scalar_select %p42, %s43, %s44
    %p48 = pneg %p42
    %p49 = scmp.eq.s32.totalorder %s7, 1
    %p50 = por %p48, %p49
    %p51 = scmp.ne.s32.totalorder %s43, %s46
    %p52 = scmp.eq.s32.totalorder %s7, 0
    %p53 = por %p51, %p52
    %p54 = scmp.ne.s32.totalorder %s43, %s46
    %p55 = scmp.eq.s32.totalorder %s12, 1
    %p56 = por %p54, %p55
    %p57 = scmp.ne.s32.totalorder %s46, %s47
    %p58 = scmp.eq.s32.totalorder %s12, 0
    %p59 = por %p57, %p58
    %p60 = scmp.ne.s32.totalorder %s46, %s47
    %p61 = scmp.eq.s32.totalorder %s13, 1
    %p62 = por %p60, %p61
    %p64 = scmp.ne.s32.totalorder %s47, %s63
    %p65 = scmp.eq.s32.totalorder %s13, 0
    %p66 = por %p64, %p65
    %p67 = scmp.le.s32.totalorder 1, %s7
    %p68 = scmp.lt.s32.totalorder %s7, 3
    %p69 = pnand %p67, %p68
    %p70 = pneg %p69
    // Predicated region
    $region9: #{_lambda_.41} parent=5 // pred_check
      _
    $region10: #{_lambda_.41} parent=5 // pred_check_branch
      %72 = sbr.rel (%p69) target = $region12
    $region11: #{_lambda_.41} parent=5 // pred_region
      %s73 = ssub.s32 %s7, 1
    $region12: #{_lambda_.41} parent=5 // pred_fallthru
      _
    %p74 = scmp.lt.s32.totalorder %s7, 2
    // Predicated region
    $region13: #{_lambda_.41} parent=5 // pred_check
      %p75 = pneg %p74
    $region14: #{_lambda_.41} parent=5 // pred_check_branch
      %77 = sbr.rel (%p75) target = $region16
    $region15: #{_lambda_.41} parent=5 // pred_region
      // Predicated region
      $region17: #{_lambda_.41} parent=15 // pred_check
        %p78 = pneg %p27
      $region18: #{_lambda_.41} parent=15 // pred_check_branch
        %80 = sbr.rel (%p78) target = $region20
      $region19: #{_lambda_.41} parent=15 // pred_region
        %p81 = scmp.lt.s32.totalorder %s7, 1
        %s82 = scalar_select %p81, %s7, 1
        %s83 = smul.addr %s82, 3
        %s84 = smul.addr %s83, 4
        %s85 = scalar_lea.vmem %s0, %s84
      $region20: #{_lambda_.41} parent=15 // pred_fallthru
        _
    $region16: #{_lambda_.41} parent=5 // pred_fallthru
      _
    %p86 = scmp.le.s32.totalorder 1, %s7
    %p87 = scmp.lt.s32.totalorder %s7, 3
    %p88 = pnand %p86, %p87
    %p89 = pneg %p88
    // Predicated region
    $region21: #{_lambda_.41} parent=5 // pred_check
      _
    $region22: #{_lambda_.41} parent=5 // pred_check_branch
      %91 = sbr.rel (%p88) target = $region24
    $region23: #{_lambda_.41} parent=5 // pred_region
      %s92 = ssub.s32 %s7, 1
      %p93 = scmp.lt.s32.totalorder %s12, 1
      %s94 = scalar_select %p93, %s12, 1
      %s95 = smul.addr %s94, 3
      %s96 = smul.addr %s95, 4
      %s97 = scalar_lea.vmem %s0, %s96
      %p98 = pneg %p33
      %p99 = pneg %p30
      %p100 = pneg %p59
      %p101 = pneg %p56
      %p102 = scmp.lt.s32.totalorder %s12, 1
      %s103 = scalar_select %p102, %s12, 1
      %s104 = smul.addr %s103, 3
      %s105 = smul.addr %s104, 4
      %s106 = scalar_lea.vmem %s1, %s105
      %p107 = scmp.lt.s32.totalorder %s12, 1
      %s108 = scalar_select %p107, %s12, 1
      %s109 = smul.addr %s108, 3
      %s110 = smul.addr %s109, 4
      %s111 = scalar_lea.vmem %s0, %s110
      %p112 = scmp.lt.s32.totalorder %s12, 1
      %s113 = scalar_select %p112, %s12, 1
      %s114 = smul.addr %s113, 3
      %s115 = smul.addr %s114, 4
      %s116 = scalar_lea.vmem %s1, %s115
      %v118 = vld [vmem:[%s111] sm:$0xf]
      %v119 = vld [vmem:[%s111 + $0x4] sm:$0xf]
      %v120 = vld [vmem:[%s111 + $0x8] sm:$0x1]
      %v124 = vunpack.c.l.b16 %v118
      %v125 = vunpack.c.l.b16 %v119
      %v126 = vunpack.c.l.b16 %v120
      %v127 = vpack.c.b16 %v125, %v124
      %v128 = vpack.c.b16 %v126, %v126
      %129 = vrot.lane.b32.xlu0 %v127, 96
      %v130 = vpop.permute.xlu0 %129
      %131 = vrot.lane.b32.xlu0 %v128, 96
      %v132 = vpop.permute.xlu0 %131
      %vm133 = vcmask 64512
      %v135 = vsel %vm133, %v127, 0
      %v138 = vsel %vm133, %v128, 0
      %v141 = vsel %vm133, %v130, 0
      %v144 = vsel %vm133, %v132, 0
      %146 = vmatprep.subr.bf16.mxu0 0
      %147 = vmatpush1.bf16.xpose.msra.mxu0 %v141
      %148 = vmatprep.subr.bf16.mxu0 0
      %149 = vmatpush1.bf16.xpose.msra.mxu0 %v144
      %150 = vmatprep.subr.bf16.mxu0 0
      %151 = vmatpush1.bf16.xpose.msra.mxu0 0
      %152 = vmatprep.subr.bf16.mxu0 0
      %153 = vmatpush1.bf16.xpose.msra.mxu0 0
      %154 = vmatprep.subr.bf16.mxu0 0
      %155 = vmatpush1.bf16.xpose.msra.mxu0 0
      %156 = vmatprep.subr.bf16.mxu0 0
      %157 = vmatpush1.bf16.xpose.msra.mxu0 0
      %158 = vmatprep.subr.bf16.mxu0 0
      %159 = vmatpush1.bf16.xpose.msra.mxu0 0
      %160 = vmatprep.subr.bf16.mxu0 0
      %161 = vmatpush1.bf16.xpose.msra.mxu0 0
      %162 = vmatprep.subr.bf16.mxu0 0
      %163 = vmatpush1.bf16.xpose.msra.mxu0 0
      %164 = vmatprep.subr.bf16.mxu0 0
      %165 = vmatpush1.bf16.xpose.msra.mxu0 0
      %166 = vmatprep.subr.bf16.mxu0 0
      %167 = vmatpush1.bf16.xpose.msra.mxu0 0
      %168 = vmatprep.subr.bf16.mxu0 0
      %169 = vmatpush1.bf16.xpose.msra.mxu0 0
      %170 = vmatprep.subr.bf16.mxu0 0
      %171 = vmatpush1.bf16.xpose.msra.mxu0 0
      %172 = vmatprep.subr.bf16.mxu0 0
      %173 = vmatpush1.bf16.xpose.msra.mxu0 0
      %174 = vmatprep.subr.bf16.mxu0 0
      %175 = vmatpush1.bf16.xpose.msra.mxu0 0
      %176 = vmatprep.subr.bf16.mxu0 0
      %177 = vmatpush1.bf16.xpose.msra.mxu0 0
      %178 = vmatprep.mubr.bf16.mxu0 0
      %179 = vmatmul.mubr.bf16.gmra.mrb[0].mxu0 %v135
      %v180 = vpop.f32.mrb[0].mxu0
      %v181 = vadd.f32 0.0, %v180
      %v182 = vpop.f32.mrb[0].mxu0
      %v183 = vpop.f32.mrb[0].mxu0
      %v184 = vadd.f32 0.0, %v183
      %v185 = vpop.f32.mrb[0].mxu0
      %186 = vmatprep.mubr.bf16.mxu0 0
      %187 = vmatmul.mubr.bf16.gmra.mrb[0].mxu0 %v138
      %v188 = vpop.f32.mrb[0].mxu0
      %v189 = vadd.f32 0.0, %v188
      %v190 = vpop.f32.mrb[0].mxu0
      %v191 = vpop.f32.mrb[0].mxu0
      %v192 = vpop.f32.mrb[0].mxu0
      %193 = vdwg.mxu0
      %v194 = vmul.f32 %v181, 0.35355338
      %v195 = vmul.f32 %v184, 0.35355338
      %v196 = vmul.f32 %v189, 0.35355338
      %vm197 = vcmask 138240
      %v198 = vsel %vm197, %v194, -inf
      %199 = vmax.xlane.f32.xlu0 %v198
      %v200 = vpop.xlane.xlu0 %199
      %v201 = vsel %vm197, %v195, -inf
      %202 = vmax.xlane.f32.xlu0 %v201
      %v203 = vpop.xlane.xlu0 %202
      %vm204 = vcmask 131072
      %v205 = vsel %vm204, %v196, -inf
      %206 = vmax.xlane.f32.xlu0 %v205
      %v207 = vpop.xlane.xlu0 %206
      %v208 = vsub.f32 %v194, %v200
      %v209 = vsub.f32 %v195, %v203
      %v210 = vsub.f32 %v196, %v207
      %v211 = vmul.f32 %v208, 1.442695
      %v212 = vpow.pop %v211
      %v213 = vmul.f32 %v209, 1.442695
      %v214 = vpow.pop %v213
      %v215 = vmul.f32 %v210, 1.442695
      %v216 = vpow.pop %v215
      %v217 = vsel %vm197, %v212, 0.0
      %218 = vadd.xlane.f32.xlu0 %v217
      %v219 = vpop.xlane.xlu0 %218
      %v220 = vsel %vm197, %v214, 0.0
      %221 = vadd.xlane.f32.xlu0 %v220
      %v222 = vpop.xlane.xlu0 %221
      %v223 = vsel %vm204, %v216, 0.0
      %224 = vadd.xlane.f32.xlu0 %v223
      %v225 = vpop.xlane.xlu0 %224
      %v226 = vrcp.pop %v219
      %v227 = vmul.f32 %v212, %v226
      %v228 = vrcp.pop %v222
      %v229 = vmul.f32 %v214, %v228
      %v230 = vrcp.pop %v225
      %v231 = vmul.f32 %v216, %v230
      %v232 = vpack.c.bf16 %v229, %v227
      %v233 = vpack.c.bf16 %v231, %v231
      %234 = vrot.lane.b32.xlu0 %v127, 64
      %v235 = vpop.permute.xlu0 %234
      %236 = vrot.lane.b32.xlu0 %v128, 64
      %v237 = vpop.permute.xlu0 %236
      %v240 = vsel %vm197, %v232, 0
      %v243 = vsel %vm197, %v233, 0
      %vm245 = vcmask 1040384
      %v246 = vsel 0, 4294967295, 65535
      %v247 = vsel %vm245, %v246, 0
      %v249 = vand.u32 %v237, %v247
      %251 = vmatprep.subr.bf16.mxu0 0
      %252 = vmatpush1.bf16.msra.mxu0 %v235
      %253 = vmatprep.subr.bf16.mxu0 0
      %254 = vmatpush1.bf16.msra.mxu0 %v249
      %255 = vmatprep.subr.bf16.mxu0 0
      %256 = vmatpush1.bf16.msra.mxu0 0
      %257 = vmatprep.subr.bf16.mxu0 0
      %258 = vmatpush1.bf16.msra.mxu0 0
      %259 = vmatprep.subr.bf16.mxu0 0
      %260 = vmatpush1.bf16.msra.mxu0 0
      %261 = vmatprep.subr.bf16.mxu0 0
      %262 = vmatpush1.bf16.msra.mxu0 0
      %263 = vmatprep.subr.bf16.mxu0 0
      %264 = vmatpush1.bf16.msra.mxu0 0
      %265 = vmatprep.subr.bf16.mxu0 0
      %266 = vmatpush1.bf16.msra.mxu0 0
      %267 = vmatprep.subr.bf16.mxu0 0
      %268 = vmatpush1.bf16.msra.mxu0 0
      %269 = vmatprep.subr.bf16.mxu0 0
      %270 = vmatpush1.bf16.msra.mxu0 0
      %271 = vmatprep.subr.bf16.mxu0 0
      %272 = vmatpush1.bf16.msra.mxu0 0
      %273 = vmatprep.subr.bf16.mxu0 0
      %274 = vmatpush1.bf16.msra.mxu0 0
      %275 = vmatprep.subr.bf16.mxu0 0
      %276 = vmatpush1.bf16.msra.mxu0 0
      %277 = vmatprep.subr.bf16.mxu0 0
      %278 = vmatpush1.bf16.msra.mxu0 0
      %279 = vmatprep.subr.bf16.mxu0 0
      %280 = vmatpush1.bf16.msra.mxu0 0
      %281 = vmatprep.subr.bf16.mxu0 0
      %282 = vmatpush1.bf16.msra.mxu0 0
      %283 = vmatprep.mubr.bf16.mxu0 0
      %284 = vmatmul.mubr.bf16.gmra.mrb[0].mxu0 %v240
      %v285 = vpop.f32.mrb[0].mxu0
      %v286 = vadd.f32 0.0, %v285
      %v287 = vpop.f32.mrb[0].mxu0
      %v288 = vpop.f32.mrb[0].mxu0
      %v289 = vadd.f32 0.0, %v288
      %v290 = vpop.f32.mrb[0].mxu0
      %291 = vmatprep.mubr.bf16.mxu0 0
      %292 = vmatmul.mubr.bf16.gmra.mrb[0].mxu0 %v243
      %v293 = vpop.f32.mrb[0].mxu0
      %v294 = vadd.f32 0.0, %v293
      %v295 = vpop.f32.mrb[0].mxu0
      %v296 = vpop.f32.mrb[0].mxu0
      %v297 = vpop.f32.mrb[0].mxu0
      %298 = vdwg.mxu0
      %299 = vrot.lane.b32.xlu0 %v127, 120
      %v300 = vpop.permute.xlu0 %299
      %301 = vrot.lane.b32.xlu0 %v128, 120
      %v302 = vpop.permute.xlu0 %301
      %303 = vrot.lane.b32.xlu0 %v127, 88
      %v304 = vpop.permute.xlu0 %303
      %305 = vrot.lane.b32.xlu0 %v128, 88
      %v306 = vpop.permute.xlu0 %305
      %v308 = vsel %vm133, %v300, 0
      %v311 = vsel %vm133, %v302, 0
      %v314 = vsel %vm133, %v304, 0
      %v317 = vsel %vm133, %v306, 0
      %319 = vmatprep.subr.bf16.mxu0 0
      %320 = vmatpush1.bf16.xpose.msra.mxu0 %v314
      %321 = vmatprep.subr.bf16.mxu0 0
      %322 = vmatpush1.bf16.xpose.msra.mxu0 %v317
      %323 = vmatprep.subr.bf16.mxu0 0
      %324 = vmatpush1.bf16.xpose.msra.mxu0 0
      %325 = vmatprep.subr.bf16.mxu0 0
      %326 = vmatpush1.bf16.xpose.msra.mxu0 0
      %327 = vmatprep.subr.bf16.mxu0 0
      %328 = vmatpush1.bf16.xpose.msra.mxu0 0
      %329 = vmatprep.subr.bf16.mxu0 0
      %330 = vmatpush1.bf16.xpose.msra.mxu0 0
      %331 = vmatprep.subr.bf16.mxu0 0
      %332 = vmatpush1.bf16.xpose.msra.mxu0 0
      %333 = vmatprep.subr.bf16.mxu0 0
      %334 = vmatpush1.bf16.xpose.msra.mxu0 0
      %335 = vmatprep.subr.bf16.mxu0 0
      %336 = vmatpush1.bf16.xpose.msra.mxu0 0
      %337 = vmatprep.subr.bf16.mxu0 0
      %338 = vmatpush1.bf16.xpose.msra.mxu0 0
      %339 = vmatprep.subr.bf16.mxu0 0
      %340 = vmatpush1.bf16.xpose.msra.mxu0 0
      %341 = vmatprep.subr.bf16.mxu0 0
      %342 = vmatpush1.bf16.xpose.msra.mxu0 0
      %343 = vmatprep.subr.bf16.mxu0 0
      %344 = vmatpush1.bf16.xpose.msra.mxu0 0
      %345 = vmatprep.subr.bf16.mxu0 0
      %346 = vmatpush1.bf16.xpose.msra.mxu0 0
      %347 = vmatprep.subr.bf16.mxu0 0
      %348 = vmatpush1.bf16.xpose.msra.mxu0 0
      %349 = vmatprep.subr.bf16.mxu0 0
      %350 = vmatpush1.bf16.xpose.msra.mxu0 0
      %351 = vmatprep.mubr.bf16.mxu0 0
      %352 = vmatmul.mubr.bf16.gmra.mrb[0].mxu0 %v308
      %v353 = vpop.f32.mrb[0].mxu0
      %v354 = vadd.f32 0.0, %v353
      %v355 = vpop.f32.mrb[0].mxu0
      %v356 = vpop.f32.mrb[0].mxu0
      %v357 = vadd.f32 0.0, %v356
      %v358 = vpop.f32.mrb[0].mxu0
      %359 = vmatprep.mubr.bf16.mxu0 0
      %360 = vmatmul.mubr.bf16.gmra.mrb[0].mxu0 %v311
      %v361 = vpop.f32.mrb[0].mxu0
      %v362 = vadd.f32 0.0, %v361
      %v363 = vpop.f32.mrb[0].mxu0
      %v364 = vpop.f32.mrb[0].mxu0
      %v365 = vpop.f32.mrb[0].mxu0
      %366 = vdwg.mxu0
      %v367 = vmul.f32 %v354, 0.35355338
      %v368 = vmul.f32 %v357, 0.35355338
      %v369 = vmul.f32 %v362, 0.35355338
      %v370 = vsel %vm197, %v367, -inf
      %371 = vmax.xlane.f32.xlu0 %v370
      %v372 = vpop.xlane.xlu0 %371
      %v373 = vsel %vm197, %v368, -inf
      %374 = vmax.xlane.f32.xlu0 %v373
      %v375 = vpop.xlane.xlu0 %374
      %v376 = vsel %vm204, %v369, -inf
      %377 = vmax.xlane.f32.xlu0 %v376
      %v378 = vpop.xlane.xlu0 %377
      %v379 = vsub.f32 %v367, %v372
      %v380 = vsub.f32 %v368, %v375
      %v381 = vsub.f32 %v369, %v378
      %v382 = vmul.f32 %v379, 1.442695
      %v383 = vpow.pop %v382
      %v384 = vmul.f32 %v380, 1.442695
      %v385 = vpow.pop %v384
      %v386 = vmul.f32 %v381, 1.442695
      %v387 = vpow.pop %v386
      %v388 = vsel %vm197, %v383, 0.0
      %389 = vadd.xlane.f32.xlu0 %v388
      %v390 = vpop.xlane.xlu0 %389
      %v391 = vsel %vm197, %v385, 0.0
      %392 = vadd.xlane.f32.xlu0 %v391
      %v393 = vpop.xlane.xlu0 %392
      %v394 = vsel %vm204, %v387, 0.0
      %395 = vadd.xlane.f32.xlu0 %v394
      %v396 = vpop.xlane.xlu0 %395
      %v397 = vrcp.pop %v390
      %v398 = vmul.f32 %v383, %v397
      %v399 = vrcp.pop %v393
      %v400 = vmul.f32 %v385, %v399
      %v401 = vrcp.pop %v396
      %v402 = vmul.f32 %v387, %v401
      %v403 = vpack.c.bf16 %v400, %v398
      %v404 = vpack.c.bf16 %v402, %v402
      %405 = vrot.lane.b32.xlu0 %v127, 56
      %v406 = vpop.permute.xlu0 %405
      %407 = vrot.lane.b32.xlu0 %v128, 56
      %v408 = vpop.permute.xlu0 %407
      %v411 = vsel %vm197, %v403, 0
      %v414 = vsel %vm197, %v404, 0
      %v417 = vand.u32 %v408, %v247
      %419 = vmatprep.subr.bf16.mxu0 0
      %420 = vmatpush1.bf16.msra.mxu0 %v406
      %421 = vmatprep.subr.bf16.mxu0 0
      %422 = vmatpush1.bf16.msra.mxu0 %v417
      %423 = vmatprep.subr.bf16.mxu0 0
      %424 = vmatpush1.bf16.msra.mxu0 0
      %425 = vmatprep.subr.bf16.mxu0 0
      %426 = vmatpush1.bf16.msra.mxu0 0
      %427 = vmatprep.subr.bf16.mxu0 0
      %428 = vmatpush1.bf16.msra.mxu0 0
      %429 = vmatprep.subr.bf16.mxu0 0
      %430 = vmatpush1.bf16.msra.mxu0 0
      %431 = vmatprep.subr.bf16.mxu0 0
      %432 = vmatpush1.bf16.msra.mxu0 0
      %433 = vmatprep.subr.bf16.mxu0 0
      %434 = vmatpush1.bf16.msra.mxu0 0
      %435 = vmatprep.subr.bf16.mxu0 0
      %436 = vmatpush1.bf16.msra.mxu0 0
      %437 = vmatprep.subr.bf16.mxu0 0
      %438 = vmatpush1.bf16.msra.mxu0 0
      %439 = vmatprep.subr.bf16.mxu0 0
      %440 = vmatpush1.bf16.msra.mxu0 0
      %441 = vmatprep.subr.bf16.mxu0 0
      %442 = vmatpush1.bf16.msra.mxu0 0
      %443 = vmatprep.subr.bf16.mxu0 0
      %444 = vmatpush1.bf16.msra.mxu0 0
      %445 = vmatprep.subr.bf16.mxu0 0
      %446 = vmatpush1.bf16.msra.mxu0 0
      %447 = vmatprep.subr.bf16.mxu0 0
      %448 = vmatpush1.bf16.msra.mxu0 0
      %449 = vmatprep.subr.bf16.mxu0 0
      %450 = vmatpush1.bf16.msra.mxu0 0
      %451 = vmatprep.mubr.bf16.mxu0 0
      %452 = vmatmul.mubr.bf16.gmra.mrb[0].mxu0 %v411
      %v453 = vpop.f32.mrb[0].mxu0
      %v454 = vadd.f32 0.0, %v453
      %v455 = vpop.f32.mrb[0].mxu0
      %v456 = vpop.f32.mrb[0].mxu0
      %v457 = vadd.f32 0.0, %v456
      %v458 = vpop.f32.mrb[0].mxu0
      %459 = vmatprep.mubr.bf16.mxu0 0
      %460 = vmatmul.mubr.bf16.gmra.mrb[0].mxu0 %v414
      %v461 = vpop.f32.mrb[0].mxu0
      %v462 = vadd.f32 0.0, %v461
      %v463 = vpop.f32.mrb[0].mxu0
      %v464 = vpop.f32.mrb[0].mxu0
      %v465 = vpop.f32.mrb[0].mxu0
      %466 = vdwg.mxu0
      %467 = vrot.lane.b32.xlu0 %v127, 112
      %v468 = vpop.permute.xlu0 %467
      %469 = vrot.lane.b32.xlu0 %v128, 112
      %v470 = vpop.permute.xlu0 %469
      %471 = vrot.lane.b32.xlu0 %v127, 80
      %v472 = vpop.permute.xlu0 %471
      %473 = vrot.lane.b32.xlu0 %v128, 80
      %v474 = vpop.permute.xlu0 %473
      %v476 = vsel %vm133, %v468, 0
      %v479 = vsel %vm133, %v470, 0
      %v482 = vsel %vm133, %v472, 0
      %v485 = vsel %vm133, %v474, 0
      %487 = vmatprep.subr.bf16.mxu0 0
      %488 = vmatpush1.bf16.xpose.msra.mxu0 %v482
      %489 = vmatprep.subr.bf16.mxu0 0
      %490 = vmatpush1.bf16.xpose.msra.mxu0 %v485
      %491 = vmatprep.subr.bf16.mxu0 0
      %492 = vmatpush1.bf16.xpose.msra.mxu0 0
      %493 = vmatprep.subr.bf16.mxu0 0
      %494 = vmatpush1.bf16.xpose.msra.mxu0 0
      %495 = vmatprep.subr.bf16.mxu0 0
      %496 = vmatpush1.bf16.xpose.msra.mxu0 0
      %497 = vmatprep.subr.bf16.mxu0 0
      %498 = vmatpush1.bf16.xpose.msra.mxu0 0
      %499 = vmatprep.subr.bf16.mxu0 0
      %500 = vmatpush1.bf16.xpose.msra.mxu0 0
      %501 = vmatprep.subr.bf16.mxu0 0
      %502 = vmatpush1.bf16.xpose.msra.mxu0 0
      %503 = vmatprep.subr.bf16.mxu0 0
      %504 = vmatpush1.bf16.xpose.msra.mxu0 0
      %505 = vmatprep.subr.bf16.mxu0 0
      %506 = vmatpush1.bf16.xpose.msra.mxu0 0
      %507 = vmatprep.subr.bf16.mxu0 0
      %508 = vmatpush1.bf16.xpose.msra.mxu0 0
      %509 = vmatprep.subr.bf16.mxu0 0
      %510 = vmatpush1.bf16.xpose.msra.mxu0 0
      %511 = vmatprep.subr.bf16.mxu0 0
      %512 = vmatpush1.bf16.xpose.msra.mxu0 0
      %513 = vmatprep.subr.bf16.mxu0 0
      %514 = vmatpush1.bf16.xpose.msra.mxu0 0
      %515 = vmatprep.subr.bf16.mxu0 0
      %516 = vmatpush1.bf16.xpose.msra.mxu0 0
      %517 = vmatprep.subr.bf16.mxu0 0
      %518 = vmatpush1.bf16.xpose.msra.mxu0 0
      %519 = vmatprep.mubr.bf16.mxu0 0
      %520 = vmatmul.mubr.bf16.gmra.mrb[0].mxu0 %v476
      %v521 = vpop.f32.mrb[0].mxu0
      %v522 = vadd.f32 0.0, %v521
      %v523 = vpop.f32.mrb[0].mxu0
      %v524 = vpop.f32.mrb[0].mxu0
      %v525 = vadd.f32 0.0, %v524
      %v526 = vpop.f32.mrb[0].mxu0
      %527 = vmatprep.mubr.bf16.mxu0 0
      %528 = vmatmul.mubr.bf16.gmra.mrb[0].mxu0 %v479
      %v529 = vpop.f32.mrb[0].mxu0
      %v530 = vadd.f32 0.0, %v529
      %v531 = vpop.f32.mrb[0].mxu0
      %v532 = vpop.f32.mrb[0].mxu0
      %v533 = vpop.f32.mrb[0].mxu0
      %534 = vdwg.mxu0
      %v535 = vmul.f32 %v522, 0.35355338
      %v536 = vmul.f32 %v525, 0.35355338
      %v537 = vmul.f32 %v530, 0.35355338
      %v538 = vsel %vm197, %v535, -inf
      %539 = vmax.xlane.f32.xlu0 %v538
      %v540 = vpop.xlane.xlu0 %539
      %v541 = vsel %vm197, %v536, -inf
      %542 = vmax.xlane.f32.xlu0 %v541
      %v543 = vpop.xlane.xlu0 %542
      %v544 = vsel %vm204, %v537, -inf
      %545 = vmax.xlane.f32.xlu0 %v544
      %v546 = vpop.xlane.xlu0 %545
      %v547 = vsub.f32 %v535, %v540
      %v548 = vsub.f32 %v536, %v543
      %v549 = vsub.f32 %v537, %v546
      %v550 = vmul.f32 %v547, 1.442695
      %v551 = vpow.pop %v550
      %v552 = vmul.f32 %v548, 1.442695
      %v553 = vpow.pop %v552
      %v554 = vmul.f32 %v549, 1.442695
      %v555 = vpow.pop %v554
      %v556 = vsel %vm197, %v551, 0.0
      %557 = vadd.xlane.f32.xlu0 %v556
      %v558 = vpop.xlane.xlu0 %557
      %v559 = vsel %vm197, %v553, 0.0
      %560 = vadd.xlane.f32.xlu0 %v559
      %v561 = vpop.xlane.xlu0 %560
      %v562 = vsel %vm204, %v555, 0.0
      %563 = vadd.xlane.f32.xlu0 %v562
      %v564 = vpop.xlane.xlu0 %563
      %v565 = vrcp.pop %v558
      %v566 = vmul.f32 %v551, %v565
      %v567 = vrcp.pop %v561
      %v568 = vmul.f32 %v553, %v567
      %v569 = vrcp.pop %v564
      %v570 = vmul.f32 %v555, %v569
      %v571 = vpack.c.bf16 %v568, %v566
      %v572 = vpack.c.bf16 %v570, %v570
      %573 = vrot.lane.b32.xlu0 %v127, 48
      %v574 = vpop.permute.xlu0 %573
      %575 = vrot.lane.b32.xlu0 %v128, 48
      %v576 = vpop.permute.xlu0 %575
      %v579 = vsel %vm197, %v571, 0
      %v582 = vsel %vm197, %v572, 0
      %v585 = vand.u32 %v576, %v247
      %587 = vmatprep.subr.bf16.mxu0 0
      %588 = vmatpush1.bf16.msra.mxu0 %v574
      %589 = vmatprep.subr.bf16.mxu0 0
      %590 = vmatpush1.bf16.msra.mxu0 %v585
      %591 = vmatprep.subr.bf16.mxu0 0
      %592 = vmatpush1.bf16.msra.mxu0 0
      %593 = vmatprep.subr.bf16.mxu0 0
      %594 = vmatpush1.bf16.msra.mxu0 0
      %595 = vmatprep.subr.bf16.mxu0 0
      %596 = vmatpush1.bf16.msra.mxu0 0
      %597 = vmatprep.subr.bf16.mxu0 0
      %598 = vmatpush1.bf16.msra.mxu0 0
      %599 = vmatprep.subr.bf16.mxu0 0
      %600 = vmatpush1.bf16.msra.mxu0 0
      %601 = vmatprep.subr.bf16.mxu0 0
      %602 = vmatpush1.bf16.msra.mxu0 0
      %603 = vmatprep.subr.bf16.mxu0 0
      %604 = vmatpush1.bf16.msra.mxu0 0
      %605 = vmatprep.subr.bf16.mxu0 0
      %606 = vmatpush1.bf16.msra.mxu0 0
      %607 = vmatprep.subr.bf16.mxu0 0
      %608 = vmatpush1.bf16.msra.mxu0 0
      %609 = vmatprep.subr.bf16.mxu0 0
      %610 = vmatpush1.bf16.msra.mxu0 0
      %611 = vmatprep.subr.bf16.mxu0 0
      %612 = vmatpush1.bf16.msra.mxu0 0
      %613 = vmatprep.subr.bf16.mxu0 0
      %614 = vmatpush1.bf16.msra.mxu0 0
      %615 = vmatprep.subr.bf16.mxu0 0
      %616 = vmatpush1.bf16.msra.mxu0 0
      %617 = vmatprep.subr.bf16.mxu0 0
      %618 = vmatpush1.bf16.msra.mxu0 0
      %619 = vmatprep.mubr.bf16.mxu0 0
      %620 = vmatmul.mubr.bf16.gmra.mrb[0].mxu0 %v579
      %v621 = vpop.f32.mrb[0].mxu0
      %v622 = vadd.f32 0.0, %v621
      %v623 = vpop.f32.mrb[0].mxu0
      %v624 = vpop.f32.mrb[0].mxu0
      %v625 = vadd.f32 0.0, %v624
      %v626 = vpop.f32.mrb[0].mxu0
      %627 = vmatprep.mubr.bf16.mxu0 0
      %628 = vmatmul.mubr.bf16.gmra.mrb[0].mxu0 %v582
      %v629 = vpop.f32.mrb[0].mxu0
      %v630 = vadd.f32 0.0, %v629
      %v631 = vpop.f32.mrb[0].mxu0
      %v632 = vpop.f32.mrb[0].mxu0
      %v633 = vpop.f32.mrb[0].mxu0
      %634 = vdwg.mxu0
      %635 = vrot.lane.b32.xlu0 %v127, 104
      %v636 = vpop.permute.xlu0 %635
      %637 = vrot.lane.b32.xlu0 %v128, 104
      %v638 = vpop.permute.xlu0 %637
      %639 = vrot.lane.b32.xlu0 %v127, 72
      %v640 = vpop.permute.xlu0 %639
      %641 = vrot.lane.b32.xlu0 %v128, 72
      %v642 = vpop.permute.xlu0 %641
      %v644 = vsel %vm133, %v636, 0
      %v647 = vsel %vm133, %v638, 0
      %v650 = vsel %vm133, %v640, 0
      %v653 = vsel %vm133, %v642, 0
      %655 = vmatprep.subr.bf16.mxu0 0
      %656 = vmatpush1.bf16.xpose.msra.mxu0 %v650
      %657 = vmatprep.subr.bf16.mxu0 0
      %658 = vmatpush1.bf16.xpose.msra.mxu0 %v653
      %659 = vmatprep.subr.bf16.mxu0 0
      %660 = vmatpush1.bf16.xpose.msra.mxu0 0
      %661 = vmatprep.subr.bf16.mxu0 0
      %662 = vmatpush1.bf16.xpose.msra.mxu0 0
      %663 = vmatprep.subr.bf16.mxu0 0
      %664 = vmatpush1.bf16.xpose.msra.mxu0 0
      %665 = vmatprep.subr.bf16.mxu0 0
      %666 = vmatpush1.bf16.xpose.msra.mxu0 0
      %667 = vmatprep.subr.bf16.mxu0 0
      %668 = vmatpush1.bf16.xpose.msra.mxu0 0
      %669 = vmatprep.subr.bf16.mxu0 0
      %670 = vmatpush1.bf16.xpose.msra.mxu0 0
      %671 = vmatprep.subr.bf16.mxu0 0
      %672 = vmatpush1.bf16.xpose.msra.mxu0 0
      %673 = vmatprep.subr.bf16.mxu0 0
      %674 = vmatpush1.bf16.xpose.msra.mxu0 0
      %675 = vmatprep.subr.bf16.mxu0 0
      %676 = vmatpush1.bf16.xpose.msra.mxu0 0
      %677 = vmatprep.subr.bf16.mxu0 0
      %678 = vmatpush1.bf16.xpose.msra.mxu0 0
      %679 = vmatprep.subr.bf16.mxu0 0
      %680 = vmatpush1.bf16.xpose.msra.mxu0 0
      %681 = vmatprep.subr.bf16.mxu0 0
      %682 = vmatpush1.bf16.xpose.msra.mxu0 0
      %683 = vmatprep.subr.bf16.mxu0 0
      %684 = vmatpush1.bf16.xpose.msra.mxu0 0
      %685 = vmatprep.subr.bf16.mxu0 0
      %686 = vmatpush1.bf16.xpose.msra.mxu0 0
      %687 = vmatprep.mubr.bf16.mxu0 0
      %688 = vmatmul.mubr.bf16.gmra.mrb[0].mxu0 %v644
      %v689 = vpop.f32.mrb[0].mxu0
      %v690 = vadd.f32 0.0, %v689
      %v691 = vpop.f32.mrb[0].mxu0
      %v692 = vpop.f32.mrb[0].mxu0
      %v693 = vadd.f32 0.0, %v692
      %v694 = vpop.f32.mrb[0].mxu0
      %695 = vmatprep.mubr.bf16.mxu0 0
      %696 = vmatmul.mubr.bf16.gmra.mrb[0].mxu0 %v647
      %v697 = vpop.f32.mrb[0].mxu0
      %v698 = vadd.f32 0.0, %v697
      %v699 = vpop.f32.mrb[0].mxu0
      %v700 = vpop.f32.mrb[0].mxu0
      %v701 = vpop.f32.mrb[0].mxu0
      %702 = vdwg.mxu0
      %v703 = vmul.f32 %v690, 0.35355338
      %v704 = vmul.f32 %v693, 0.35355338
      %v705 = vmul.f32 %v698, 0.35355338
      %v706 = vsel %vm197, %v703, -inf
      %707 = vmax.xlane.f32.xlu0 %v706
      %v708 = vpop.xlane.xlu0 %707
      %v709 = vsel %vm197, %v704, -inf
      %710 = vmax.xlane.f32.xlu0 %v709
      %v711 = vpop.xlane.xlu0 %710
      %v712 = vsel %vm204, %v705, -inf
      %713 = vmax.xlane.f32.xlu0 %v712
      %v714 = vpop.xlane.xlu0 %713
      %v715 = vsub.f32 %v703, %v708
      %v716 = vsub.f32 %v704, %v711
      %v717 = vsub.f32 %v705, %v714
      %v718 = vmul.f32 %v715, 1.442695
      %v719 = vpow.pop %v718
      %v720 = vmul.f32 %v716, 1.442695
      %v721 = vpow.pop %v720
      %v722 = vmul.f32 %v717, 1.442695
      %v723 = vpow.pop %v722
      %v724 = vsel %vm197, %v719, 0.0
      %725 = vadd.xlane.f32.xlu0 %v724
      %v726 = vpop.xlane.xlu0 %725
      %v727 = vsel %vm197, %v721, 0.0
      %728 = vadd.xlane.f32.xlu0 %v727
      %v729 = vpop.xlane.xlu0 %728
      %v730 = vsel %vm204, %v723, 0.0
      %731 = vadd.xlane.f32.xlu0 %v730
      %v732 = vpop.xlane.xlu0 %731
      %v733 = vrcp.pop %v726
      %v734 = vmul.f32 %v719, %v733
      %v735 = vrcp.pop %v729
      %v736 = vmul.f32 %v721, %v735
      %v737 = vrcp.pop %v732
      %v738 = vmul.f32 %v723, %v737
      %v739 = vpack.c.bf16 %v736, %v734
      %v740 = vpack.c.bf16 %v738, %v738
      %741 = vrot.lane.b32.xlu0 %v127, 40
      %v742 = vpop.permute.xlu0 %741
      %743 = vrot.lane.b32.xlu0 %v128, 40
      %v744 = vpop.permute.xlu0 %743
      %v747 = vsel %vm197, %v739, 0
      %v750 = vsel %vm197, %v740, 0
      %v753 = vand.u32 %v744, %v247
      %755 = vmatprep.subr.bf16.mxu0 0
      %756 = vmatpush1.bf16.msra.mxu0 %v742
      %757 = vmatprep.subr.bf16.mxu0 0
      %758 = vmatpush1.bf16.msra.mxu0 %v753
      %759 = vmatprep.subr.bf16.mxu0 0
      %760 = vmatpush1.bf16.msra.mxu0 0
      %761 = vmatprep.subr.bf16.mxu0 0
      %762 = vmatpush1.bf16.msra.mxu0 0
      %763 = vmatprep.subr.bf16.mxu0 0
      %764 = vmatpush1.bf16.msra.mxu0 0
      %765 = vmatprep.subr.bf16.mxu0 0
      %766 = vmatpush1.bf16.msra.mxu0 0
      %767 = vmatprep.subr.bf16.mxu0 0
      %768 = vmatpush1.bf16.msra.mxu0 0
      %769 = vmatprep.subr.bf16.mxu0 0
      %770 = vmatpush1.bf16.msra.mxu0 0
      %771 = vmatprep.subr.bf16.mxu0 0
      %772 = vmatpush1.bf16.msra.mxu0 0
      %773 = vmatprep.subr.bf16.mxu0 0
      %774 = vmatpush1.bf16.msra.mxu0 0
      %775 = vmatprep.subr.bf16.mxu0 0
      %776 = vmatpush1.bf16.msra.mxu0 0
      %777 = vmatprep.subr.bf16.mxu0 0
      %778 = vmatpush1.bf16.msra.mxu0 0
      %779 = vmatprep.subr.bf16.mxu0 0
      %780 = vmatpush1.bf16.msra.mxu0 0
      %781 = vmatprep.subr.bf16.mxu0 0
      %782 = vmatpush1.bf16.msra.mxu0 0
      %783 = vmatprep.subr.bf16.mxu0 0
      %784 = vmatpush1.bf16.msra.mxu0 0
      %785 = vmatprep.subr.bf16.mxu0 0
      %786 = vmatpush1.bf16.msra.mxu0 0
      %787 = vmatprep.mubr.bf16.mxu0 0
      %788 = vmatmul.mubr.bf16.gmra.mrb[0].mxu0 %v747
      %v789 = vpop.f32.mrb[0].mxu0
      %v790 = vadd.f32 0.0, %v789
      %v791 = vpop.f32.mrb[0].mxu0
      %v792 = vpop.f32.mrb[0].mxu0
      %v793 = vadd.f32 0.0, %v792
      %v794 = vpop.f32.mrb[0].mxu0
      %795 = vmatprep.mubr.bf16.mxu0 0
      %796 = vmatmul.mubr.bf16.gmra.mrb[0].mxu0 %v750
      %v797 = vpop.f32.mrb[0].mxu0
      %v798 = vadd.f32 0.0, %v797
      %v799 = vpop.f32.mrb[0].mxu0
      %v800 = vpop.f32.mrb[0].mxu0
      %v801 = vpop.f32.mrb[0].mxu0
      %802 = vdwg.mxu0
      %806 = vrot.lane.b32.xlu0 %v454, 8
      %v807 = vpop.permute.xlu0 %806
      %808 = vrot.lane.b32.xlu0 %v457, 8
      %v809 = vpop.permute.xlu0 %808
      %810 = vrot.lane.b32.xlu0 %v462, 8
      %v811 = vpop.permute.xlu0 %810
      %818 = vrot.lane.b32.xlu0 %v622, 16
      %v819 = vpop.permute.xlu0 %818
      %820 = vrot.lane.b32.xlu0 %v625, 16
      %v821 = vpop.permute.xlu0 %820
      %822 = vrot.lane.b32.xlu0 %v630, 16
      %v823 = vpop.permute.xlu0 %822
      %830 = vrot.lane.b32.xlu0 %v790, 24
      %v831 = vpop.permute.xlu0 %830
      %832 = vrot.lane.b32.xlu0 %v793, 24
      %v833 = vpop.permute.xlu0 %832
      %834 = vrot.lane.b32.xlu0 %v798, 24
      %v835 = vpop.permute.xlu0 %834
      %v839 = vsel %vm133, %v286, %v807
      %v840 = vsel %vm133, %v289, %v809
      %v841 = vsel %vm133, %v294, %v811
      %vm842 = vcmask 130048
      %v843 = vsel %vm842, %v839, %v819
      %v844 = vsel %vm842, %v840, %v821
      %v845 = vsel %vm842, %v841, %v823
      %vm846 = vcmask 195584
      %v847 = vsel %vm846, %v843, %v831
      %v848 = vsel %vm846, %v844, %v833
      %v849 = vsel %vm846, %v845, %v835
      %v850 = vpack.c.bf16 %v848, %v847
      %v851 = vpack.c.bf16 %v849, %v849
      %v854 = vunpack.c.l.b16 %v850
      %v855 = vunpack.c.h.b16 %v850
      %v856 = vunpack.c.l.b16 %v851
      %v857 = vpack.c.b16 %v854, %v854
      %v858 = vpack.c.b16 %v855, %v855
      %v859 = vpack.c.b16 %v856, %v856
      %vm863 = vcmask 257024
      %864 = vst.msk [vmem:[%s116] sm:$0xf] %vm863, %v857
      %865 = vst.msk [vmem:[%s116 + $0x4] sm:$0xf] %vm863, %v858
      %vm866 = vcmask 253952
      %vm867 = vsmask.f32 256
      %vm868 = vmand %vm866, %vm867
      %v869 = vld [vmem:[%s116 + $0x8] sm:$0x1]
      %v870 = vsel %vm868, %v859, %v869
      %871 = vst [vmem:[%s116 + $0x8] sm:$0x1] %v870
      %p872 = scmp.lt.s32.totalorder %s12, 1
      %s873 = scalar_select %p872, %s12, 1
      %s874 = smul.addr %s873, 3
      %s875 = smul.addr %s874, 4
      %s876 = scalar_lea.vmem %s1, %s875
      // Predicated region
      $region25: #{_lambda_.41} parent=23 // pred_check
        %p877 = pneg %p56
      $region26: #{_lambda_.41} parent=23 // pred_check_branch
        %879 = sbr.rel (%p877) target = $region28
      $region27: #{_lambda_.41} parent=23 // pred_region
        _
      $region28: #{_lambda_.41} parent=23 // pred_fallthru
        _
    $region24: #{_lambda_.41} parent=5 // pred_fallthru
      _
    %p880 = scmp.le.s32.totalorder 2, %s7
    // Predicated region
    $region29: #{_lambda_.41} parent=5 // pred_check
      %p881 = pneg %p880
    $region30: #{_lambda_.41} parent=5 // pred_check_branch
      %883 = sbr.rel (%p881) target = $region32
    $region31: #{_lambda_.41} parent=5 // pred_region
      %s884 = ssub.s32 %s7, 2
      // Predicated region
      $region33: #{_lambda_.41} parent=31 // pred_check
        %p885 = pneg %p62
      $region34: #{_lambda_.41} parent=31 // pred_check_branch
        %887 = sbr.rel (%p885) target = $region36
      $region35: #{_lambda_.41} parent=31 // pred_region
        %p888 = scmp.lt.s32.totalorder %s13, 1
        %s889 = scalar_select %p888, %s13, 1
        %s890 = smul.addr %s889, 3
        %s891 = smul.addr %s890, 4
        %s892 = scalar_lea.vmem %s1, %s891
      $region36: #{_lambda_.41} parent=31 // pred_fallthru
        _
    $region32: #{_lambda_.41} parent=5 // pred_fallthru
      _
  $region6: #{_lambda_.41} parent=0 // loop_footer
    %s11 = sadd.s32 1, %s7
  $region7: #{_lambda_.41} parent=0 // loop_footer_branch
    %6 = sbr.rel target = $region3
  $region8: #{_lambda_.41} parent=0 // loop_exit
    _

// kernel: _lambda_.44
$region0: #{_lambda_.44}
  #allocation0 [shape = 'u32[]', space=smem, size = 0x4, offset = 0x4, fixed_abs, tag = 'smem constant byte address 0x4 - core index']
  #allocation1 [shape = 'u32[144,128]{1,0:T(1,128)}', space=vmem, size = 0x12000, scoped, tag = 'internal scratch']
  %s0 = inlined_call_operand.vmem [shape: bf16[34,128], index: 0, kind: input, shape index: {}]
  %s1 = inlined_call_operand.vmem [shape: bf16[128,32], index: 1, kind: input, shape index: {}]
  %s2 = inlined_call_operand.vmem [shape: f32[1,32], index: 2, kind: input, shape index: {}]
  %s3 = inlined_call_operand.vmem [shape: f32[34,32], index: 3, kind: input, shape index: {}]
  %s4 = inlined_call_operand.vmem [shape: f32[34,32], index: 4, kind: output, shape index: {}]
  %s5 = sld [smem:[#allocation0]]
  $region26: #{_lambda_.44} parent=0
    _
  %s7 = ssub.s32 1, %s5
  %s8 = scalar_select 0, %s7, %s5
  // Predicated region
  $region2: #{_lambda_.44} parent=0 // pred_check
    _
  $region3: #{_lambda_.44} parent=0 // pred_check_branch
    %10 = sbr.rel (0) target = $region5
  $region4: #{_lambda_.44} parent=0 // pred_region
    _
  $region5: #{_lambda_.44} parent=0 // pred_fallthru
    _
  // Predicated region
  $region6: #{_lambda_.44} parent=0 // pred_check
    _
  $region7: #{_lambda_.44} parent=0 // pred_check_branch
    %12 = sbr.rel (0) target = $region9
  $region8: #{_lambda_.44} parent=0 // pred_region
    _
  $region9: #{_lambda_.44} parent=0 // pred_fallthru
    _
  // Predicated region
  $region10: #{_lambda_.44} parent=0 // pred_check
    _
  $region11: #{_lambda_.44} parent=0 // pred_check_branch
    %14 = sbr.rel (0) target = $region13
  $region12: #{_lambda_.44} parent=0 // pred_region
    _
  $region13: #{_lambda_.44} parent=0 // pred_fallthru
    _
  // Predicated region
  $region14: #{_lambda_.44} parent=0 // pred_check
    _
  $region15: #{_lambda_.44} parent=0 // pred_check_branch
    %16 = sbr.rel (0) target = $region17
  $region16: #{_lambda_.44} parent=0 // pred_region
    _
  $region17: #{_lambda_.44} parent=0 // pred_fallthru
    _
  %v18 = vld [vmem:[%s0] sm:$0xf]
  %v19 = vld [vmem:[%s0 + $0x4] sm:$0xf]
  %v20 = vld [vmem:[%s0 + $0x8] sm:$0xf]
  %v21 = vld [vmem:[%s0 + $0xc] sm:$0xf]
  %v22 = vld [vmem:[%s0 + $0x10] sm:$0x1]
  %v23 = vld [vmem:[%s1] sm:$0xf]
  %v24 = vld [vmem:[%s1 + $0x4] sm:$0xf]
  %v25 = vld [vmem:[%s1 + $0x8] sm:$0xf]
  %v26 = vld [vmem:[%s1 + $0xc] sm:$0xf]
  %v27 = vld [vmem:[%s1 + $0x10] sm:$0xf]
  %v28 = vld [vmem:[%s1 + $0x14] sm:$0xf]
  %v29 = vld [vmem:[%s1 + $0x18] sm:$0xf]
  %v30 = vld [vmem:[%s1 + $0x1c] sm:$0xf]
  %v31 = vld [vmem:[%s1 + $0x20] sm:$0xf]
  %v32 = vld [vmem:[%s1 + $0x24] sm:$0xf]
  %v33 = vld [vmem:[%s1 + $0x28] sm:$0xf]
  %v34 = vld [vmem:[%s1 + $0x2c] sm:$0xf]
  %v35 = vld [vmem:[%s1 + $0x30] sm:$0xf]
  %v36 = vld [vmem:[%s1 + $0x34] sm:$0xf]
  %v37 = vld [vmem:[%s1 + $0x38] sm:$0xf]
  %v38 = vld [vmem:[%s1 + $0x3c] sm:$0xf]
  %v39 = vld [vmem:[%s2] sm:$0x1]
  %v41 = vlaneseq
  %v42 = vshrl.u32 %v41, 7
  %v43 = vsub.s32 0, %v42
  %v44 = vrot.slane %v39, %v43
  %v51 = vunpack.c.l.b16 %v18
  %v52 = vunpack.c.l.b16 %v19
  %v53 = vunpack.c.l.b16 %v20
  %v54 = vunpack.c.l.b16 %v21
  %v55 = vunpack.c.l.b16 %v22
  %v56 = vpack.c.b16 %v52, %v51
  %v57 = vpack.c.b16 %v54, %v53
  %v58 = vpack.c.b16 %v55, %v55
  %v78 = vunpack.c.l.b16 %v23
  %v79 = vunpack.c.l.b16 %v24
  %v80 = vunpack.c.l.b16 %v25
  %v81 = vunpack.c.l.b16 %v26
  %v82 = vunpack.c.l.b16 %v27
  %v83 = vunpack.c.l.b16 %v28
  %v84 = vunpack.c.l.b16 %v29
  %v85 = vunpack.c.l.b16 %v30
  %v86 = vunpack.c.l.b16 %v31
  %v87 = vunpack.c.l.b16 %v32
  %v88 = vunpack.c.l.b16 %v33
  %v89 = vunpack.c.l.b16 %v34
  %v90 = vunpack.c.l.b16 %v35
  %v91 = vunpack.c.l.b16 %v36
  %v92 = vunpack.c.l.b16 %v37
  %v93 = vunpack.c.l.b16 %v38
  %v94 = vpack.c.b16 %v79, %v78
  %v95 = vpack.c.b16 %v81, %v80
  %v96 = vpack.c.b16 %v83, %v82
  %v97 = vpack.c.b16 %v85, %v84
  %v98 = vpack.c.b16 %v87, %v86
  %v99 = vpack.c.b16 %v89, %v88
  %v100 = vpack.c.b16 %v91, %v90
  %v101 = vpack.c.b16 %v93, %v92
  %110 = vmatprep.subr.bf16.mxu0 0
  %111 = vmatpush1.bf16.msra.mxu0 %v94
  %112 = vmatprep.subr.bf16.mxu0 0
  %113 = vmatpush1.bf16.msra.mxu0 %v95
  %114 = vmatprep.subr.bf16.mxu0 0
  %115 = vmatpush1.bf16.msra.mxu0 %v96
  %116 = vmatprep.subr.bf16.mxu0 0
  %117 = vmatpush1.bf16.msra.mxu0 %v97
  %118 = vmatprep.subr.bf16.mxu0 0
  %119 = vmatpush1.bf16.msra.mxu0 %v98
  %120 = vmatprep.subr.bf16.mxu0 0
  %121 = vmatpush1.bf16.msra.mxu0 %v99
  %122 = vmatprep.subr.bf16.mxu0 0
  %123 = vmatpush1.bf16.msra.mxu0 %v100
  %124 = vmatprep.subr.bf16.mxu0 0
  %125 = vmatpush1.bf16.msra.mxu0 %v101
  %126 = vmatprep.subr.bf16.mxu0 0
  %127 = vmatpush1.bf16.msra.mxu0 0
  %128 = vmatprep.subr.bf16.mxu0 0
  %129 = vmatpush1.bf16.msra.mxu0 0
  %130 = vmatprep.subr.bf16.mxu0 0
  %131 = vmatpush1.bf16.msra.mxu0 0
  %132 = vmatprep.subr.bf16.mxu0 0
  %133 = vmatpush1.bf16.msra.mxu0 0
  %134 = vmatprep.subr.bf16.mxu0 0
  %135 = vmatpush1.bf16.msra.mxu0 0
  %136 = vmatprep.subr.bf16.mxu0 0
  %137 = vmatpush1.bf16.msra.mxu0 0
  %138 = vmatprep.subr.bf16.mxu0 0
  %139 = vmatpush1.bf16.msra.mxu0 0
  %140 = vmatprep.subr.bf16.mxu0 0
  %141 = vmatpush1.bf16.msra.mxu0 0
  %142 = vmatprep.mubr.bf16.mxu0 0
  %143 = vmatmul.mubr.bf16.gmra.mrb[0].mxu0 %v56
  %v144 = vpop.f32.mrb[0].mxu0
  %v145 = vadd.f32 %v44, %v144
  %v146 = vpop.f32.mrb[0].mxu0
  %v147 = vpop.f32.mrb[0].mxu0
  %v148 = vadd.f32 %v44, %v147
  %v149 = vpop.f32.mrb[0].mxu0
  %150 = vmatprep.mubr.bf16.mxu0 0
  %151 = vmatmul.mubr.bf16.gmra.mrb[0].mxu0 %v57
  %v152 = vpop.f32.mrb[0].mxu0
  %v153 = vadd.f32 %v44, %v152
  %v154 = vpop.f32.mrb[0].mxu0
  %v155 = vpop.f32.mrb[0].mxu0
  %v156 = vadd.f32 %v44, %v155
  %v157 = vpop.f32.mrb[0].mxu0
  %158 = vmatprep.mubr.bf16.mxu0 0
  %159 = vmatmul.mubr.bf16.gmra.mrb[0].mxu0 %v58
  %v160 = vpop.f32.mrb[0].mxu0
  %v161 = vadd.f32 %v44, %v160
  %v162 = vpop.f32.mrb[0].mxu0
  %v163 = vpop.f32.mrb[0].mxu0
  %v164 = vpop.f32.mrb[0].mxu0
  %165 = vdwg.mxu0
  %v166 = vld [vmem:[%s3] sm:$0xff]
  %v167 = vld [vmem:[%s3 + $0x8] sm:$0xff]
  %v168 = vld [vmem:[%s3 + $0x10] sm:$0xff]
  %v169 = vld [vmem:[%s3 + $0x18] sm:$0xff]
  %v170 = vld [vmem:[%s3 + $0x20] sm:$0x3]
  %v171 = vadd.f32 %v145, %v166
  %v172 = vadd.f32 %v148, %v167
  %v173 = vadd.f32 %v153, %v168
  %v174 = vadd.f32 %v156, %v169
  %v175 = vadd.f32 %v161, %v170
  %vm176 = vcmask 261120
  %177 = vst.msk [vmem:[%s4] sm:$0xff] %vm176, %v171
  %178 = vst.msk [vmem:[%s4 + $0x8] sm:$0xff] %vm176, %v172
  %179 = vst.msk [vmem:[%s4 + $0x10] sm:$0xff] %vm176, %v173
  %180 = vst.msk [vmem:[%s4 + $0x18] sm:$0xff] %vm176, %v174
  %vm181 = vcmask 254976
  %182 = vst.msk [vmem:[%s4 + $0x20] sm:$0x3] %vm181, %v175
  // Predicated region
  $region18: #{_lambda_.44} parent=0 // pred_check
    _
  $region19: #{_lambda_.44} parent=0 // pred_check_branch
    %184 = sbr.rel (0) target = $region21
  $region20: #{_lambda_.44} parent=0 // pred_region
    _
  $region21: #{_lambda_.44} parent=0 // pred_fallthru
    _
  // Predicated region
  $region22: #{_lambda_.44} parent=0 // pred_check
    _
  $region23: #{_lambda_.44} parent=0 // pred_check_branch
    %186 = sbr.rel (0) target = $region25
  $region24: #{_lambda_.44} parent=0 // pred_region
    _
  $region25: #{_lambda_.44} parent=0 // pred_fallthru
    _

// kernel: _lambda_.43
$region0: #{_lambda_.43}
  #allocation0 [shape = 'u32[]', space=smem, size = 0x4, offset = 0x4, fixed_abs, tag = 'smem constant byte address 0x4 - core index']
  #allocation1 [shape = 'u32[144,128]{1,0:T(1,128)}', space=vmem, size = 0x12000, scoped, tag = 'internal scratch']
  %s0 = inlined_call_operand.vmem [shape: f32[34,32], index: 0, kind: input, shape index: {}]
  %s1 = inlined_call_operand.vmem [shape: bf16[32,128], index: 1, kind: input, shape index: {}]
  %s2 = inlined_call_operand.vmem [shape: f32[1,128], index: 2, kind: input, shape index: {}]
  %s3 = inlined_call_operand.vmem [shape: f32[1,32], index: 3, kind: input, shape index: {}]
  %s4 = inlined_call_operand.vmem [shape: f32[1,32], index: 4, kind: input, shape index: {}]
  %s5 = inlined_call_operand.vmem [shape: bf16[34,128], index: 5, kind: output, shape index: {}]
  %s6 = sld [smem:[#allocation0]]
  $region30: #{_lambda_.43} parent=0
    _
  %s8 = ssub.s32 1, %s6
  %s9 = scalar_select 0, %s8, %s6
  // Predicated region
  $region2: #{_lambda_.43} parent=0 // pred_check
    _
  $region3: #{_lambda_.43} parent=0 // pred_check_branch
    %11 = sbr.rel (0) target = $region5
  $region4: #{_lambda_.43} parent=0 // pred_region
    _
  $region5: #{_lambda_.43} parent=0 // pred_fallthru
    _
  // Predicated region
  $region6: #{_lambda_.43} parent=0 // pred_check
    _
  $region7: #{_lambda_.43} parent=0 // pred_check_branch
    %13 = sbr.rel (0) target = $region9
  $region8: #{_lambda_.43} parent=0 // pred_region
    _
  $region9: #{_lambda_.43} parent=0 // pred_fallthru
    _
  // Predicated region
  $region10: #{_lambda_.43} parent=0 // pred_check
    _
  $region11: #{_lambda_.43} parent=0 // pred_check_branch
    %15 = sbr.rel (0) target = $region13
  $region12: #{_lambda_.43} parent=0 // pred_region
    _
  $region13: #{_lambda_.43} parent=0 // pred_fallthru
    _
  // Predicated region
  $region14: #{_lambda_.43} parent=0 // pred_check
    _
  $region15: #{_lambda_.43} parent=0 // pred_check_branch
    %17 = sbr.rel (0) target = $region17
  $region16: #{_lambda_.43} parent=0 // pred_region
    _
  $region17: #{_lambda_.43} parent=0 // pred_fallthru
    _
  // Predicated region
  $region18: #{_lambda_.43} parent=0 // pred_check
    _
  $region19: #{_lambda_.43} parent=0 // pred_check_branch
    %19 = sbr.rel (0) target = $region21
  $region20: #{_lambda_.43} parent=0 // pred_region
    _
  $region21: #{_lambda_.43} parent=0 // pred_fallthru
    _
  %v21 = vld [vmem:[%s0] sm:$0xff]
  %v22 = vld [vmem:[%s0 + $0x8] sm:$0xff]
  %v23 = vld [vmem:[%s0 + $0x10] sm:$0xff]
  %v24 = vld [vmem:[%s0 + $0x18] sm:$0xff]
  %v25 = vld [vmem:[%s0 + $0x20] sm:$0x3]
  %vm26 = vcmask 261120
  %v27 = vsel %vm26, %v21, 0.0
  %28 = vadd.xlane.f32.xlu0 %v27
  %v29 = vpop.xlane.xlu0 %28
  %v30 = vsel %vm26, %v22, 0.0
  %31 = vadd.xlane.f32.xlu0 %v30
  %v32 = vpop.xlane.xlu0 %31
  %v33 = vsel %vm26, %v23, 0.0
  %34 = vadd.xlane.f32.xlu0 %v33
  %v35 = vpop.xlane.xlu0 %34
  %v36 = vsel %vm26, %v24, 0.0
  %37 = vadd.xlane.f32.xlu0 %v36
  %v38 = vpop.xlane.xlu0 %37
  %vm39 = vcmask 254976
  %v40 = vsel %vm39, %v25, 0.0
  %41 = vadd.xlane.f32.xlu0 %v40
  %v42 = vpop.xlane.xlu0 %41
  %v43 = vrcp.pop 32.0
  %v44 = vmul.f32 %v29, %v43
  %v45 = vmul.f32 %v32, %v43
  %v46 = vmul.f32 %v35, %v43
  %v47 = vmul.f32 %v38, %v43
  %v48 = vmul.f32 %v42, %v43
  %v49 = vsub.f32 %v21, %v44
  %v50 = vsub.f32 %v22, %v45
  %v51 = vsub.f32 %v23, %v46
  %v52 = vsub.f32 %v24, %v47
  %v53 = vsub.f32 %v25, %v48
  %v54 = vmul.f32 %v49, %v49
  %v55 = vmul.f32 %v50, %v50
  %v56 = vmul.f32 %v51, %v51
  %v57 = vmul.f32 %v52, %v52
  %v58 = vmul.f32 %v53, %v53
  %v59 = vsel %vm26, %v54, 0.0
  %60 = vadd.xlane.f32.xlu0 %v59
  %v61 = vpop.xlane.xlu0 %60
  %v62 = vsel %vm26, %v55, 0.0
  %63 = vadd.xlane.f32.xlu0 %v62
  %v64 = vpop.xlane.xlu0 %63
  %v65 = vsel %vm26, %v56, 0.0
  %66 = vadd.xlane.f32.xlu0 %v65
  %v67 = vpop.xlane.xlu0 %66
  %v68 = vsel %vm26, %v57, 0.0
  %69 = vadd.xlane.f32.xlu0 %v68
  %v70 = vpop.xlane.xlu0 %69
  %v71 = vsel %vm39, %v58, 0.0
  %72 = vadd.xlane.f32.xlu0 %v71
  %v73 = vpop.xlane.xlu0 %72
  %v74 = vmul.f32 %v61, %v43
  %v75 = vmul.f32 %v64, %v43
  %v76 = vmul.f32 %v67, %v43
  %v77 = vmul.f32 %v70, %v43
  %v78 = vmul.f32 %v73, %v43
  %v79 = vadd.f32 %v74, 1e-06
  %v80 = vadd.f32 %v75, 1e-06
  %v81 = vadd.f32 %v76, 1e-06
  %v82 = vadd.f32 %v77, 1e-06
  %v83 = vadd.f32 %v78, 1e-06
  %v84 = vrsqrt.pop %v79
  %v85 = vrsqrt.pop %v80
  %v86 = vrsqrt.pop %v81
  %v87 = vrsqrt.pop %v82
  %v88 = vrsqrt.pop %v83
  %v89 = vmul.f32 %v49, %v84
  %v90 = vmul.f32 %v50, %v85
  %v91 = vmul.f32 %v51, %v86
  %v92 = vmul.f32 %v52, %v87
  %v93 = vmul.f32 %v53, %v88
  %v94 = vld [vmem:[%s3] sm:$0x1]
  %v96 = vlaneseq
  %v97 = vshrl.u32 %v96, 7
  %v98 = vsub.s32 0, %v97
  %v99 = vrot.slane %v94, %v98
  %v101 = vmul.f32 %v89, %v99
  %v102 = vmul.f32 %v90, %v99
  %v103 = vmul.f32 %v91, %v99
  %v104 = vmul.f32 %v92, %v99
  %v105 = vmul.f32 %v93, %v99
  %v106 = vld [vmem:[%s4] sm:$0x1]
  %v108 = vlaneseq
  %v109 = vshrl.u32 %v108, 7
  %v110 = vsub.s32 0, %v109
  %v111 = vrot.slane %v106, %v110
  %v113 = vadd.f32 %v101, %v111
  %v114 = vadd.f32 %v102, %v111
  %v115 = vadd.f32 %v103, %v111
  %v116 = vadd.f32 %v104, %v111
  %v117 = vadd.f32 %v105, %v111
  %v118 = vpack.c.bf16 %v114, %v113
  %v119 = vpack.c.bf16 %v116, %v115
  %v120 = vpack.c.bf16 %v117, %v117
  %v121 = vld [vmem:[%s1] sm:$0xf]
  %v122 = vld [vmem:[%s1 + $0x4] sm:$0xf]
  %v123 = vld [vmem:[%s1 + $0x8] sm:$0xf]
  %v124 = vld [vmem:[%s1 + $0xc] sm:$0xf]
  %v125 = vld [vmem:[%s2] sm:$0x1]
  %v127 = vlaneseq
  %v128 = vshrl.u32 %v127, 7
  %v129 = vsub.s32 0, %v128
  %v130 = vrot.slane %v125, %v129
  %v136 = vunpack.c.l.b16 %v121
  %v137 = vunpack.c.l.b16 %v122
  %v138 = vunpack.c.l.b16 %v123
  %v139 = vunpack.c.l.b16 %v124
  %v140 = vpack.c.b16 %v137, %v136
  %v141 = vpack.c.b16 %v139, %v138
  %v145 = vsel %vm26, %v118, 0
  %v148 = vsel %vm26, %v119, 0
  %v151 = vsel %vm26, %v120, 0
  %153 = vmatprep.subr.bf16.mxu0 0
  %154 = vmatpush1.bf16.msra.mxu0 %v140
  %155 = vmatprep.subr.bf16.mxu0 0
  %156 = vmatpush1.bf16.msra.mxu0 %v141
  %157 = vmatprep.subr.bf16.mxu0 0
  %158 = vmatpush1.bf16.msra.mxu0 0
  %159 = vmatprep.subr.bf16.mxu0 0
  %160 = vmatpush1.bf16.msra.mxu0 0
  %161 = vmatprep.subr.bf16.mxu0 0
  %162 = vmatpush1.bf16.msra.mxu0 0
  %163 = vmatprep.subr.bf16.mxu0 0
  %164 = vmatpush1.bf16.msra.mxu0 0
  %165 = vmatprep.subr.bf16.mxu0 0
  %166 = vmatpush1.bf16.msra.mxu0 0
  %167 = vmatprep.subr.bf16.mxu0 0
  %168 = vmatpush1.bf16.msra.mxu0 0
  %169 = vmatprep.subr.bf16.mxu0 0
  %170 = vmatpush1.bf16.msra.mxu0 0
  %171 = vmatprep.subr.bf16.mxu0 0
  %172 = vmatpush1.bf16.msra.mxu0 0
  %173 = vmatprep.subr.bf16.mxu0 0
  %174 = vmatpush1.bf16.msra.mxu0 0
  %175 = vmatprep.subr.bf16.mxu0 0
  %176 = vmatpush1.bf16.msra.mxu0 0
  %177 = vmatprep.subr.bf16.mxu0 0
  %178 = vmatpush1.bf16.msra.mxu0 0
  %179 = vmatprep.subr.bf16.mxu0 0
  %180 = vmatpush1.bf16.msra.mxu0 0
  %181 = vmatprep.subr.bf16.mxu0 0
  %182 = vmatpush1.bf16.msra.mxu0 0
  %183 = vmatprep.subr.bf16.mxu0 0
  %184 = vmatpush1.bf16.msra.mxu0 0
  %185 = vmatprep.mubr.bf16.mxu0 0
  %186 = vmatmul.mubr.bf16.gmra.mrb[0].mxu0 %v145
  %v187 = vpop.f32.mrb[0].mxu0
  %v188 = vadd.f32 %v130, %v187
  %v189 = vpop.f32.mrb[0].mxu0
  %v190 = vpop.f32.mrb[0].mxu0
  %v191 = vadd.f32 %v130, %v190
  %v192 = vpop.f32.mrb[0].mxu0
  %193 = vmatprep.mubr.bf16.mxu0 0
  %194 = vmatmul.mubr.bf16.gmra.mrb[0].mxu0 %v148
  %v195 = vpop.f32.mrb[0].mxu0
  %v196 = vadd.f32 %v130, %v195
  %v197 = vpop.f32.mrb[0].mxu0
  %v198 = vpop.f32.mrb[0].mxu0
  %v199 = vadd.f32 %v130, %v198
  %v200 = vpop.f32.mrb[0].mxu0
  %201 = vmatprep.mubr.bf16.mxu0 0
  %202 = vmatmul.mubr.bf16.gmra.mrb[0].mxu0 %v151
  %v203 = vpop.f32.mrb[0].mxu0
  %v204 = vadd.f32 %v130, %v203
  %v205 = vpop.f32.mrb[0].mxu0
  %v206 = vpop.f32.mrb[0].mxu0
  %v207 = vpop.f32.mrb[0].mxu0
  %208 = vdwg.mxu0
  %v209 = vmul.f32 %v188, %v188
  %v210 = vmul.f32 %v191, %v191
  %v211 = vmul.f32 %v196, %v196
  %v212 = vmul.f32 %v199, %v199
  %v213 = vmul.f32 %v204, %v204
  %v214 = vmul.f32 %v188, %v209
  %v215 = vmul.f32 %v191, %v210
  %v216 = vmul.f32 %v196, %v211
  %v217 = vmul.f32 %v199, %v212
  %v218 = vmul.f32 %v204, %v213
  %v219 = vmul.f32 %v214, 0.044715
  %v220 = vmul.f32 %v215, 0.044715
  %v221 = vmul.f32 %v216, 0.044715
  %v222 = vmul.f32 %v217, 0.044715
  %v223 = vmul.f32 %v218, 0.044715
  %v224 = vadd.f32 %v188, %v219
  %v225 = vadd.f32 %v191, %v220
  %v226 = vadd.f32 %v196, %v221
  %v227 = vadd.f32 %v199, %v222
  %v228 = vadd.f32 %v204, %v223
  %v229 = vmul.f32 %v224, 0.7978846
  %v230 = vmul.f32 %v225, 0.7978846
  %v231 = vmul.f32 %v226, 0.7978846
  %v232 = vmul.f32 %v227, 0.7978846
  %v233 = vmul.f32 %v228, 0.7978846
  %v234 = vtanh.pop %v229
  %v235 = vtanh.pop %v230
  %v236 = vtanh.pop %v231
  %v237 = vtanh.pop %v232
  %v238 = vtanh.pop %v233
  %v239 = vadd.f32 %v234, 1.0
  %v240 = vadd.f32 %v235, 1.0
  %v241 = vadd.f32 %v236, 1.0
  %v242 = vadd.f32 %v237, 1.0
  %v243 = vadd.f32 %v238, 1.0
  %v244 = vmul.f32 %v239, 0.5
  %v245 = vmul.f32 %v240, 0.5
  %v246 = vmul.f32 %v241, 0.5
  %v247 = vmul.f32 %v242, 0.5
  %v248 = vmul.f32 %v243, 0.5
  %v249 = vmul.f32 %v188, %v244
  %v250 = vmul.f32 %v191, %v245
  %v251 = vmul.f32 %v196, %v246
  %v252 = vmul.f32 %v199, %v247
  %v253 = vmul.f32 %v204, %v248
  %v254 = vpack.c.bf16 %v250, %v249
  %v255 = vpack.c.bf16 %v252, %v251
  %v256 = vpack.c.bf16 %v253, %v253
  %v260 = vunpack.c.l.b16 %v254
  %v261 = vunpack.c.h.b16 %v254
  %v262 = vunpack.c.l.b16 %v255
  %v263 = vunpack.c.h.b16 %v255
  %v264 = vunpack.c.l.b16 %v256
  %v265 = vpack.c.b16 %v260, %v260
  %v266 = vpack.c.b16 %v261, %v261
  %v267 = vpack.c.b16 %v262, %v262
  %v268 = vpack.c.b16 %v263, %v263
  %v269 = vpack.c.b16 %v264, %v264
  %275 = vst [vmem:[%s5] sm:$0xf] %v265
  %276 = vst [vmem:[%s5 + $0x4] sm:$0xf] %v266
  %277 = vst [vmem:[%s5 + $0x8] sm:$0xf] %v267
  %278 = vst [vmem:[%s5 + $0xc] sm:$0xf] %v268
  %279 = vst [vmem:[%s5 + $0x10] sm:$0x1] %v269
  // Predicated region
  $region22: #{_lambda_.43} parent=0 // pred_check
    _
  $region23: #{_lambda_.43} parent=0 // pred_check_branch
    %281 = sbr.rel (0) target = $region25
  $region24: #{_lambda_.43} parent=0 // pred_region
    _
  $region25: #{_lambda_.43} parent=0 // pred_fallthru
    _
  // Predicated region
  $region26: #{_lambda_.43} parent=0 // pred_check
    _
  $region27: #{_lambda_.43} parent=0 // pred_check_branch
    %283 = sbr.rel (0) target = $region29
  $region28: #{_lambda_.43} parent=0 // pred_region
    _
  $region29: #{_lambda_.43} parent=0 // pred_fallthru
    _

// kernel: _lambda_.50
$region0: #{_lambda_.50}
  #allocation0 [shape = 'u32[]', space=smem, size = 0x4, offset = 0x4, fixed_abs, tag = 'smem constant byte address 0x4 - core index']
  #allocation1 [shape = 'u32[144,128]{1,0:T(1,128)}', space=vmem, size = 0x12000, scoped, tag = 'internal scratch']
  %s0 = inlined_call_operand.vmem [shape: f32[34,32], index: 0, kind: input, shape index: {}]
  %s1 = inlined_call_operand.vmem [shape: bf16[32,48], index: 1, kind: input, shape index: {}]
  %s2 = inlined_call_operand.vmem [shape: f32[1,48], index: 2, kind: input, shape index: {}]
  %s3 = inlined_call_operand.vmem [shape: f32[1,32], index: 3, kind: input, shape index: {}]
  %s4 = inlined_call_operand.vmem [shape: f32[1,32], index: 4, kind: input, shape index: {}]
  %s5 = inlined_call_operand.vmem [shape: f32[34,48], index: 5, kind: output, shape index: {}]
  %s6 = sld [smem:[#allocation0]]
  $region30: #{_lambda_.50} parent=0
    _
  %s8 = ssub.s32 1, %s6
  %s9 = scalar_select 0, %s8, %s6
  // Predicated region
  $region2: #{_lambda_.50} parent=0 // pred_check
    _
  $region3: #{_lambda_.50} parent=0 // pred_check_branch
    %11 = sbr.rel (0) target = $region5
  $region4: #{_lambda_.50} parent=0 // pred_region
    _
  $region5: #{_lambda_.50} parent=0 // pred_fallthru
    _
  // Predicated region
  $region6: #{_lambda_.50} parent=0 // pred_check
    _
  $region7: #{_lambda_.50} parent=0 // pred_check_branch
    %13 = sbr.rel (0) target = $region9
  $region8: #{_lambda_.50} parent=0 // pred_region
    _
  $region9: #{_lambda_.50} parent=0 // pred_fallthru
    _
  // Predicated region
  $region10: #{_lambda_.50} parent=0 // pred_check
    _
  $region11: #{_lambda_.50} parent=0 // pred_check_branch
    %15 = sbr.rel (0) target = $region13
  $region12: #{_lambda_.50} parent=0 // pred_region
    _
  $region13: #{_lambda_.50} parent=0 // pred_fallthru
    _
  // Predicated region
  $region14: #{_lambda_.50} parent=0 // pred_check
    _
  $region15: #{_lambda_.50} parent=0 // pred_check_branch
    %17 = sbr.rel (0) target = $region17
  $region16: #{_lambda_.50} parent=0 // pred_region
    _
  $region17: #{_lambda_.50} parent=0 // pred_fallthru
    _
  // Predicated region
  $region18: #{_lambda_.50} parent=0 // pred_check
    _
  $region19: #{_lambda_.50} parent=0 // pred_check_branch
    %19 = sbr.rel (0) target = $region21
  $region20: #{_lambda_.50} parent=0 // pred_region
    _
  $region21: #{_lambda_.50} parent=0 // pred_fallthru
    _
  %v21 = vld [vmem:[%s0] sm:$0xff]
  %v22 = vld [vmem:[%s0 + $0x8] sm:$0xff]
  %v23 = vld [vmem:[%s0 + $0x10] sm:$0xff]
  %v24 = vld [vmem:[%s0 + $0x18] sm:$0xff]
  %v25 = vld [vmem:[%s0 + $0x20] sm:$0x3]
  %vm26 = vcmask 261120
  %v27 = vsel %vm26, %v21, 0.0
  %28 = vadd.xlane.f32.xlu0 %v27
  %v29 = vpop.xlane.xlu0 %28
  %v30 = vsel %vm26, %v22, 0.0
  %31 = vadd.xlane.f32.xlu0 %v30
  %v32 = vpop.xlane.xlu0 %31
  %v33 = vsel %vm26, %v23, 0.0
  %34 = vadd.xlane.f32.xlu0 %v33
  %v35 = vpop.xlane.xlu0 %34
  %v36 = vsel %vm26, %v24, 0.0
  %37 = vadd.xlane.f32.xlu0 %v36
  %v38 = vpop.xlane.xlu0 %37
  %vm39 = vcmask 254976
  %v40 = vsel %vm39, %v25, 0.0
  %41 = vadd.xlane.f32.xlu0 %v40
  %v42 = vpop.xlane.xlu0 %41
  %v43 = vrcp.pop 32.0
  %v44 = vmul.f32 %v29, %v43
  %v45 = vmul.f32 %v32, %v43
  %v46 = vmul.f32 %v35, %v43
  %v47 = vmul.f32 %v38, %v43
  %v48 = vmul.f32 %v42, %v43
  %v49 = vsub.f32 %v21, %v44
  %v50 = vsub.f32 %v22, %v45
  %v51 = vsub.f32 %v23, %v46
  %v52 = vsub.f32 %v24, %v47
  %v53 = vsub.f32 %v25, %v48
  %v54 = vmul.f32 %v49, %v49
  %v55 = vmul.f32 %v50, %v50
  %v56 = vmul.f32 %v51, %v51
  %v57 = vmul.f32 %v52, %v52
  %v58 = vmul.f32 %v53, %v53
  %v59 = vsel %vm26, %v54, 0.0
  %60 = vadd.xlane.f32.xlu0 %v59
  %v61 = vpop.xlane.xlu0 %60
  %v62 = vsel %vm26, %v55, 0.0
  %63 = vadd.xlane.f32.xlu0 %v62
  %v64 = vpop.xlane.xlu0 %63
  %v65 = vsel %vm26, %v56, 0.0
  %66 = vadd.xlane.f32.xlu0 %v65
  %v67 = vpop.xlane.xlu0 %66
  %v68 = vsel %vm26, %v57, 0.0
  %69 = vadd.xlane.f32.xlu0 %v68
  %v70 = vpop.xlane.xlu0 %69
  %v71 = vsel %vm39, %v58, 0.0
  %72 = vadd.xlane.f32.xlu0 %v71
  %v73 = vpop.xlane.xlu0 %72
  %v74 = vmul.f32 %v61, %v43
  %v75 = vmul.f32 %v64, %v43
  %v76 = vmul.f32 %v67, %v43
  %v77 = vmul.f32 %v70, %v43
  %v78 = vmul.f32 %v73, %v43
  %v79 = vadd.f32 %v74, 1e-06
  %v80 = vadd.f32 %v75, 1e-06
  %v81 = vadd.f32 %v76, 1e-06
  %v82 = vadd.f32 %v77, 1e-06
  %v83 = vadd.f32 %v78, 1e-06
  %v84 = vrsqrt.pop %v79
  %v85 = vrsqrt.pop %v80
  %v86 = vrsqrt.pop %v81
  %v87 = vrsqrt.pop %v82
  %v88 = vrsqrt.pop %v83
  %v89 = vmul.f32 %v49, %v84
  %v90 = vmul.f32 %v50, %v85
  %v91 = vmul.f32 %v51, %v86
  %v92 = vmul.f32 %v52, %v87
  %v93 = vmul.f32 %v53, %v88
  %v94 = vld [vmem:[%s3] sm:$0x1]
  %v96 = vlaneseq
  %v97 = vshrl.u32 %v96, 7
  %v98 = vsub.s32 0, %v97
  %v99 = vrot.slane %v94, %v98
  %v101 = vmul.f32 %v89, %v99
  %v102 = vmul.f32 %v90, %v99
  %v103 = vmul.f32 %v91, %v99
  %v104 = vmul.f32 %v92, %v99
  %v105 = vmul.f32 %v93, %v99
  %v106 = vld [vmem:[%s4] sm:$0x1]
  %v108 = vlaneseq
  %v109 = vshrl.u32 %v108, 7
  %v110 = vsub.s32 0, %v109
  %v111 = vrot.slane %v106, %v110
  %v113 = vadd.f32 %v101, %v111
  %v114 = vadd.f32 %v102, %v111
  %v115 = vadd.f32 %v103, %v111
  %v116 = vadd.f32 %v104, %v111
  %v117 = vadd.f32 %v105, %v111
  %v118 = vpack.c.bf16 %v114, %v113
  %v119 = vpack.c.bf16 %v116, %v115
  %v120 = vpack.c.bf16 %v117, %v117
  %v121 = vld [vmem:[%s1] sm:$0xf]
  %v122 = vld [vmem:[%s1 + $0x4] sm:$0xf]
  %v123 = vld [vmem:[%s1 + $0x8] sm:$0xf]
  %v124 = vld [vmem:[%s1 + $0xc] sm:$0xf]
  %v125 = vld [vmem:[%s2] sm:$0x1]
  %v127 = vlaneseq
  %v128 = vshrl.u32 %v127, 7
  %v129 = vsub.s32 0, %v128
  %v130 = vrot.slane %v125, %v129
  %v136 = vunpack.c.l.b16 %v121
  %v137 = vunpack.c.l.b16 %v122
  %v138 = vunpack.c.l.b16 %v123
  %v139 = vunpack.c.l.b16 %v124
  %v140 = vpack.c.b16 %v137, %v136
  %v141 = vpack.c.b16 %v139, %v138
  %v145 = vsel %vm26, %v118, 0
  %v148 = vsel %vm26, %v119, 0
  %v151 = vsel %vm26, %v120, 0
  %153 = vmatprep.subr.bf16.mxu0 0
  %154 = vmatpush1.bf16.msra.mxu0 %v140
  %155 = vmatprep.subr.bf16.mxu0 0
  %156 = vmatpush1.bf16.msra.mxu0 %v141
  %157 = vmatprep.subr.bf16.mxu0 0
  %158 = vmatpush1.bf16.msra.mxu0 0
  %159 = vmatprep.subr.bf16.mxu0 0
  %160 = vmatpush1.bf16.msra.mxu0 0
  %161 = vmatprep.subr.bf16.mxu0 0
  %162 = vmatpush1.bf16.msra.mxu0 0
  %163 = vmatprep.subr.bf16.mxu0 0
  %164 = vmatpush1.bf16.msra.mxu0 0
  %165 = vmatprep.subr.bf16.mxu0 0
  %166 = vmatpush1.bf16.msra.mxu0 0
  %167 = vmatprep.subr.bf16.mxu0 0
  %168 = vmatpush1.bf16.msra.mxu0 0
  %169 = vmatprep.subr.bf16.mxu0 0
  %170 = vmatpush1.bf16.msra.mxu0 0
  %171 = vmatprep.subr.bf16.mxu0 0
  %172 = vmatpush1.bf16.msra.mxu0 0
  %173 = vmatprep.subr.bf16.mxu0 0
  %174 = vmatpush1.bf16.msra.mxu0 0
  %175 = vmatprep.subr.bf16.mxu0 0
  %176 = vmatpush1.bf16.msra.mxu0 0
  %177 = vmatprep.subr.bf16.mxu0 0
  %178 = vmatpush1.bf16.msra.mxu0 0
  %179 = vmatprep.subr.bf16.mxu0 0
  %180 = vmatpush1.bf16.msra.mxu0 0
  %181 = vmatprep.subr.bf16.mxu0 0
  %182 = vmatpush1.bf16.msra.mxu0 0
  %183 = vmatprep.subr.bf16.mxu0 0
  %184 = vmatpush1.bf16.msra.mxu0 0
  %185 = vmatprep.mubr.bf16.mxu0 0
  %186 = vmatmul.mubr.bf16.gmra.mrb[0].mxu0 %v145
  %v187 = vpop.f32.mrb[0].mxu0
  %v188 = vadd.f32 %v130, %v187
  %v189 = vpop.f32.mrb[0].mxu0
  %v190 = vpop.f32.mrb[0].mxu0
  %v191 = vadd.f32 %v130, %v190
  %v192 = vpop.f32.mrb[0].mxu0
  %193 = vmatprep.mubr.bf16.mxu0 0
  %194 = vmatmul.mubr.bf16.gmra.mrb[0].mxu0 %v148
  %v195 = vpop.f32.mrb[0].mxu0
  %v196 = vadd.f32 %v130, %v195
  %v197 = vpop.f32.mrb[0].mxu0
  %v198 = vpop.f32.mrb[0].mxu0
  %v199 = vadd.f32 %v130, %v198
  %v200 = vpop.f32.mrb[0].mxu0
  %201 = vmatprep.mubr.bf16.mxu0 0
  %202 = vmatmul.mubr.bf16.gmra.mrb[0].mxu0 %v151
  %v203 = vpop.f32.mrb[0].mxu0
  %v204 = vadd.f32 %v130, %v203
  %v205 = vpop.f32.mrb[0].mxu0
  %v206 = vpop.f32.mrb[0].mxu0
  %v207 = vpop.f32.mrb[0].mxu0
  %208 = vdwg.mxu0
  %vm209 = vcmask 392192
  %210 = vst.msk [vmem:[%s5] sm:$0xff] %vm209, %v188
  %211 = vst.msk [vmem:[%s5 + $0x8] sm:$0xff] %vm209, %v191
  %212 = vst.msk [vmem:[%s5 + $0x10] sm:$0xff] %vm209, %v196
  %213 = vst.msk [vmem:[%s5 + $0x18] sm:$0xff] %vm209, %v199
  %vm214 = vcmask 386048
  %215 = vst.msk [vmem:[%s5 + $0x20] sm:$0x3] %vm214, %v204
  // Predicated region
  $region22: #{_lambda_.50} parent=0 // pred_check
    _
  $region23: #{_lambda_.50} parent=0 // pred_check_branch
    %217 = sbr.rel (0) target = $region25
  $region24: #{_lambda_.50} parent=0 // pred_region
    _
  $region25: #{_lambda_.50} parent=0 // pred_fallthru
    _
  // Predicated region
  $region26: #{_lambda_.50} parent=0 // pred_check
    _
  $region27: #{_lambda_.50} parent=0 // pred_check_branch
    %219 = sbr.rel (0) target = $region29
  $region28: #{_lambda_.50} parent=0 // pred_region
    _
  $region29: #{_lambda_.50} parent=0 // pred_fallthru
    _

// kernel: _lambda_.51
$region0: #{_lambda_.51}
  #allocation0 [shape = 'u32[]', space=smem, size = 0x4, offset = 0x4, fixed_abs, tag = 'smem constant byte address 0x4 - core index']
  #allocation1 [shape = 'u32[144,128]{1,0:T(1,128)}', space=vmem, size = 0x12000, scoped, tag = 'internal scratch']
  %s0 = inlined_call_operand.vmem [shape: f32[8,128], index: 0, kind: input, shape index: {}]
  %s1 = inlined_call_operand.vmem [shape: f32[128,8], index: 1, kind: input, shape index: {}]
  %s2 = inlined_call_operand.vmem [shape: f32[1,8], index: 2, kind: input, shape index: {}]
  %s3 = inlined_call_operand.vmem [shape: f32[8,8], index: 3, kind: output, shape index: {}]
  %s4 = sld [smem:[#allocation0]]
  $region22: #{_lambda_.51} parent=0
    _
  %s6 = ssub.s32 1, %s4
  %s7 = scalar_select 0, %s6, %s4
  // Predicated region
  $region2: #{_lambda_.51} parent=0 // pred_check
    _
  $region3: #{_lambda_.51} parent=0 // pred_check_branch
    %9 = sbr.rel (0) target = $region5
  $region4: #{_lambda_.51} parent=0 // pred_region
    _
  $region5: #{_lambda_.51} parent=0 // pred_fallthru
    _
  // Predicated region
  $region6: #{_lambda_.51} parent=0 // pred_check
    _
  $region7: #{_lambda_.51} parent=0 // pred_check_branch
    %11 = sbr.rel (0) target = $region9
  $region8: #{_lambda_.51} parent=0 // pred_region
    _
  $region9: #{_lambda_.51} parent=0 // pred_fallthru
    _
  // Predicated region
  $region10: #{_lambda_.51} parent=0 // pred_check
    _
  $region11: #{_lambda_.51} parent=0 // pred_check_branch
    %13 = sbr.rel (0) target = $region13
  $region12: #{_lambda_.51} parent=0 // pred_region
    _
  $region13: #{_lambda_.51} parent=0 // pred_fallthru
    _
  %v15 = vld [vmem:[%s0] sm:$0xff]
  %v16 = vpack.c.bf16 %v15, %v15
  %v17 = vld [vmem:[%s1] sm:$0xff]
  %v18 = vld [vmem:[%s1 + $0x8] sm:$0xff]
  %v19 = vld [vmem:[%s1 + $0x10] sm:$0xff]
  %v20 = vld [vmem:[%s1 + $0x18] sm:$0xff]
  %v21 = vld [vmem:[%s1 + $0x20] sm:$0xff]
  %v22 = vld [vmem:[%s1 + $0x28] sm:$0xff]
  %v23 = vld [vmem:[%s1 + $0x30] sm:$0xff]
  %v24 = vld [vmem:[%s1 + $0x38] sm:$0xff]
  %v25 = vld [vmem:[%s1 + $0x40] sm:$0xff]
  %v26 = vld [vmem:[%s1 + $0x48] sm:$0xff]
  %v27 = vld [vmem:[%s1 + $0x50] sm:$0xff]
  %v28 = vld [vmem:[%s1 + $0x58] sm:$0xff]
  %v29 = vld [vmem:[%s1 + $0x60] sm:$0xff]
  %v30 = vld [vmem:[%s1 + $0x68] sm:$0xff]
  %v31 = vld [vmem:[%s1 + $0x70] sm:$0xff]
  %v32 = vld [vmem:[%s1 + $0x78] sm:$0xff]
  %v33 = vpack.c.bf16 %v18, %v17
  %v34 = vpack.c.bf16 %v20, %v19
  %v35 = vpack.c.bf16 %v22, %v21
  %v36 = vpack.c.bf16 %v24, %v23
  %v37 = vpack.c.bf16 %v26, %v25
  %v38 = vpack.c.bf16 %v28, %v27
  %v39 = vpack.c.bf16 %v30, %v29
  %v40 = vpack.c.bf16 %v32, %v31
  %v41 = vld [vmem:[%s2] sm:$0x1]
  %v43 = vlaneseq
  %v44 = vshrl.u32 %v43, 7
  %v45 = vsub.s32 0, %v44
  %v46 = vrot.slane %v41, %v45
  %48 = vmatprep.subr.bf16.mxu0 0
  %49 = vmatpush1.bf16.msra.mxu0 %v33
  %50 = vmatprep.subr.bf16.mxu0 0
  %51 = vmatpush1.bf16.msra.mxu0 %v34
  %52 = vmatprep.subr.bf16.mxu0 0
  %53 = vmatpush1.bf16.msra.mxu0 %v35
  %54 = vmatprep.subr.bf16.mxu0 0
  %55 = vmatpush1.bf16.msra.mxu0 %v36
  %56 = vmatprep.subr.bf16.mxu0 0
  %57 = vmatpush1.bf16.msra.mxu0 %v37
  %58 = vmatprep.subr.bf16.mxu0 0
  %59 = vmatpush1.bf16.msra.mxu0 %v38
  %60 = vmatprep.subr.bf16.mxu0 0
  %61 = vmatpush1.bf16.msra.mxu0 %v39
  %62 = vmatprep.subr.bf16.mxu0 0
  %63 = vmatpush1.bf16.msra.mxu0 %v40
  %64 = vmatprep.subr.bf16.mxu0 0
  %65 = vmatpush1.bf16.msra.mxu0 0
  %66 = vmatprep.subr.bf16.mxu0 0
  %67 = vmatpush1.bf16.msra.mxu0 0
  %68 = vmatprep.subr.bf16.mxu0 0
  %69 = vmatpush1.bf16.msra.mxu0 0
  %70 = vmatprep.subr.bf16.mxu0 0
  %71 = vmatpush1.bf16.msra.mxu0 0
  %72 = vmatprep.subr.bf16.mxu0 0
  %73 = vmatpush1.bf16.msra.mxu0 0
  %74 = vmatprep.subr.bf16.mxu0 0
  %75 = vmatpush1.bf16.msra.mxu0 0
  %76 = vmatprep.subr.bf16.mxu0 0
  %77 = vmatpush1.bf16.msra.mxu0 0
  %78 = vmatprep.subr.bf16.mxu0 0
  %79 = vmatpush1.bf16.msra.mxu0 0
  %80 = vmatprep.mubr.bf16.mxu0 0
  %81 = vmatmul.mubr.bf16.gmra.mrb[0].mxu0 %v16
  %v82 = vpop.f32.mrb[0].mxu0
  %v83 = vadd.f32 %v46, %v82
  %v84 = vpop.f32.mrb[0].mxu0
  %v85 = vpop.f32.mrb[0].mxu0
  %v86 = vpop.f32.mrb[0].mxu0
  %87 = vdwg.mxu0
  %vm88 = vcmask 64512
  %89 = vst.msk [vmem:[%s3] sm:$0xff] %vm88, %v83
  // Predicated region
  $region14: #{_lambda_.51} parent=0 // pred_check
    _
  $region15: #{_lambda_.51} parent=0 // pred_check_branch
    %91 = sbr.rel (0) target = $region17
  $region16: #{_lambda_.51} parent=0 // pred_region
    _
  $region17: #{_lambda_.51} parent=0 // pred_fallthru
    _
  // Predicated region
  $region18: #{_lambda_.51} parent=0 // pred_check
    _
  $region19: #{_lambda_.51} parent=0 // pred_check_branch
    %93 = sbr.rel (0) target = $region21
  $region20: #{_lambda_.51} parent=0 // pred_region
    _
  $region21: #{_lambda_.51} parent=0 // pred_fallthru
    _

</llo_original>
